<compile_context>
chip_gen: v7x
topology: tpu7x:2x2x1
jax: 0.10.0
libtpu: 0.0.40
codegen_flags: <defaults>
</compile_context>

<pallas_src>
import jax
import jax.numpy as jnp
import numpy as np
from jax.experimental import pallas as pl
from jax.experimental.pallas import tpu as pltpu

B = 2      # batch
T = 8      # sequence length
H = 32     # hidden size (module default is 256; small test shape)
F32 = jnp.float32


def _lstm_gru_kernel(
    x_ref,            # (T, B, 1)
    lw_ih0,           # (1, 4H)   LSTM l0 input weight, cols (i,f,o,g)
    lb0,              # (1, 4H)   LSTM l0 bias (b_ih + b_hh), cols (i,f,o,g)
    gw_ih0,           # (1, 3H)   GRU  l0 input weight, cols (r,z,n)
    gbi0,             # (1, 3H)   GRU  l0 input bias
    gbh0,             # (1, 3H)   GRU  l0 hidden bias
    w_hh0,            # (2H, 7H)  blockdiag(LSTM_hh0 -> 4H, GRU_hh0 -> 3H)
    w1,               # (4H, 8H)  fused layer-1 weight (see prepare_kernel_weights)
    b1,               # (1, 8H)
    fcw,              # (2H, 1)   final Linear weight
    fcb,              # (1, 1)
    out_ref,          # (B, 1)
):
    sig = jax.nn.sigmoid
    H2, H3, H4 = 2 * H, 3 * H, 4 * H

    x = x_ref[...]                                   # (T, B, 1)

    # Hoisted layer-0 input projections (no recurrence dependence; input=1).
    gi_l = x * lw_ih0[...] + lb0[...]                # (T, B, 4H)  (i,f,o,g)
    gi_g = x * gw_ih0[...] + gbi0[...]               # (T, B, 3H)  (r,z,n)

    zeros = jnp.zeros((B, H), F32)
    h0l = c0l = h1l = c1l = h0g = h1g = zeros

    # Fully unrolled recurrence (T=8 static -> static indexing everywhere).
    for t in range(T):
        # -------- layer 0: one fused block-diagonal hidden matmul ----------
        hh0 = jnp.dot(jnp.concatenate([h0l, h0g], axis=1), w_hh0[...],
                      preferred_element_type=F32)    # (B, 7H)

        # LSTM layer 0 (gates in (i,f,o,g) order)
        lg = gi_l[t] + hh0[:, :H4]                   # (B, 4H)
        s = sig(lg[:, :H3])                          # [sig(i), sig(f), sig(o)]
        g = jnp.tanh(lg[:, H3:])
        c0l = s[:, H:H2] * c0l + s[:, :H] * g
        h0l = s[:, H2:H3] * jnp.tanh(c0l)

        # GRU layer 0
        gi = gi_g[t]                                 # (B, 3H)
        gh = hh0[:, H4:] + gbh0[...]                 # (B, 3H)
        rz = sig(gi[:, :H2] + gh[:, :H2])
        n = jnp.tanh(gi[:, H2:] + rz[:, :H] * gh[:, H2:])
        h0g = (1.0 - rz[:, H:]) * n + rz[:, H:] * h0g

        # -------- layer 1: single fused LSTM+GRU block-diagonal matmul -----
        # (dropout between stacked layers is identity at inference)
        g1 = jnp.dot(jnp.concatenate([h0l, h1l, h0g, h1g], axis=1), w1[...],
                     preferred_element_type=F32) + b1[...]   # (B, 8H)

        # LSTM layer 1: cols [0:4H], order (i,f,o,g)
        s1 = sig(g1[:, :H3])
        gg = jnp.tanh(g1[:, H3:H4])
        c1l = s1[:, H:H2] * c1l + s1[:, :H] * gg
        h1l = s1[:, H2:H3] * jnp.tanh(c1l)

        # GRU layer 1: cols [4H:6H]=r,z (ih+hh), [6H:7H]=gi_n, [7H:8H]=gh_n
        rz1 = sig(g1[:, H4:H4 + H2])
        n1 = jnp.tanh(g1[:, H4 + H2:H4 + H3] + rz1[:, :H] * g1[:, H4 + H3:])
        h1g = (1.0 - rz1[:, H:]) * n1 + rz1[:, H:] * h1g

    # -------- final Linear on concat(lstm_last, gru_last) ------------------
    out_ref[...] = (jnp.dot(jnp.concatenate([h1l, h1g], axis=1), fcw[...],
                            preferred_element_type=F32)
                    + fcb[...]).astype(out_ref.dtype)


# ------------------------- weight preparation (wrapper) ----------------------
def prepare_kernel_weights(p):
    """PyTorch-layout params -> fused / reordered kernel operands."""
    H2, H3, H4 = 2 * H, 3 * H, 4 * H
    # LSTM gate permutation (i,f,g,o) -> (i,f,o,g): sigmoid gates contiguous.
    perm = jnp.asarray(np.concatenate(
        [np.arange(0, H2), np.arange(H3, H4), np.arange(H2, H3)]))

    def lstm_cols(w):            # (4H, in) -> (in, 4H) with reordered columns
        return w.T[:, perm]

    def lstm_bias(bi, bh):       # pre-summed, reordered, (1, 4H)
        return (bi + bh)[perm][None, :]

    lw_ih0 = lstm_cols(p["lstm.w_ih_l0"])            # (1, 4H)
    lb0 = lstm_bias(p["lstm.b_ih_l0"], p["lstm.b_hh_l0"])
    gw_ih0 = p["gru.w_ih_l0"].T                      # (1, 3H)
    gbi0 = p["gru.b_ih_l0"][None, :]
    gbh0 = p["gru.b_hh_l0"][None, :]

    # Layer-0 fused hidden weight: blockdiag(LSTM_hh0 (H,4H), GRU_hh0 (H,3H)).
    w_hh0 = jnp.zeros((H2, 7 * H), F32)
    w_hh0 = w_hh0.at[:H, :H4].set(lstm_cols(p["lstm.w_hh_l0"]))
    w_hh0 = w_hh0.at[H:, H4:].set(p["gru.w_hh_l0"].T)

    # Layer-1 fused weight (4H, 8H):
    #   rows: [0:H]=h0l (LSTM ih) [H:2H]=h1l (LSTM hh) [2H:3H]=h0g (GRU ih) [3H:4H]=h1g (GRU hh)
    #   cols: [0:4H]=LSTM gates (i,f,o,g)  [4H:6H]=GRU r,z  [6H:7H]=gi_n  [7H:8H]=gh_n
    g_ih1 = p["gru.w_ih_l1"].T                       # (H, 3H)
    g_hh1 = p["gru.w_hh_l1"].T                       # (H, 3H)
    w1 = jnp.zeros((H4, 8 * H), F32)
    w1 = w1.at[0:H, :H4].set(lstm_cols(p["lstm.w_ih_l1"]))
    w1 = w1.at[H:H2, :H4].set(lstm_cols(p["lstm.w_hh_l1"]))
    w1 = w1.at[H2:H3, H4:H4 + H2].set(g_ih1[:, :H2])
    w1 = w1.at[H2:H3, H4 + H2:H4 + H3].set(g_ih1[:, H2:])
    w1 = w1.at[H3:H4, H4:H4 + H2].set(g_hh1[:, :H2])
    w1 = w1.at[H3:H4, H4 + H3:].set(g_hh1[:, H2:])

    b1 = jnp.zeros((1, 8 * H), F32)
    b1 = b1.at[:, :H4].set(lstm_bias(p["lstm.b_ih_l1"], p["lstm.b_hh_l1"]))
    b1 = b1.at[:, H4:H4 + H2].set(
        (p["gru.b_ih_l1"][:H2] + p["gru.b_hh_l1"][:H2])[None, :])
    b1 = b1.at[:, H4 + H2:H4 + H3].set(p["gru.b_ih_l1"][H2:][None, :])
    b1 = b1.at[:, H4 + H3:].set(p["gru.b_hh_l1"][H2:][None, :])

    fcw = p["fc.w"].T                                # (2H, 1)
    fcb = p["fc.b"][None, :]                         # (1, 1)
    return [lw_ih0, lb0, gw_ih0, gbi0, gbh0, w_hh0, w1, b1, fcw, fcb]


def lstm_gru_forward(x_btf, params):
    """x_btf: (B, T, 1) float32 (PyTorch batch_first layout)."""
    x_tbf = jnp.transpose(x_btf, (1, 0, 2)).astype(F32)      # (T, B, 1)
    weights = prepare_kernel_weights(params)
    n_in = 1 + len(weights)
    # Whole-array VMEM blocks, no grid (single kernel invocation).
    in_specs = [pl.BlockSpec(memory_space=pltpu.MemorySpace.VMEM)
                for _ in range(n_in)]
    return pl.pallas_call(
        _lstm_gru_kernel,
        out_shape=jax.ShapeDtypeStruct((B, 1), F32),
        in_specs=in_specs,
        out_specs=pl.BlockSpec(memory_space=pltpu.MemorySpace.VMEM),
    )(x_tbf, *weights)


# ----------------------------- parameter init --------------------------------
def init_params(key):
    scale = 1.0 / np.sqrt(H)

    def u(k, shape, s=scale):
        return jax.random.uniform(k, shape, F32, -s, s)

    ks = iter(jax.random.split(key, 24))
    p = {}
    # LSTM (PyTorch layout, gate order i,f,g,o)
    p["lstm.w_ih_l0"] = u(next(ks), (4 * H, 1))
    p["lstm.w_hh_l0"] = u(next(ks), (4 * H, H))
    p["lstm.b_ih_l0"] = u(next(ks), (4 * H,))
    p["lstm.b_hh_l0"] = u(next(ks), (4 * H,))
    p["lstm.w_ih_l1"] = u(next(ks), (4 * H, H))
    p["lstm.w_hh_l1"] = u(next(ks), (4 * H, H))
    p["lstm.b_ih_l1"] = u(next(ks), (4 * H,))
    p["lstm.b_hh_l1"] = u(next(ks), (4 * H,))
    # GRU (PyTorch layout, gate order r,z,n)
    p["gru.w_ih_l0"] = u(next(ks), (3 * H, 1))
    p["gru.w_hh_l0"] = u(next(ks), (3 * H, H))
    p["gru.b_ih_l0"] = u(next(ks), (3 * H,))
    p["gru.b_hh_l0"] = u(next(ks), (3 * H,))
    p["gru.w_ih_l1"] = u(next(ks), (3 * H, H))
    p["gru.w_hh_l1"] = u(next(ks), (3 * H, H))
    p["gru.b_ih_l1"] = u(next(ks), (3 * H,))
    p["gru.b_hh_l1"] = u(next(ks), (3 * H,))
    # Linear(2H -> 1)
    fs = 1.0 / np.sqrt(2 * H)
    p["fc.w"] = u(next(ks), (1, 2 * H), fs)
    p["fc.b"] = u(next(ks), (1,), fs)
    return p


# ----------------------------- pure-JAX reference -----------------------------
def reference_forward(x_btf, p):
    def lstm_cell(x, h, c, wi, wh, bi, bh):
        gates = x @ wi.T + bi + h @ wh.T + bh
        i, f, g, o = jnp.split(gates, 4, axis=1)
        c = jax.nn.sigmoid(f) * c + jax.nn.sigmoid(i) * jnp.tanh(g)
        h = jax.nn.sigmoid(o) * jnp.tanh(c)
        return h, c

    def gru_cell(x, h, wi, wh, bi, bh):
        gi = x @ wi.T + bi
        gh = h @ wh.T + bh
        r = jax.nn.sigmoid(gi[:, :H] + gh[:, :H])
        z = jax.nn.sigmoid(gi[:, H:2 * H] + gh[:, H:2 * H])
        n = jnp.tanh(gi[:, 2 * H:] + r * gh[:, 2 * H:])
        return (1.0 - z) * n + z * h

    z = jnp.zeros((B, H), F32)
    h0l = c0l = h1l = c1l = h0g = h1g = z
    for t in range(T):
        x_t = x_btf[:, t, :]
        h0l, c0l = lstm_cell(x_t, h0l, c0l, p["lstm.w_ih_l0"], p["lstm.w_hh_l0"],
                             p["lstm.b_ih_l0"], p["lstm.b_hh_l0"])
        h1l, c1l = lstm_cell(h0l, h1l, c1l, p["lstm.w_ih_l1"], p["lstm.w_hh_l1"],
                             p["lstm.b_ih_l1"], p["lstm.b_hh_l1"])
        h0g = gru_cell(x_t, h0g, p["gru.w_ih_l0"], p["gru.w_hh_l0"],
                       p["gru.b_ih_l0"], p["gru.b_hh_l0"])
        h1g = gru_cell(h0g, h1g, p["gru.w_ih_l1"], p["gru.w_hh_l1"],
                       p["gru.b_ih_l1"], p["gru.b_hh_l1"])
    combined = jnp.concatenate([h1l, h1g], axis=1)
    return combined @ p["fc.w"].T + p["fc.b"]


if __name__ == "__main__":
    key = jax.random.PRNGKey(0)
    k_param, k_x = jax.random.split(key)
    params = init_params(k_param)
    x = jax.random.normal(k_x, (B, T, 1), F32)       # PyTorch (B, T, input=1)

    out = jax.block_until_ready(lstm_gru_forward(x, params))
    ref = reference_forward(x, params)

    assert out.shape == (B, 1)
    np.testing.assert_allclose(np.asarray(out), np.asarray(ref),
                               rtol=1e-3, atol=1e-3)
    print("KERNEL_OK")
</pallas_src>

<mosaic_0001>
module attributes {stable_mosaic.version = 11 : i64} {
  func.func @_lstm_gru_kernel(%arg0: memref<8x2x1xf32, #tpu.memory_space<vmem>>, %arg1: memref<1x128xf32, #tpu.memory_space<vmem>>, %arg2: memref<1x128xf32, #tpu.memory_space<vmem>>, %arg3: memref<1x96xf32, #tpu.memory_space<vmem>>, %arg4: memref<1x96xf32, #tpu.memory_space<vmem>>, %arg5: memref<1x96xf32, #tpu.memory_space<vmem>>, %arg6: memref<64x224xf32, #tpu.memory_space<vmem>>, %arg7: memref<128x256xf32, #tpu.memory_space<vmem>>, %arg8: memref<1x256xf32, #tpu.memory_space<vmem>>, %arg9: memref<64x1xf32, #tpu.memory_space<vmem>>, %arg10: memref<1x1xf32, #tpu.memory_space<vmem>>, %arg11: memref<2x1xf32, #tpu.memory_space<vmem>>) attributes {dimension_semantics = [], scalar_prefetch = 0 : i64, scratch_operands = 0 : i64, tpu.core_type = #tpu.core_type<tc>} {
    %c0 = arith.constant 0 : index
    %c0_0 = arith.constant 0 : index
    %c0_1 = arith.constant 0 : index
    %0 = vector.load %arg0[%c0, %c0_0, %c0_1] : memref<8x2x1xf32, #tpu.memory_space<vmem>>, vector<8x2x1xf32>
    %c0_2 = arith.constant 0 : index
    %c0_3 = arith.constant 0 : index
    %1 = vector.load %arg1[%c0_2, %c0_3] : memref<1x128xf32, #tpu.memory_space<vmem>>, vector<1x128xf32>
    %2 = vector.shape_cast %1 : vector<1x128xf32> to vector<1x1x128xf32>
    %3 = vector.broadcast %0 : vector<8x2x1xf32> to vector<8x2x128xf32>
    %4 = vector.broadcast %2 : vector<1x1x128xf32> to vector<8x2x128xf32>
    %5 = arith.mulf %3, %4 : vector<8x2x128xf32>
    %c0_4 = arith.constant 0 : index
    %c0_5 = arith.constant 0 : index
    %6 = vector.load %arg2[%c0_4, %c0_5] : memref<1x128xf32, #tpu.memory_space<vmem>>, vector<1x128xf32>
    %7 = vector.shape_cast %6 : vector<1x128xf32> to vector<1x1x128xf32>
    %8 = vector.broadcast %7 : vector<1x1x128xf32> to vector<8x2x128xf32>
    %9 = arith.addf %5, %8 : vector<8x2x128xf32>
    %c0_6 = arith.constant 0 : index
    %c0_7 = arith.constant 0 : index
    %10 = vector.load %arg3[%c0_6, %c0_7] : memref<1x96xf32, #tpu.memory_space<vmem>>, vector<1x96xf32>
    %11 = vector.shape_cast %10 : vector<1x96xf32> to vector<1x1x96xf32>
    %12 = vector.broadcast %0 : vector<8x2x1xf32> to vector<8x2x96xf32>
    %13 = vector.broadcast %11 : vector<1x1x96xf32> to vector<8x2x96xf32>
    %14 = arith.mulf %12, %13 : vector<8x2x96xf32>
    %c0_8 = arith.constant 0 : index
    %c0_9 = arith.constant 0 : index
    %15 = vector.load %arg4[%c0_8, %c0_9] : memref<1x96xf32, #tpu.memory_space<vmem>>, vector<1x96xf32>
    %16 = vector.shape_cast %15 : vector<1x96xf32> to vector<1x1x96xf32>
    %17 = vector.broadcast %16 : vector<1x1x96xf32> to vector<8x2x96xf32>
    %18 = arith.addf %14, %17 : vector<8x2x96xf32>
    %cst = arith.constant 0.000000e+00 : f32
    %19 = vector.broadcast %cst : f32 to vector<2x32xf32>
    %20 = tpu.concatenate %19, %19 in 1 : vector<2x32xf32>, vector<2x32xf32> -> vector<2x64xf32>
    %c0_10 = arith.constant 0 : index
    %c0_11 = arith.constant 0 : index
    %21 = vector.load %arg6[%c0_10, %c0_11] : memref<64x224xf32, #tpu.memory_space<vmem>>, vector<64x224xf32>
    %cst_12 = arith.constant dense<0.000000e+00> : vector<2x224xf32>
    %22 = tpu.matmul %20, %21, %cst_12 {dimension_numbers = #tpu.dot_dimension_numbers<[1], [0], [0], [1], [0, 0, 1, 1], [], []>} : vector<2x64xf32>, vector<64x224xf32>, vector<2x224xf32> -> vector<2x224xf32>
    %23 = vector.extract_strided_slice %9 {offsets = [0, 0, 0], sizes = [1, 2, 128], strides = [1, 1, 1]} : vector<8x2x128xf32> to vector<1x2x128xf32>
    %24 = vector.shape_cast %23 : vector<1x2x128xf32> to vector<2x128xf32>
    %25 = vector.extract_strided_slice %22 {offsets = [0, 0], sizes = [2, 128], strides = [1, 1]} : vector<2x224xf32> to vector<2x128xf32>
    %26 = arith.addf %24, %25 : vector<2x128xf32>
    %27 = vector.extract_strided_slice %26 {offsets = [0, 0], sizes = [2, 96], strides = [1, 1]} : vector<2x128xf32> to vector<2x96xf32>
    %28 = arith.negf %27 : vector<2x96xf32>
    %29 = math.exp %28 : vector<2x96xf32>
    %cst_13 = arith.constant 1.000000e+00 : f32
    %30 = vector.broadcast %cst_13 : f32 to vector<2x96xf32>
    %31 = arith.addf %30, %29 : vector<2x96xf32>
    %32 = arith.divf %30, %31 : vector<2x96xf32>
    %33 = vector.extract_strided_slice %26 {offsets = [0, 96], sizes = [2, 32], strides = [1, 1]} : vector<2x128xf32> to vector<2x32xf32>
    %34 = math.tanh %33 : vector<2x32xf32>
    %35 = vector.extract_strided_slice %32 {offsets = [0, 32], sizes = [2, 32], strides = [1, 1]} : vector<2x96xf32> to vector<2x32xf32>
    %36 = arith.mulf %35, %19 : vector<2x32xf32>
    %37 = vector.extract_strided_slice %32 {offsets = [0, 0], sizes = [2, 32], strides = [1, 1]} : vector<2x96xf32> to vector<2x32xf32>
    %38 = arith.mulf %37, %34 : vector<2x32xf32>
    %39 = arith.addf %36, %38 : vector<2x32xf32>
    %40 = vector.extract_strided_slice %32 {offsets = [0, 64], sizes = [2, 32], strides = [1, 1]} : vector<2x96xf32> to vector<2x32xf32>
    %41 = math.tanh %39 : vector<2x32xf32>
    %42 = arith.mulf %40, %41 : vector<2x32xf32>
    %43 = vector.extract_strided_slice %18 {offsets = [0, 0, 0], sizes = [1, 2, 96], strides = [1, 1, 1]} : vector<8x2x96xf32> to vector<1x2x96xf32>
    %44 = vector.shape_cast %43 : vector<1x2x96xf32> to vector<2x96xf32>
    %45 = vector.extract_strided_slice %22 {offsets = [0, 128], sizes = [2, 96], strides = [1, 1]} : vector<2x224xf32> to vector<2x96xf32>
    %c0_14 = arith.constant 0 : index
    %c0_15 = arith.constant 0 : index
    %46 = vector.load %arg5[%c0_14, %c0_15] : memref<1x96xf32, #tpu.memory_space<vmem>>, vector<1x96xf32>
    %47 = vector.broadcast %46 : vector<1x96xf32> to vector<2x96xf32>
    %48 = arith.addf %45, %47 : vector<2x96xf32>
    %49 = vector.extract_strided_slice %44 {offsets = [0, 0], sizes = [2, 64], strides = [1, 1]} : vector<2x96xf32> to vector<2x64xf32>
    %50 = vector.extract_strided_slice %48 {offsets = [0, 0], sizes = [2, 64], strides = [1, 1]} : vector<2x96xf32> to vector<2x64xf32>
    %51 = arith.addf %49, %50 : vector<2x64xf32>
    %52 = arith.negf %51 : vector<2x64xf32>
    %53 = math.exp %52 : vector<2x64xf32>
    %cst_16 = arith.constant 1.000000e+00 : f32
    %54 = vector.broadcast %cst_16 : f32 to vector<2x64xf32>
    %55 = arith.addf %54, %53 : vector<2x64xf32>
    %56 = arith.divf %54, %55 : vector<2x64xf32>
    %57 = vector.extract_strided_slice %44 {offsets = [0, 64], sizes = [2, 32], strides = [1, 1]} : vector<2x96xf32> to vector<2x32xf32>
    %58 = vector.extract_strided_slice %56 {offsets = [0, 0], sizes = [2, 32], strides = [1, 1]} : vector<2x64xf32> to vector<2x32xf32>
    %59 = vector.extract_strided_slice %48 {offsets = [0, 64], sizes = [2, 32], strides = [1, 1]} : vector<2x96xf32> to vector<2x32xf32>
    %60 = arith.mulf %58, %59 : vector<2x32xf32>
    %61 = arith.addf %57, %60 : vector<2x32xf32>
    %62 = math.tanh %61 : vector<2x32xf32>
    %63 = vector.extract_strided_slice %56 {offsets = [0, 32], sizes = [2, 32], strides = [1, 1]} : vector<2x64xf32> to vector<2x32xf32>
    %cst_17 = arith.constant 1.000000e+00 : f32
    %64 = vector.broadcast %cst_17 : f32 to vector<2x32xf32>
    %65 = arith.subf %64, %63 : vector<2x32xf32>
    %66 = arith.mulf %65, %62 : vector<2x32xf32>
    %67 = vector.extract_strided_slice %56 {offsets = [0, 32], sizes = [2, 32], strides = [1, 1]} : vector<2x64xf32> to vector<2x32xf32>
    %68 = arith.mulf %67, %19 : vector<2x32xf32>
    %69 = arith.addf %66, %68 : vector<2x32xf32>
    %70 = tpu.concatenate %42, %19, %69, %19 in 1 : vector<2x32xf32>, vector<2x32xf32>, vector<2x32xf32>, vector<2x32xf32> -> vector<2x128xf32>
    %c0_18 = arith.constant 0 : index
    %c0_19 = arith.constant 0 : index
    %71 = vector.load %arg7[%c0_18, %c0_19] : memref<128x256xf32, #tpu.memory_space<vmem>>, vector<128x256xf32>
    %cst_20 = arith.constant dense<0.000000e+00> : vector<2x256xf32>
    %72 = tpu.matmul %70, %71, %cst_20 {dimension_numbers = #tpu.dot_dimension_numbers<[1], [0], [0], [1], [0, 0, 1, 1], [], []>} : vector<2x128xf32>, vector<128x256xf32>, vector<2x256xf32> -> vector<2x256xf32>
    %c0_21 = arith.constant 0 : index
    %c0_22 = arith.constant 0 : index
    %73 = vector.load %arg8[%c0_21, %c0_22] : memref<1x256xf32, #tpu.memory_space<vmem>>, vector<1x256xf32>
    %74 = vector.broadcast %73 : vector<1x256xf32> to vector<2x256xf32>
    %75 = arith.addf %72, %74 : vector<2x256xf32>
    %76 = vector.extract_strided_slice %75 {offsets = [0, 0], sizes = [2, 96], strides = [1, 1]} : vector<2x256xf32> to vector<2x96xf32>
    %77 = arith.negf %76 : vector<2x96xf32>
    %78 = math.exp %77 : vector<2x96xf32>
    %cst_23 = arith.constant 1.000000e+00 : f32
    %79 = vector.broadcast %cst_23 : f32 to vector<2x96xf32>
    %80 = arith.addf %79, %78 : vector<2x96xf32>
    %81 = arith.divf %79, %80 : vector<2x96xf32>
    %82 = vector.extract_strided_slice %75 {offsets = [0, 96], sizes = [2, 32], strides = [1, 1]} : vector<2x256xf32> to vector<2x32xf32>
    %83 = math.tanh %82 : vector<2x32xf32>
    %84 = vector.extract_strided_slice %81 {offsets = [0, 32], sizes = [2, 32], strides = [1, 1]} : vector<2x96xf32> to vector<2x32xf32>
    %85 = arith.mulf %84, %19 : vector<2x32xf32>
    %86 = vector.extract_strided_slice %81 {offsets = [0, 0], sizes = [2, 32], strides = [1, 1]} : vector<2x96xf32> to vector<2x32xf32>
    %87 = arith.mulf %86, %83 : vector<2x32xf32>
    %88 = arith.addf %85, %87 : vector<2x32xf32>
    %89 = vector.extract_strided_slice %81 {offsets = [0, 64], sizes = [2, 32], strides = [1, 1]} : vector<2x96xf32> to vector<2x32xf32>
    %90 = math.tanh %88 : vector<2x32xf32>
    %91 = arith.mulf %89, %90 : vector<2x32xf32>
    %92 = vector.extract_strided_slice %75 {offsets = [0, 128], sizes = [2, 64], strides = [1, 1]} : vector<2x256xf32> to vector<2x64xf32>
    %93 = arith.negf %92 : vector<2x64xf32>
    %94 = math.exp %93 : vector<2x64xf32>
    %cst_24 = arith.constant 1.000000e+00 : f32
    %95 = vector.broadcast %cst_24 : f32 to vector<2x64xf32>
    %96 = arith.addf %95, %94 : vector<2x64xf32>
    %97 = arith.divf %95, %96 : vector<2x64xf32>
    %98 = vector.extract_strided_slice %75 {offsets = [0, 192], sizes = [2, 32], strides = [1, 1]} : vector<2x256xf32> to vector<2x32xf32>
    %99 = vector.extract_strided_slice %97 {offsets = [0, 0], sizes = [2, 32], strides = [1, 1]} : vector<2x64xf32> to vector<2x32xf32>
    %100 = vector.extract_strided_slice %75 {offsets = [0, 224], sizes = [2, 32], strides = [1, 1]} : vector<2x256xf32> to vector<2x32xf32>
    %101 = arith.mulf %99, %100 : vector<2x32xf32>
    %102 = arith.addf %98, %101 : vector<2x32xf32>
    %103 = math.tanh %102 : vector<2x32xf32>
    %104 = vector.extract_strided_slice %97 {offsets = [0, 32], sizes = [2, 32], strides = [1, 1]} : vector<2x64xf32> to vector<2x32xf32>
    %cst_25 = arith.constant 1.000000e+00 : f32
    %105 = vector.broadcast %cst_25 : f32 to vector<2x32xf32>
    %106 = arith.subf %105, %104 : vector<2x32xf32>
    %107 = arith.mulf %106, %103 : vector<2x32xf32>
    %108 = vector.extract_strided_slice %97 {offsets = [0, 32], sizes = [2, 32], strides = [1, 1]} : vector<2x64xf32> to vector<2x32xf32>
    %109 = arith.mulf %108, %19 : vector<2x32xf32>
    %110 = arith.addf %107, %109 : vector<2x32xf32>
    %111 = tpu.concatenate %42, %69 in 1 : vector<2x32xf32>, vector<2x32xf32> -> vector<2x64xf32>
    %c0_26 = arith.constant 0 : index
    %c0_27 = arith.constant 0 : index
    %112 = vector.load %arg6[%c0_26, %c0_27] : memref<64x224xf32, #tpu.memory_space<vmem>>, vector<64x224xf32>
    %cst_28 = arith.constant dense<0.000000e+00> : vector<2x224xf32>
    %113 = tpu.matmul %111, %112, %cst_28 {dimension_numbers = #tpu.dot_dimension_numbers<[1], [0], [0], [1], [0, 0, 1, 1], [], []>} : vector<2x64xf32>, vector<64x224xf32>, vector<2x224xf32> -> vector<2x224xf32>
    %114 = vector.extract_strided_slice %9 {offsets = [1, 0, 0], sizes = [1, 2, 128], strides = [1, 1, 1]} : vector<8x2x128xf32> to vector<1x2x128xf32>
    %115 = vector.shape_cast %114 : vector<1x2x128xf32> to vector<2x128xf32>
    %116 = vector.extract_strided_slice %113 {offsets = [0, 0], sizes = [2, 128], strides = [1, 1]} : vector<2x224xf32> to vector<2x128xf32>
    %117 = arith.addf %115, %116 : vector<2x128xf32>
    %118 = vector.extract_strided_slice %117 {offsets = [0, 0], sizes = [2, 96], strides = [1, 1]} : vector<2x128xf32> to vector<2x96xf32>
    %119 = arith.negf %118 : vector<2x96xf32>
    %120 = math.exp %119 : vector<2x96xf32>
    %cst_29 = arith.constant 1.000000e+00 : f32
    %121 = vector.broadcast %cst_29 : f32 to vector<2x96xf32>
    %122 = arith.addf %121, %120 : vector<2x96xf32>
    %123 = arith.divf %121, %122 : vector<2x96xf32>
    %124 = vector.extract_strided_slice %117 {offsets = [0, 96], sizes = [2, 32], strides = [1, 1]} : vector<2x128xf32> to vector<2x32xf32>
    %125 = math.tanh %124 : vector<2x32xf32>
    %126 = vector.extract_strided_slice %123 {offsets = [0, 32], sizes = [2, 32], strides = [1, 1]} : vector<2x96xf32> to vector<2x32xf32>
    %127 = arith.mulf %126, %39 : vector<2x32xf32>
    %128 = vector.extract_strided_slice %123 {offsets = [0, 0], sizes = [2, 32], strides = [1, 1]} : vector<2x96xf32> to vector<2x32xf32>
    %129 = arith.mulf %128, %125 : vector<2x32xf32>
    %130 = arith.addf %127, %129 : vector<2x32xf32>
    %131 = vector.extract_strided_slice %123 {offsets = [0, 64], sizes = [2, 32], strides = [1, 1]} : vector<2x96xf32> to vector<2x32xf32>
    %132 = math.tanh %130 : vector<2x32xf32>
    %133 = arith.mulf %131, %132 : vector<2x32xf32>
    %134 = vector.extract_strided_slice %18 {offsets = [1, 0, 0], sizes = [1, 2, 96], strides = [1, 1, 1]} : vector<8x2x96xf32> to vector<1x2x96xf32>
    %135 = vector.shape_cast %134 : vector<1x2x96xf32> to vector<2x96xf32>
    %136 = vector.extract_strided_slice %113 {offsets = [0, 128], sizes = [2, 96], strides = [1, 1]} : vector<2x224xf32> to vector<2x96xf32>
    %c0_30 = arith.constant 0 : index
    %c0_31 = arith.constant 0 : index
    %137 = vector.load %arg5[%c0_30, %c0_31] : memref<1x96xf32, #tpu.memory_space<vmem>>, vector<1x96xf32>
    %138 = vector.broadcast %137 : vector<1x96xf32> to vector<2x96xf32>
    %139 = arith.addf %136, %138 : vector<2x96xf32>
    %140 = vector.extract_strided_slice %135 {offsets = [0, 0], sizes = [2, 64], strides = [1, 1]} : vector<2x96xf32> to vector<2x64xf32>
    %141 = vector.extract_strided_slice %139 {offsets = [0, 0], sizes = [2, 64], strides = [1, 1]} : vector<2x96xf32> to vector<2x64xf32>
    %142 = arith.addf %140, %141 : vector<2x64xf32>
    %143 = arith.negf %142 : vector<2x64xf32>
    %144 = math.exp %143 : vector<2x64xf32>
    %cst_32 = arith.constant 1.000000e+00 : f32
    %145 = vector.broadcast %cst_32 : f32 to vector<2x64xf32>
    %146 = arith.addf %145, %144 : vector<2x64xf32>
    %147 = arith.divf %145, %146 : vector<2x64xf32>
    %148 = vector.extract_strided_slice %135 {offsets = [0, 64], sizes = [2, 32], strides = [1, 1]} : vector<2x96xf32> to vector<2x32xf32>
    %149 = vector.extract_strided_slice %147 {offsets = [0, 0], sizes = [2, 32], strides = [1, 1]} : vector<2x64xf32> to vector<2x32xf32>
    %150 = vector.extract_strided_slice %139 {offsets = [0, 64], sizes = [2, 32], strides = [1, 1]} : vector<2x96xf32> to vector<2x32xf32>
    %151 = arith.mulf %149, %150 : vector<2x32xf32>
    %152 = arith.addf %148, %151 : vector<2x32xf32>
    %153 = math.tanh %152 : vector<2x32xf32>
    %154 = vector.extract_strided_slice %147 {offsets = [0, 32], sizes = [2, 32], strides = [1, 1]} : vector<2x64xf32> to vector<2x32xf32>
    %cst_33 = arith.constant 1.000000e+00 : f32
    %155 = vector.broadcast %cst_33 : f32 to vector<2x32xf32>
    %156 = arith.subf %155, %154 : vector<2x32xf32>
    %157 = arith.mulf %156, %153 : vector<2x32xf32>
    %158 = vector.extract_strided_slice %147 {offsets = [0, 32], sizes = [2, 32], strides = [1, 1]} : vector<2x64xf32> to vector<2x32xf32>
    %159 = arith.mulf %158, %69 : vector<2x32xf32>
    %160 = arith.addf %157, %159 : vector<2x32xf32>
    %161 = tpu.concatenate %133, %91, %160, %110 in 1 : vector<2x32xf32>, vector<2x32xf32>, vector<2x32xf32>, vector<2x32xf32> -> vector<2x128xf32>
    %c0_34 = arith.constant 0 : index
    %c0_35 = arith.constant 0 : index
    %162 = vector.load %arg7[%c0_34, %c0_35] : memref<128x256xf32, #tpu.memory_space<vmem>>, vector<128x256xf32>
    %cst_36 = arith.constant dense<0.000000e+00> : vector<2x256xf32>
    %163 = tpu.matmul %161, %162, %cst_36 {dimension_numbers = #tpu.dot_dimension_numbers<[1], [0], [0], [1], [0, 0, 1, 1], [], []>} : vector<2x128xf32>, vector<128x256xf32>, vector<2x256xf32> -> vector<2x256xf32>
    %c0_37 = arith.constant 0 : index
    %c0_38 = arith.constant 0 : index
    %164 = vector.load %arg8[%c0_37, %c0_38] : memref<1x256xf32, #tpu.memory_space<vmem>>, vector<1x256xf32>
    %165 = vector.broadcast %164 : vector<1x256xf32> to vector<2x256xf32>
    %166 = arith.addf %163, %165 : vector<2x256xf32>
    %167 = vector.extract_strided_slice %166 {offsets = [0, 0], sizes = [2, 96], strides = [1, 1]} : vector<2x256xf32> to vector<2x96xf32>
    %168 = arith.negf %167 : vector<2x96xf32>
    %169 = math.exp %168 : vector<2x96xf32>
    %cst_39 = arith.constant 1.000000e+00 : f32
    %170 = vector.broadcast %cst_39 : f32 to vector<2x96xf32>
    %171 = arith.addf %170, %169 : vector<2x96xf32>
    %172 = arith.divf %170, %171 : vector<2x96xf32>
    %173 = vector.extract_strided_slice %166 {offsets = [0, 96], sizes = [2, 32], strides = [1, 1]} : vector<2x256xf32> to vector<2x32xf32>
    %174 = math.tanh %173 : vector<2x32xf32>
    %175 = vector.extract_strided_slice %172 {offsets = [0, 32], sizes = [2, 32], strides = [1, 1]} : vector<2x96xf32> to vector<2x32xf32>
    %176 = arith.mulf %175, %88 : vector<2x32xf32>
    %177 = vector.extract_strided_slice %172 {offsets = [0, 0], sizes = [2, 32], strides = [1, 1]} : vector<2x96xf32> to vector<2x32xf32>
    %178 = arith.mulf %177, %174 : vector<2x32xf32>
    %179 = arith.addf %176, %178 : vector<2x32xf32>
    %180 = vector.extract_strided_slice %172 {offsets = [0, 64], sizes = [2, 32], strides = [1, 1]} : vector<2x96xf32> to vector<2x32xf32>
    %181 = math.tanh %179 : vector<2x32xf32>
    %182 = arith.mulf %180, %181 : vector<2x32xf32>
    %183 = vector.extract_strided_slice %166 {offsets = [0, 128], sizes = [2, 64], strides = [1, 1]} : vector<2x256xf32> to vector<2x64xf32>
    %184 = arith.negf %183 : vector<2x64xf32>
    %185 = math.exp %184 : vector<2x64xf32>
    %cst_40 = arith.constant 1.000000e+00 : f32
    %186 = vector.broadcast %cst_40 : f32 to vector<2x64xf32>
    %187 = arith.addf %186, %185 : vector<2x64xf32>
    %188 = arith.divf %186, %187 : vector<2x64xf32>
    %189 = vector.extract_strided_slice %166 {offsets = [0, 192], sizes = [2, 32], strides = [1, 1]} : vector<2x256xf32> to vector<2x32xf32>
    %190 = vector.extract_strided_slice %188 {offsets = [0, 0], sizes = [2, 32], strides = [1, 1]} : vector<2x64xf32> to vector<2x32xf32>
    %191 = vector.extract_strided_slice %166 {offsets = [0, 224], sizes = [2, 32], strides = [1, 1]} : vector<2x256xf32> to vector<2x32xf32>
    %192 = arith.mulf %190, %191 : vector<2x32xf32>
    %193 = arith.addf %189, %192 : vector<2x32xf32>
    %194 = math.tanh %193 : vector<2x32xf32>
    %195 = vector.extract_strided_slice %188 {offsets = [0, 32], sizes = [2, 32], strides = [1, 1]} : vector<2x64xf32> to vector<2x32xf32>
    %cst_41 = arith.constant 1.000000e+00 : f32
    %196 = vector.broadcast %cst_41 : f32 to vector<2x32xf32>
    %197 = arith.subf %196, %195 : vector<2x32xf32>
    %198 = arith.mulf %197, %194 : vector<2x32xf32>
    %199 = vector.extract_strided_slice %188 {offsets = [0, 32], sizes = [2, 32], strides = [1, 1]} : vector<2x64xf32> to vector<2x32xf32>
    %200 = arith.mulf %199, %110 : vector<2x32xf32>
    %201 = arith.addf %198, %200 : vector<2x32xf32>
    %202 = tpu.concatenate %133, %160 in 1 : vector<2x32xf32>, vector<2x32xf32> -> vector<2x64xf32>
    %c0_42 = arith.constant 0 : index
    %c0_43 = arith.constant 0 : index
    %203 = vector.load %arg6[%c0_42, %c0_43] : memref<64x224xf32, #tpu.memory_space<vmem>>, vector<64x224xf32>
    %cst_44 = arith.constant dense<0.000000e+00> : vector<2x224xf32>
    %204 = tpu.matmul %202, %203, %cst_44 {dimension_numbers = #tpu.dot_dimension_numbers<[1], [0], [0], [1], [0, 0, 1, 1], [], []>} : vector<2x64xf32>, vector<64x224xf32>, vector<2x224xf32> -> vector<2x224xf32>
    %205 = vector.extract_strided_slice %9 {offsets = [2, 0, 0], sizes = [1, 2, 128], strides = [1, 1, 1]} : vector<8x2x128xf32> to vector<1x2x128xf32>
    %206 = vector.shape_cast %205 : vector<1x2x128xf32> to vector<2x128xf32>
    %207 = vector.extract_strided_slice %204 {offsets = [0, 0], sizes = [2, 128], strides = [1, 1]} : vector<2x224xf32> to vector<2x128xf32>
    %208 = arith.addf %206, %207 : vector<2x128xf32>
    %209 = vector.extract_strided_slice %208 {offsets = [0, 0], sizes = [2, 96], strides = [1, 1]} : vector<2x128xf32> to vector<2x96xf32>
    %210 = arith.negf %209 : vector<2x96xf32>
    %211 = math.exp %210 : vector<2x96xf32>
    %cst_45 = arith.constant 1.000000e+00 : f32
    %212 = vector.broadcast %cst_45 : f32 to vector<2x96xf32>
    %213 = arith.addf %212, %211 : vector<2x96xf32>
    %214 = arith.divf %212, %213 : vector<2x96xf32>
    %215 = vector.extract_strided_slice %208 {offsets = [0, 96], sizes = [2, 32], strides = [1, 1]} : vector<2x128xf32> to vector<2x32xf32>
    %216 = math.tanh %215 : vector<2x32xf32>
    %217 = vector.extract_strided_slice %214 {offsets = [0, 32], sizes = [2, 32], strides = [1, 1]} : vector<2x96xf32> to vector<2x32xf32>
    %218 = arith.mulf %217, %130 : vector<2x32xf32>
    %219 = vector.extract_strided_slice %214 {offsets = [0, 0], sizes = [2, 32], strides = [1, 1]} : vector<2x96xf32> to vector<2x32xf32>
    %220 = arith.mulf %219, %216 : vector<2x32xf32>
    %221 = arith.addf %218, %220 : vector<2x32xf32>
    %222 = vector.extract_strided_slice %214 {offsets = [0, 64], sizes = [2, 32], strides = [1, 1]} : vector<2x96xf32> to vector<2x32xf32>
    %223 = math.tanh %221 : vector<2x32xf32>
    %224 = arith.mulf %222, %223 : vector<2x32xf32>
    %225 = vector.extract_strided_slice %18 {offsets = [2, 0, 0], sizes = [1, 2, 96], strides = [1, 1, 1]} : vector<8x2x96xf32> to vector<1x2x96xf32>
    %226 = vector.shape_cast %225 : vector<1x2x96xf32> to vector<2x96xf32>
    %227 = vector.extract_strided_slice %204 {offsets = [0, 128], sizes = [2, 96], strides = [1, 1]} : vector<2x224xf32> to vector<2x96xf32>
    %c0_46 = arith.constant 0 : index
    %c0_47 = arith.constant 0 : index
    %228 = vector.load %arg5[%c0_46, %c0_47] : memref<1x96xf32, #tpu.memory_space<vmem>>, vector<1x96xf32>
    %229 = vector.broadcast %228 : vector<1x96xf32> to vector<2x96xf32>
    %230 = arith.addf %227, %229 : vector<2x96xf32>
    %231 = vector.extract_strided_slice %226 {offsets = [0, 0], sizes = [2, 64], strides = [1, 1]} : vector<2x96xf32> to vector<2x64xf32>
    %232 = vector.extract_strided_slice %230 {offsets = [0, 0], sizes = [2, 64], strides = [1, 1]} : vector<2x96xf32> to vector<2x64xf32>
    %233 = arith.addf %231, %232 : vector<2x64xf32>
    %234 = arith.negf %233 : vector<2x64xf32>
    %235 = math.exp %234 : vector<2x64xf32>
    %cst_48 = arith.constant 1.000000e+00 : f32
    %236 = vector.broadcast %cst_48 : f32 to vector<2x64xf32>
    %237 = arith.addf %236, %235 : vector<2x64xf32>
    %238 = arith.divf %236, %237 : vector<2x64xf32>
    %239 = vector.extract_strided_slice %226 {offsets = [0, 64], sizes = [2, 32], strides = [1, 1]} : vector<2x96xf32> to vector<2x32xf32>
    %240 = vector.extract_strided_slice %238 {offsets = [0, 0], sizes = [2, 32], strides = [1, 1]} : vector<2x64xf32> to vector<2x32xf32>
    %241 = vector.extract_strided_slice %230 {offsets = [0, 64], sizes = [2, 32], strides = [1, 1]} : vector<2x96xf32> to vector<2x32xf32>
    %242 = arith.mulf %240, %241 : vector<2x32xf32>
    %243 = arith.addf %239, %242 : vector<2x32xf32>
    %244 = math.tanh %243 : vector<2x32xf32>
    %245 = vector.extract_strided_slice %238 {offsets = [0, 32], sizes = [2, 32], strides = [1, 1]} : vector<2x64xf32> to vector<2x32xf32>
    %cst_49 = arith.constant 1.000000e+00 : f32
    %246 = vector.broadcast %cst_49 : f32 to vector<2x32xf32>
    %247 = arith.subf %246, %245 : vector<2x32xf32>
    %248 = arith.mulf %247, %244 : vector<2x32xf32>
    %249 = vector.extract_strided_slice %238 {offsets = [0, 32], sizes = [2, 32], strides = [1, 1]} : vector<2x64xf32> to vector<2x32xf32>
    %250 = arith.mulf %249, %160 : vector<2x32xf32>
    %251 = arith.addf %248, %250 : vector<2x32xf32>
    %252 = tpu.concatenate %224, %182, %251, %201 in 1 : vector<2x32xf32>, vector<2x32xf32>, vector<2x32xf32>, vector<2x32xf32> -> vector<2x128xf32>
    %c0_50 = arith.constant 0 : index
    %c0_51 = arith.constant 0 : index
    %253 = vector.load %arg7[%c0_50, %c0_51] : memref<128x256xf32, #tpu.memory_space<vmem>>, vector<128x256xf32>
    %cst_52 = arith.constant dense<0.000000e+00> : vector<2x256xf32>
    %254 = tpu.matmul %252, %253, %cst_52 {dimension_numbers = #tpu.dot_dimension_numbers<[1], [0], [0], [1], [0, 0, 1, 1], [], []>} : vector<2x128xf32>, vector<128x256xf32>, vector<2x256xf32> -> vector<2x256xf32>
    %c0_53 = arith.constant 0 : index
    %c0_54 = arith.constant 0 : index
    %255 = vector.load %arg8[%c0_53, %c0_54] : memref<1x256xf32, #tpu.memory_space<vmem>>, vector<1x256xf32>
    %256 = vector.broadcast %255 : vector<1x256xf32> to vector<2x256xf32>
    %257 = arith.addf %254, %256 : vector<2x256xf32>
    %258 = vector.extract_strided_slice %257 {offsets = [0, 0], sizes = [2, 96], strides = [1, 1]} : vector<2x256xf32> to vector<2x96xf32>
    %259 = arith.negf %258 : vector<2x96xf32>
    %260 = math.exp %259 : vector<2x96xf32>
    %cst_55 = arith.constant 1.000000e+00 : f32
    %261 = vector.broadcast %cst_55 : f32 to vector<2x96xf32>
    %262 = arith.addf %261, %260 : vector<2x96xf32>
    %263 = arith.divf %261, %262 : vector<2x96xf32>
    %264 = vector.extract_strided_slice %257 {offsets = [0, 96], sizes = [2, 32], strides = [1, 1]} : vector<2x256xf32> to vector<2x32xf32>
    %265 = math.tanh %264 : vector<2x32xf32>
    %266 = vector.extract_strided_slice %263 {offsets = [0, 32], sizes = [2, 32], strides = [1, 1]} : vector<2x96xf32> to vector<2x32xf32>
    %267 = arith.mulf %266, %179 : vector<2x32xf32>
    %268 = vector.extract_strided_slice %263 {offsets = [0, 0], sizes = [2, 32], strides = [1, 1]} : vector<2x96xf32> to vector<2x32xf32>
    %269 = arith.mulf %268, %265 : vector<2x32xf32>
    %270 = arith.addf %267, %269 : vector<2x32xf32>
    %271 = vector.extract_strided_slice %263 {offsets = [0, 64], sizes = [2, 32], strides = [1, 1]} : vector<2x96xf32> to vector<2x32xf32>
    %272 = math.tanh %270 : vector<2x32xf32>
    %273 = arith.mulf %271, %272 : vector<2x32xf32>
    %274 = vector.extract_strided_slice %257 {offsets = [0, 128], sizes = [2, 64], strides = [1, 1]} : vector<2x256xf32> to vector<2x64xf32>
    %275 = arith.negf %274 : vector<2x64xf32>
    %276 = math.exp %275 : vector<2x64xf32>
    %cst_56 = arith.constant 1.000000e+00 : f32
    %277 = vector.broadcast %cst_56 : f32 to vector<2x64xf32>
    %278 = arith.addf %277, %276 : vector<2x64xf32>
    %279 = arith.divf %277, %278 : vector<2x64xf32>
    %280 = vector.extract_strided_slice %257 {offsets = [0, 192], sizes = [2, 32], strides = [1, 1]} : vector<2x256xf32> to vector<2x32xf32>
    %281 = vector.extract_strided_slice %279 {offsets = [0, 0], sizes = [2, 32], strides = [1, 1]} : vector<2x64xf32> to vector<2x32xf32>
    %282 = vector.extract_strided_slice %257 {offsets = [0, 224], sizes = [2, 32], strides = [1, 1]} : vector<2x256xf32> to vector<2x32xf32>
    %283 = arith.mulf %281, %282 : vector<2x32xf32>
    %284 = arith.addf %280, %283 : vector<2x32xf32>
    %285 = math.tanh %284 : vector<2x32xf32>
    %286 = vector.extract_strided_slice %279 {offsets = [0, 32], sizes = [2, 32], strides = [1, 1]} : vector<2x64xf32> to vector<2x32xf32>
    %cst_57 = arith.constant 1.000000e+00 : f32
    %287 = vector.broadcast %cst_57 : f32 to vector<2x32xf32>
    %288 = arith.subf %287, %286 : vector<2x32xf32>
    %289 = arith.mulf %288, %285 : vector<2x32xf32>
    %290 = vector.extract_strided_slice %279 {offsets = [0, 32], sizes = [2, 32], strides = [1, 1]} : vector<2x64xf32> to vector<2x32xf32>
    %291 = arith.mulf %290, %201 : vector<2x32xf32>
    %292 = arith.addf %289, %291 : vector<2x32xf32>
    %293 = tpu.concatenate %224, %251 in 1 : vector<2x32xf32>, vector<2x32xf32> -> vector<2x64xf32>
    %c0_58 = arith.constant 0 : index
    %c0_59 = arith.constant 0 : index
    %294 = vector.load %arg6[%c0_58, %c0_59] : memref<64x224xf32, #tpu.memory_space<vmem>>, vector<64x224xf32>
    %cst_60 = arith.constant dense<0.000000e+00> : vector<2x224xf32>
    %295 = tpu.matmul %293, %294, %cst_60 {dimension_numbers = #tpu.dot_dimension_numbers<[1], [0], [0], [1], [0, 0, 1, 1], [], []>} : vector<2x64xf32>, vector<64x224xf32>, vector<2x224xf32> -> vector<2x224xf32>
    %296 = vector.extract_strided_slice %9 {offsets = [3, 0, 0], sizes = [1, 2, 128], strides = [1, 1, 1]} : vector<8x2x128xf32> to vector<1x2x128xf32>
    %297 = vector.shape_cast %296 : vector<1x2x128xf32> to vector<2x128xf32>
    %298 = vector.extract_strided_slice %295 {offsets = [0, 0], sizes = [2, 128], strides = [1, 1]} : vector<2x224xf32> to vector<2x128xf32>
    %299 = arith.addf %297, %298 : vector<2x128xf32>
    %300 = vector.extract_strided_slice %299 {offsets = [0, 0], sizes = [2, 96], strides = [1, 1]} : vector<2x128xf32> to vector<2x96xf32>
    %301 = arith.negf %300 : vector<2x96xf32>
    %302 = math.exp %301 : vector<2x96xf32>
    %cst_61 = arith.constant 1.000000e+00 : f32
    %303 = vector.broadcast %cst_61 : f32 to vector<2x96xf32>
    %304 = arith.addf %303, %302 : vector<2x96xf32>
    %305 = arith.divf %303, %304 : vector<2x96xf32>
    %306 = vector.extract_strided_slice %299 {offsets = [0, 96], sizes = [2, 32], strides = [1, 1]} : vector<2x128xf32> to vector<2x32xf32>
    %307 = math.tanh %306 : vector<2x32xf32>
    %308 = vector.extract_strided_slice %305 {offsets = [0, 32], sizes = [2, 32], strides = [1, 1]} : vector<2x96xf32> to vector<2x32xf32>
    %309 = arith.mulf %308, %221 : vector<2x32xf32>
    %310 = vector.extract_strided_slice %305 {offsets = [0, 0], sizes = [2, 32], strides = [1, 1]} : vector<2x96xf32> to vector<2x32xf32>
    %311 = arith.mulf %310, %307 : vector<2x32xf32>
    %312 = arith.addf %309, %311 : vector<2x32xf32>
    %313 = vector.extract_strided_slice %305 {offsets = [0, 64], sizes = [2, 32], strides = [1, 1]} : vector<2x96xf32> to vector<2x32xf32>
    %314 = math.tanh %312 : vector<2x32xf32>
    %315 = arith.mulf %313, %314 : vector<2x32xf32>
    %316 = vector.extract_strided_slice %18 {offsets = [3, 0, 0], sizes = [1, 2, 96], strides = [1, 1, 1]} : vector<8x2x96xf32> to vector<1x2x96xf32>
    %317 = vector.shape_cast %316 : vector<1x2x96xf32> to vector<2x96xf32>
    %318 = vector.extract_strided_slice %295 {offsets = [0, 128], sizes = [2, 96], strides = [1, 1]} : vector<2x224xf32> to vector<2x96xf32>
    %c0_62 = arith.constant 0 : index
    %c0_63 = arith.constant 0 : index
    %319 = vector.load %arg5[%c0_62, %c0_63] : memref<1x96xf32, #tpu.memory_space<vmem>>, vector<1x96xf32>
    %320 = vector.broadcast %319 : vector<1x96xf32> to vector<2x96xf32>
    %321 = arith.addf %318, %320 : vector<2x96xf32>
    %322 = vector.extract_strided_slice %317 {offsets = [0, 0], sizes = [2, 64], strides = [1, 1]} : vector<2x96xf32> to vector<2x64xf32>
    %323 = vector.extract_strided_slice %321 {offsets = [0, 0], sizes = [2, 64], strides = [1, 1]} : vector<2x96xf32> to vector<2x64xf32>
    %324 = arith.addf %322, %323 : vector<2x64xf32>
    %325 = arith.negf %324 : vector<2x64xf32>
    %326 = math.exp %325 : vector<2x64xf32>
    %cst_64 = arith.constant 1.000000e+00 : f32
    %327 = vector.broadcast %cst_64 : f32 to vector<2x64xf32>
    %328 = arith.addf %327, %326 : vector<2x64xf32>
    %329 = arith.divf %327, %328 : vector<2x64xf32>
    %330 = vector.extract_strided_slice %317 {offsets = [0, 64], sizes = [2, 32], strides = [1, 1]} : vector<2x96xf32> to vector<2x32xf32>
    %331 = vector.extract_strided_slice %329 {offsets = [0, 0], sizes = [2, 32], strides = [1, 1]} : vector<2x64xf32> to vector<2x32xf32>
    %332 = vector.extract_strided_slice %321 {offsets = [0, 64], sizes = [2, 32], strides = [1, 1]} : vector<2x96xf32> to vector<2x32xf32>
    %333 = arith.mulf %331, %332 : vector<2x32xf32>
    %334 = arith.addf %330, %333 : vector<2x32xf32>
    %335 = math.tanh %334 : vector<2x32xf32>
    %336 = vector.extract_strided_slice %329 {offsets = [0, 32], sizes = [2, 32], strides = [1, 1]} : vector<2x64xf32> to vector<2x32xf32>
    %cst_65 = arith.constant 1.000000e+00 : f32
    %337 = vector.broadcast %cst_65 : f32 to vector<2x32xf32>
    %338 = arith.subf %337, %336 : vector<2x32xf32>
    %339 = arith.mulf %338, %335 : vector<2x32xf32>
    %340 = vector.extract_strided_slice %329 {offsets = [0, 32], sizes = [2, 32], strides = [1, 1]} : vector<2x64xf32> to vector<2x32xf32>
    %341 = arith.mulf %340, %251 : vector<2x32xf32>
    %342 = arith.addf %339, %341 : vector<2x32xf32>
    %343 = tpu.concatenate %315, %273, %342, %292 in 1 : vector<2x32xf32>, vector<2x32xf32>, vector<2x32xf32>, vector<2x32xf32> -> vector<2x128xf32>
    %c0_66 = arith.constant 0 : index
    %c0_67 = arith.constant 0 : index
    %344 = vector.load %arg7[%c0_66, %c0_67] : memref<128x256xf32, #tpu.memory_space<vmem>>, vector<128x256xf32>
    %cst_68 = arith.constant dense<0.000000e+00> : vector<2x256xf32>
    %345 = tpu.matmul %343, %344, %cst_68 {dimension_numbers = #tpu.dot_dimension_numbers<[1], [0], [0], [1], [0, 0, 1, 1], [], []>} : vector<2x128xf32>, vector<128x256xf32>, vector<2x256xf32> -> vector<2x256xf32>
    %c0_69 = arith.constant 0 : index
    %c0_70 = arith.constant 0 : index
    %346 = vector.load %arg8[%c0_69, %c0_70] : memref<1x256xf32, #tpu.memory_space<vmem>>, vector<1x256xf32>
    %347 = vector.broadcast %346 : vector<1x256xf32> to vector<2x256xf32>
    %348 = arith.addf %345, %347 : vector<2x256xf32>
    %349 = vector.extract_strided_slice %348 {offsets = [0, 0], sizes = [2, 96], strides = [1, 1]} : vector<2x256xf32> to vector<2x96xf32>
    %350 = arith.negf %349 : vector<2x96xf32>
    %351 = math.exp %350 : vector<2x96xf32>
    %cst_71 = arith.constant 1.000000e+00 : f32
    %352 = vector.broadcast %cst_71 : f32 to vector<2x96xf32>
    %353 = arith.addf %352, %351 : vector<2x96xf32>
    %354 = arith.divf %352, %353 : vector<2x96xf32>
    %355 = vector.extract_strided_slice %348 {offsets = [0, 96], sizes = [2, 32], strides = [1, 1]} : vector<2x256xf32> to vector<2x32xf32>
    %356 = math.tanh %355 : vector<2x32xf32>
    %357 = vector.extract_strided_slice %354 {offsets = [0, 32], sizes = [2, 32], strides = [1, 1]} : vector<2x96xf32> to vector<2x32xf32>
    %358 = arith.mulf %357, %270 : vector<2x32xf32>
    %359 = vector.extract_strided_slice %354 {offsets = [0, 0], sizes = [2, 32], strides = [1, 1]} : vector<2x96xf32> to vector<2x32xf32>
    %360 = arith.mulf %359, %356 : vector<2x32xf32>
    %361 = arith.addf %358, %360 : vector<2x32xf32>
    %362 = vector.extract_strided_slice %354 {offsets = [0, 64], sizes = [2, 32], strides = [1, 1]} : vector<2x96xf32> to vector<2x32xf32>
    %363 = math.tanh %361 : vector<2x32xf32>
    %364 = arith.mulf %362, %363 : vector<2x32xf32>
    %365 = vector.extract_strided_slice %348 {offsets = [0, 128], sizes = [2, 64], strides = [1, 1]} : vector<2x256xf32> to vector<2x64xf32>
    %366 = arith.negf %365 : vector<2x64xf32>
    %367 = math.exp %366 : vector<2x64xf32>
    %cst_72 = arith.constant 1.000000e+00 : f32
    %368 = vector.broadcast %cst_72 : f32 to vector<2x64xf32>
    %369 = arith.addf %368, %367 : vector<2x64xf32>
    %370 = arith.divf %368, %369 : vector<2x64xf32>
    %371 = vector.extract_strided_slice %348 {offsets = [0, 192], sizes = [2, 32], strides = [1, 1]} : vector<2x256xf32> to vector<2x32xf32>
    %372 = vector.extract_strided_slice %370 {offsets = [0, 0], sizes = [2, 32], strides = [1, 1]} : vector<2x64xf32> to vector<2x32xf32>
    %373 = vector.extract_strided_slice %348 {offsets = [0, 224], sizes = [2, 32], strides = [1, 1]} : vector<2x256xf32> to vector<2x32xf32>
    %374 = arith.mulf %372, %373 : vector<2x32xf32>
    %375 = arith.addf %371, %374 : vector<2x32xf32>
    %376 = math.tanh %375 : vector<2x32xf32>
    %377 = vector.extract_strided_slice %370 {offsets = [0, 32], sizes = [2, 32], strides = [1, 1]} : vector<2x64xf32> to vector<2x32xf32>
    %cst_73 = arith.constant 1.000000e+00 : f32
    %378 = vector.broadcast %cst_73 : f32 to vector<2x32xf32>
    %379 = arith.subf %378, %377 : vector<2x32xf32>
    %380 = arith.mulf %379, %376 : vector<2x32xf32>
    %381 = vector.extract_strided_slice %370 {offsets = [0, 32], sizes = [2, 32], strides = [1, 1]} : vector<2x64xf32> to vector<2x32xf32>
    %382 = arith.mulf %381, %292 : vector<2x32xf32>
    %383 = arith.addf %380, %382 : vector<2x32xf32>
    %384 = tpu.concatenate %315, %342 in 1 : vector<2x32xf32>, vector<2x32xf32> -> vector<2x64xf32>
    %c0_74 = arith.constant 0 : index
    %c0_75 = arith.constant 0 : index
    %385 = vector.load %arg6[%c0_74, %c0_75] : memref<64x224xf32, #tpu.memory_space<vmem>>, vector<64x224xf32>
    %cst_76 = arith.constant dense<0.000000e+00> : vector<2x224xf32>
    %386 = tpu.matmul %384, %385, %cst_76 {dimension_numbers = #tpu.dot_dimension_numbers<[1], [0], [0], [1], [0, 0, 1, 1], [], []>} : vector<2x64xf32>, vector<64x224xf32>, vector<2x224xf32> -> vector<2x224xf32>
    %387 = vector.extract_strided_slice %9 {offsets = [4, 0, 0], sizes = [1, 2, 128], strides = [1, 1, 1]} : vector<8x2x128xf32> to vector<1x2x128xf32>
    %388 = vector.shape_cast %387 : vector<1x2x128xf32> to vector<2x128xf32>
    %389 = vector.extract_strided_slice %386 {offsets = [0, 0], sizes = [2, 128], strides = [1, 1]} : vector<2x224xf32> to vector<2x128xf32>
    %390 = arith.addf %388, %389 : vector<2x128xf32>
    %391 = vector.extract_strided_slice %390 {offsets = [0, 0], sizes = [2, 96], strides = [1, 1]} : vector<2x128xf32> to vector<2x96xf32>
    %392 = arith.negf %391 : vector<2x96xf32>
    %393 = math.exp %392 : vector<2x96xf32>
    %cst_77 = arith.constant 1.000000e+00 : f32
    %394 = vector.broadcast %cst_77 : f32 to vector<2x96xf32>
    %395 = arith.addf %394, %393 : vector<2x96xf32>
    %396 = arith.divf %394, %395 : vector<2x96xf32>
    %397 = vector.extract_strided_slice %390 {offsets = [0, 96], sizes = [2, 32], strides = [1, 1]} : vector<2x128xf32> to vector<2x32xf32>
    %398 = math.tanh %397 : vector<2x32xf32>
    %399 = vector.extract_strided_slice %396 {offsets = [0, 32], sizes = [2, 32], strides = [1, 1]} : vector<2x96xf32> to vector<2x32xf32>
    %400 = arith.mulf %399, %312 : vector<2x32xf32>
    %401 = vector.extract_strided_slice %396 {offsets = [0, 0], sizes = [2, 32], strides = [1, 1]} : vector<2x96xf32> to vector<2x32xf32>
    %402 = arith.mulf %401, %398 : vector<2x32xf32>
    %403 = arith.addf %400, %402 : vector<2x32xf32>
    %404 = vector.extract_strided_slice %396 {offsets = [0, 64], sizes = [2, 32], strides = [1, 1]} : vector<2x96xf32> to vector<2x32xf32>
    %405 = math.tanh %403 : vector<2x32xf32>
    %406 = arith.mulf %404, %405 : vector<2x32xf32>
    %407 = vector.extract_strided_slice %18 {offsets = [4, 0, 0], sizes = [1, 2, 96], strides = [1, 1, 1]} : vector<8x2x96xf32> to vector<1x2x96xf32>
    %408 = vector.shape_cast %407 : vector<1x2x96xf32> to vector<2x96xf32>
    %409 = vector.extract_strided_slice %386 {offsets = [0, 128], sizes = [2, 96], strides = [1, 1]} : vector<2x224xf32> to vector<2x96xf32>
    %c0_78 = arith.constant 0 : index
    %c0_79 = arith.constant 0 : index
    %410 = vector.load %arg5[%c0_78, %c0_79] : memref<1x96xf32, #tpu.memory_space<vmem>>, vector<1x96xf32>
    %411 = vector.broadcast %410 : vector<1x96xf32> to vector<2x96xf32>
    %412 = arith.addf %409, %411 : vector<2x96xf32>
    %413 = vector.extract_strided_slice %408 {offsets = [0, 0], sizes = [2, 64], strides = [1, 1]} : vector<2x96xf32> to vector<2x64xf32>
    %414 = vector.extract_strided_slice %412 {offsets = [0, 0], sizes = [2, 64], strides = [1, 1]} : vector<2x96xf32> to vector<2x64xf32>
    %415 = arith.addf %413, %414 : vector<2x64xf32>
    %416 = arith.negf %415 : vector<2x64xf32>
    %417 = math.exp %416 : vector<2x64xf32>
    %cst_80 = arith.constant 1.000000e+00 : f32
    %418 = vector.broadcast %cst_80 : f32 to vector<2x64xf32>
    %419 = arith.addf %418, %417 : vector<2x64xf32>
    %420 = arith.divf %418, %419 : vector<2x64xf32>
    %421 = vector.extract_strided_slice %408 {offsets = [0, 64], sizes = [2, 32], strides = [1, 1]} : vector<2x96xf32> to vector<2x32xf32>
    %422 = vector.extract_strided_slice %420 {offsets = [0, 0], sizes = [2, 32], strides = [1, 1]} : vector<2x64xf32> to vector<2x32xf32>
    %423 = vector.extract_strided_slice %412 {offsets = [0, 64], sizes = [2, 32], strides = [1, 1]} : vector<2x96xf32> to vector<2x32xf32>
    %424 = arith.mulf %422, %423 : vector<2x32xf32>
    %425 = arith.addf %421, %424 : vector<2x32xf32>
    %426 = math.tanh %425 : vector<2x32xf32>
    %427 = vector.extract_strided_slice %420 {offsets = [0, 32], sizes = [2, 32], strides = [1, 1]} : vector<2x64xf32> to vector<2x32xf32>
    %cst_81 = arith.constant 1.000000e+00 : f32
    %428 = vector.broadcast %cst_81 : f32 to vector<2x32xf32>
    %429 = arith.subf %428, %427 : vector<2x32xf32>
    %430 = arith.mulf %429, %426 : vector<2x32xf32>
    %431 = vector.extract_strided_slice %420 {offsets = [0, 32], sizes = [2, 32], strides = [1, 1]} : vector<2x64xf32> to vector<2x32xf32>
    %432 = arith.mulf %431, %342 : vector<2x32xf32>
    %433 = arith.addf %430, %432 : vector<2x32xf32>
    %434 = tpu.concatenate %406, %364, %433, %383 in 1 : vector<2x32xf32>, vector<2x32xf32>, vector<2x32xf32>, vector<2x32xf32> -> vector<2x128xf32>
    %c0_82 = arith.constant 0 : index
    %c0_83 = arith.constant 0 : index
    %435 = vector.load %arg7[%c0_82, %c0_83] : memref<128x256xf32, #tpu.memory_space<vmem>>, vector<128x256xf32>
    %cst_84 = arith.constant dense<0.000000e+00> : vector<2x256xf32>
    %436 = tpu.matmul %434, %435, %cst_84 {dimension_numbers = #tpu.dot_dimension_numbers<[1], [0], [0], [1], [0, 0, 1, 1], [], []>} : vector<2x128xf32>, vector<128x256xf32>, vector<2x256xf32> -> vector<2x256xf32>
    %c0_85 = arith.constant 0 : index
    %c0_86 = arith.constant 0 : index
    %437 = vector.load %arg8[%c0_85, %c0_86] : memref<1x256xf32, #tpu.memory_space<vmem>>, vector<1x256xf32>
    %438 = vector.broadcast %437 : vector<1x256xf32> to vector<2x256xf32>
    %439 = arith.addf %436, %438 : vector<2x256xf32>
    %440 = vector.extract_strided_slice %439 {offsets = [0, 0], sizes = [2, 96], strides = [1, 1]} : vector<2x256xf32> to vector<2x96xf32>
    %441 = arith.negf %440 : vector<2x96xf32>
    %442 = math.exp %441 : vector<2x96xf32>
    %cst_87 = arith.constant 1.000000e+00 : f32
    %443 = vector.broadcast %cst_87 : f32 to vector<2x96xf32>
    %444 = arith.addf %443, %442 : vector<2x96xf32>
    %445 = arith.divf %443, %444 : vector<2x96xf32>
    %446 = vector.extract_strided_slice %439 {offsets = [0, 96], sizes = [2, 32], strides = [1, 1]} : vector<2x256xf32> to vector<2x32xf32>
    %447 = math.tanh %446 : vector<2x32xf32>
    %448 = vector.extract_strided_slice %445 {offsets = [0, 32], sizes = [2, 32], strides = [1, 1]} : vector<2x96xf32> to vector<2x32xf32>
    %449 = arith.mulf %448, %361 : vector<2x32xf32>
    %450 = vector.extract_strided_slice %445 {offsets = [0, 0], sizes = [2, 32], strides = [1, 1]} : vector<2x96xf32> to vector<2x32xf32>
    %451 = arith.mulf %450, %447 : vector<2x32xf32>
    %452 = arith.addf %449, %451 : vector<2x32xf32>
    %453 = vector.extract_strided_slice %445 {offsets = [0, 64], sizes = [2, 32], strides = [1, 1]} : vector<2x96xf32> to vector<2x32xf32>
    %454 = math.tanh %452 : vector<2x32xf32>
    %455 = arith.mulf %453, %454 : vector<2x32xf32>
    %456 = vector.extract_strided_slice %439 {offsets = [0, 128], sizes = [2, 64], strides = [1, 1]} : vector<2x256xf32> to vector<2x64xf32>
    %457 = arith.negf %456 : vector<2x64xf32>
    %458 = math.exp %457 : vector<2x64xf32>
    %cst_88 = arith.constant 1.000000e+00 : f32
    %459 = vector.broadcast %cst_88 : f32 to vector<2x64xf32>
    %460 = arith.addf %459, %458 : vector<2x64xf32>
    %461 = arith.divf %459, %460 : vector<2x64xf32>
    %462 = vector.extract_strided_slice %439 {offsets = [0, 192], sizes = [2, 32], strides = [1, 1]} : vector<2x256xf32> to vector<2x32xf32>
    %463 = vector.extract_strided_slice %461 {offsets = [0, 0], sizes = [2, 32], strides = [1, 1]} : vector<2x64xf32> to vector<2x32xf32>
    %464 = vector.extract_strided_slice %439 {offsets = [0, 224], sizes = [2, 32], strides = [1, 1]} : vector<2x256xf32> to vector<2x32xf32>
    %465 = arith.mulf %463, %464 : vector<2x32xf32>
    %466 = arith.addf %462, %465 : vector<2x32xf32>
    %467 = math.tanh %466 : vector<2x32xf32>
    %468 = vector.extract_strided_slice %461 {offsets = [0, 32], sizes = [2, 32], strides = [1, 1]} : vector<2x64xf32> to vector<2x32xf32>
    %cst_89 = arith.constant 1.000000e+00 : f32
    %469 = vector.broadcast %cst_89 : f32 to vector<2x32xf32>
    %470 = arith.subf %469, %468 : vector<2x32xf32>
    %471 = arith.mulf %470, %467 : vector<2x32xf32>
    %472 = vector.extract_strided_slice %461 {offsets = [0, 32], sizes = [2, 32], strides = [1, 1]} : vector<2x64xf32> to vector<2x32xf32>
    %473 = arith.mulf %472, %383 : vector<2x32xf32>
    %474 = arith.addf %471, %473 : vector<2x32xf32>
    %475 = tpu.concatenate %406, %433 in 1 : vector<2x32xf32>, vector<2x32xf32> -> vector<2x64xf32>
    %c0_90 = arith.constant 0 : index
    %c0_91 = arith.constant 0 : index
    %476 = vector.load %arg6[%c0_90, %c0_91] : memref<64x224xf32, #tpu.memory_space<vmem>>, vector<64x224xf32>
    %cst_92 = arith.constant dense<0.000000e+00> : vector<2x224xf32>
    %477 = tpu.matmul %475, %476, %cst_92 {dimension_numbers = #tpu.dot_dimension_numbers<[1], [0], [0], [1], [0, 0, 1, 1], [], []>} : vector<2x64xf32>, vector<64x224xf32>, vector<2x224xf32> -> vector<2x224xf32>
    %478 = vector.extract_strided_slice %9 {offsets = [5, 0, 0], sizes = [1, 2, 128], strides = [1, 1, 1]} : vector<8x2x128xf32> to vector<1x2x128xf32>
    %479 = vector.shape_cast %478 : vector<1x2x128xf32> to vector<2x128xf32>
    %480 = vector.extract_strided_slice %477 {offsets = [0, 0], sizes = [2, 128], strides = [1, 1]} : vector<2x224xf32> to vector<2x128xf32>
    %481 = arith.addf %479, %480 : vector<2x128xf32>
    %482 = vector.extract_strided_slice %481 {offsets = [0, 0], sizes = [2, 96], strides = [1, 1]} : vector<2x128xf32> to vector<2x96xf32>
    %483 = arith.negf %482 : vector<2x96xf32>
    %484 = math.exp %483 : vector<2x96xf32>
    %cst_93 = arith.constant 1.000000e+00 : f32
    %485 = vector.broadcast %cst_93 : f32 to vector<2x96xf32>
    %486 = arith.addf %485, %484 : vector<2x96xf32>
    %487 = arith.divf %485, %486 : vector<2x96xf32>
    %488 = vector.extract_strided_slice %481 {offsets = [0, 96], sizes = [2, 32], strides = [1, 1]} : vector<2x128xf32> to vector<2x32xf32>
    %489 = math.tanh %488 : vector<2x32xf32>
    %490 = vector.extract_strided_slice %487 {offsets = [0, 32], sizes = [2, 32], strides = [1, 1]} : vector<2x96xf32> to vector<2x32xf32>
    %491 = arith.mulf %490, %403 : vector<2x32xf32>
    %492 = vector.extract_strided_slice %487 {offsets = [0, 0], sizes = [2, 32], strides = [1, 1]} : vector<2x96xf32> to vector<2x32xf32>
    %493 = arith.mulf %492, %489 : vector<2x32xf32>
    %494 = arith.addf %491, %493 : vector<2x32xf32>
    %495 = vector.extract_strided_slice %487 {offsets = [0, 64], sizes = [2, 32], strides = [1, 1]} : vector<2x96xf32> to vector<2x32xf32>
    %496 = math.tanh %494 : vector<2x32xf32>
    %497 = arith.mulf %495, %496 : vector<2x32xf32>
    %498 = vector.extract_strided_slice %18 {offsets = [5, 0, 0], sizes = [1, 2, 96], strides = [1, 1, 1]} : vector<8x2x96xf32> to vector<1x2x96xf32>
    %499 = vector.shape_cast %498 : vector<1x2x96xf32> to vector<2x96xf32>
    %500 = vector.extract_strided_slice %477 {offsets = [0, 128], sizes = [2, 96], strides = [1, 1]} : vector<2x224xf32> to vector<2x96xf32>
    %c0_94 = arith.constant 0 : index
    %c0_95 = arith.constant 0 : index
    %501 = vector.load %arg5[%c0_94, %c0_95] : memref<1x96xf32, #tpu.memory_space<vmem>>, vector<1x96xf32>
    %502 = vector.broadcast %501 : vector<1x96xf32> to vector<2x96xf32>
    %503 = arith.addf %500, %502 : vector<2x96xf32>
    %504 = vector.extract_strided_slice %499 {offsets = [0, 0], sizes = [2, 64], strides = [1, 1]} : vector<2x96xf32> to vector<2x64xf32>
    %505 = vector.extract_strided_slice %503 {offsets = [0, 0], sizes = [2, 64], strides = [1, 1]} : vector<2x96xf32> to vector<2x64xf32>
    %506 = arith.addf %504, %505 : vector<2x64xf32>
    %507 = arith.negf %506 : vector<2x64xf32>
    %508 = math.exp %507 : vector<2x64xf32>
    %cst_96 = arith.constant 1.000000e+00 : f32
    %509 = vector.broadcast %cst_96 : f32 to vector<2x64xf32>
    %510 = arith.addf %509, %508 : vector<2x64xf32>
    %511 = arith.divf %509, %510 : vector<2x64xf32>
    %512 = vector.extract_strided_slice %499 {offsets = [0, 64], sizes = [2, 32], strides = [1, 1]} : vector<2x96xf32> to vector<2x32xf32>
    %513 = vector.extract_strided_slice %511 {offsets = [0, 0], sizes = [2, 32], strides = [1, 1]} : vector<2x64xf32> to vector<2x32xf32>
    %514 = vector.extract_strided_slice %503 {offsets = [0, 64], sizes = [2, 32], strides = [1, 1]} : vector<2x96xf32> to vector<2x32xf32>
    %515 = arith.mulf %513, %514 : vector<2x32xf32>
    %516 = arith.addf %512, %515 : vector<2x32xf32>
    %517 = math.tanh %516 : vector<2x32xf32>
    %518 = vector.extract_strided_slice %511 {offsets = [0, 32], sizes = [2, 32], strides = [1, 1]} : vector<2x64xf32> to vector<2x32xf32>
    %cst_97 = arith.constant 1.000000e+00 : f32
    %519 = vector.broadcast %cst_97 : f32 to vector<2x32xf32>
    %520 = arith.subf %519, %518 : vector<2x32xf32>
    %521 = arith.mulf %520, %517 : vector<2x32xf32>
    %522 = vector.extract_strided_slice %511 {offsets = [0, 32], sizes = [2, 32], strides = [1, 1]} : vector<2x64xf32> to vector<2x32xf32>
    %523 = arith.mulf %522, %433 : vector<2x32xf32>
    %524 = arith.addf %521, %523 : vector<2x32xf32>
    %525 = tpu.concatenate %497, %455, %524, %474 in 1 : vector<2x32xf32>, vector<2x32xf32>, vector<2x32xf32>, vector<2x32xf32> -> vector<2x128xf32>
    %c0_98 = arith.constant 0 : index
    %c0_99 = arith.constant 0 : index
    %526 = vector.load %arg7[%c0_98, %c0_99] : memref<128x256xf32, #tpu.memory_space<vmem>>, vector<128x256xf32>
    %cst_100 = arith.constant dense<0.000000e+00> : vector<2x256xf32>
    %527 = tpu.matmul %525, %526, %cst_100 {dimension_numbers = #tpu.dot_dimension_numbers<[1], [0], [0], [1], [0, 0, 1, 1], [], []>} : vector<2x128xf32>, vector<128x256xf32>, vector<2x256xf32> -> vector<2x256xf32>
    %c0_101 = arith.constant 0 : index
    %c0_102 = arith.constant 0 : index
    %528 = vector.load %arg8[%c0_101, %c0_102] : memref<1x256xf32, #tpu.memory_space<vmem>>, vector<1x256xf32>
    %529 = vector.broadcast %528 : vector<1x256xf32> to vector<2x256xf32>
    %530 = arith.addf %527, %529 : vector<2x256xf32>
    %531 = vector.extract_strided_slice %530 {offsets = [0, 0], sizes = [2, 96], strides = [1, 1]} : vector<2x256xf32> to vector<2x96xf32>
    %532 = arith.negf %531 : vector<2x96xf32>
    %533 = math.exp %532 : vector<2x96xf32>
    %cst_103 = arith.constant 1.000000e+00 : f32
    %534 = vector.broadcast %cst_103 : f32 to vector<2x96xf32>
    %535 = arith.addf %534, %533 : vector<2x96xf32>
    %536 = arith.divf %534, %535 : vector<2x96xf32>
    %537 = vector.extract_strided_slice %530 {offsets = [0, 96], sizes = [2, 32], strides = [1, 1]} : vector<2x256xf32> to vector<2x32xf32>
    %538 = math.tanh %537 : vector<2x32xf32>
    %539 = vector.extract_strided_slice %536 {offsets = [0, 32], sizes = [2, 32], strides = [1, 1]} : vector<2x96xf32> to vector<2x32xf32>
    %540 = arith.mulf %539, %452 : vector<2x32xf32>
    %541 = vector.extract_strided_slice %536 {offsets = [0, 0], sizes = [2, 32], strides = [1, 1]} : vector<2x96xf32> to vector<2x32xf32>
    %542 = arith.mulf %541, %538 : vector<2x32xf32>
    %543 = arith.addf %540, %542 : vector<2x32xf32>
    %544 = vector.extract_strided_slice %536 {offsets = [0, 64], sizes = [2, 32], strides = [1, 1]} : vector<2x96xf32> to vector<2x32xf32>
    %545 = math.tanh %543 : vector<2x32xf32>
    %546 = arith.mulf %544, %545 : vector<2x32xf32>
    %547 = vector.extract_strided_slice %530 {offsets = [0, 128], sizes = [2, 64], strides = [1, 1]} : vector<2x256xf32> to vector<2x64xf32>
    %548 = arith.negf %547 : vector<2x64xf32>
    %549 = math.exp %548 : vector<2x64xf32>
    %cst_104 = arith.constant 1.000000e+00 : f32
    %550 = vector.broadcast %cst_104 : f32 to vector<2x64xf32>
    %551 = arith.addf %550, %549 : vector<2x64xf32>
    %552 = arith.divf %550, %551 : vector<2x64xf32>
    %553 = vector.extract_strided_slice %530 {offsets = [0, 192], sizes = [2, 32], strides = [1, 1]} : vector<2x256xf32> to vector<2x32xf32>
    %554 = vector.extract_strided_slice %552 {offsets = [0, 0], sizes = [2, 32], strides = [1, 1]} : vector<2x64xf32> to vector<2x32xf32>
    %555 = vector.extract_strided_slice %530 {offsets = [0, 224], sizes = [2, 32], strides = [1, 1]} : vector<2x256xf32> to vector<2x32xf32>
    %556 = arith.mulf %554, %555 : vector<2x32xf32>
    %557 = arith.addf %553, %556 : vector<2x32xf32>
    %558 = math.tanh %557 : vector<2x32xf32>
    %559 = vector.extract_strided_slice %552 {offsets = [0, 32], sizes = [2, 32], strides = [1, 1]} : vector<2x64xf32> to vector<2x32xf32>
    %cst_105 = arith.constant 1.000000e+00 : f32
    %560 = vector.broadcast %cst_105 : f32 to vector<2x32xf32>
    %561 = arith.subf %560, %559 : vector<2x32xf32>
    %562 = arith.mulf %561, %558 : vector<2x32xf32>
    %563 = vector.extract_strided_slice %552 {offsets = [0, 32], sizes = [2, 32], strides = [1, 1]} : vector<2x64xf32> to vector<2x32xf32>
    %564 = arith.mulf %563, %474 : vector<2x32xf32>
    %565 = arith.addf %562, %564 : vector<2x32xf32>
    %566 = tpu.concatenate %497, %524 in 1 : vector<2x32xf32>, vector<2x32xf32> -> vector<2x64xf32>
    %c0_106 = arith.constant 0 : index
    %c0_107 = arith.constant 0 : index
    %567 = vector.load %arg6[%c0_106, %c0_107] : memref<64x224xf32, #tpu.memory_space<vmem>>, vector<64x224xf32>
    %cst_108 = arith.constant dense<0.000000e+00> : vector<2x224xf32>
    %568 = tpu.matmul %566, %567, %cst_108 {dimension_numbers = #tpu.dot_dimension_numbers<[1], [0], [0], [1], [0, 0, 1, 1], [], []>} : vector<2x64xf32>, vector<64x224xf32>, vector<2x224xf32> -> vector<2x224xf32>
    %569 = vector.extract_strided_slice %9 {offsets = [6, 0, 0], sizes = [1, 2, 128], strides = [1, 1, 1]} : vector<8x2x128xf32> to vector<1x2x128xf32>
    %570 = vector.shape_cast %569 : vector<1x2x128xf32> to vector<2x128xf32>
    %571 = vector.extract_strided_slice %568 {offsets = [0, 0], sizes = [2, 128], strides = [1, 1]} : vector<2x224xf32> to vector<2x128xf32>
    %572 = arith.addf %570, %571 : vector<2x128xf32>
    %573 = vector.extract_strided_slice %572 {offsets = [0, 0], sizes = [2, 96], strides = [1, 1]} : vector<2x128xf32> to vector<2x96xf32>
    %574 = arith.negf %573 : vector<2x96xf32>
    %575 = math.exp %574 : vector<2x96xf32>
    %cst_109 = arith.constant 1.000000e+00 : f32
    %576 = vector.broadcast %cst_109 : f32 to vector<2x96xf32>
    %577 = arith.addf %576, %575 : vector<2x96xf32>
    %578 = arith.divf %576, %577 : vector<2x96xf32>
    %579 = vector.extract_strided_slice %572 {offsets = [0, 96], sizes = [2, 32], strides = [1, 1]} : vector<2x128xf32> to vector<2x32xf32>
    %580 = math.tanh %579 : vector<2x32xf32>
    %581 = vector.extract_strided_slice %578 {offsets = [0, 32], sizes = [2, 32], strides = [1, 1]} : vector<2x96xf32> to vector<2x32xf32>
    %582 = arith.mulf %581, %494 : vector<2x32xf32>
    %583 = vector.extract_strided_slice %578 {offsets = [0, 0], sizes = [2, 32], strides = [1, 1]} : vector<2x96xf32> to vector<2x32xf32>
    %584 = arith.mulf %583, %580 : vector<2x32xf32>
    %585 = arith.addf %582, %584 : vector<2x32xf32>
    %586 = vector.extract_strided_slice %578 {offsets = [0, 64], sizes = [2, 32], strides = [1, 1]} : vector<2x96xf32> to vector<2x32xf32>
    %587 = math.tanh %585 : vector<2x32xf32>
    %588 = arith.mulf %586, %587 : vector<2x32xf32>
    %589 = vector.extract_strided_slice %18 {offsets = [6, 0, 0], sizes = [1, 2, 96], strides = [1, 1, 1]} : vector<8x2x96xf32> to vector<1x2x96xf32>
    %590 = vector.shape_cast %589 : vector<1x2x96xf32> to vector<2x96xf32>
    %591 = vector.extract_strided_slice %568 {offsets = [0, 128], sizes = [2, 96], strides = [1, 1]} : vector<2x224xf32> to vector<2x96xf32>
    %c0_110 = arith.constant 0 : index
    %c0_111 = arith.constant 0 : index
    %592 = vector.load %arg5[%c0_110, %c0_111] : memref<1x96xf32, #tpu.memory_space<vmem>>, vector<1x96xf32>
    %593 = vector.broadcast %592 : vector<1x96xf32> to vector<2x96xf32>
    %594 = arith.addf %591, %593 : vector<2x96xf32>
    %595 = vector.extract_strided_slice %590 {offsets = [0, 0], sizes = [2, 64], strides = [1, 1]} : vector<2x96xf32> to vector<2x64xf32>
    %596 = vector.extract_strided_slice %594 {offsets = [0, 0], sizes = [2, 64], strides = [1, 1]} : vector<2x96xf32> to vector<2x64xf32>
    %597 = arith.addf %595, %596 : vector<2x64xf32>
    %598 = arith.negf %597 : vector<2x64xf32>
    %599 = math.exp %598 : vector<2x64xf32>
    %cst_112 = arith.constant 1.000000e+00 : f32
    %600 = vector.broadcast %cst_112 : f32 to vector<2x64xf32>
    %601 = arith.addf %600, %599 : vector<2x64xf32>
    %602 = arith.divf %600, %601 : vector<2x64xf32>
    %603 = vector.extract_strided_slice %590 {offsets = [0, 64], sizes = [2, 32], strides = [1, 1]} : vector<2x96xf32> to vector<2x32xf32>
    %604 = vector.extract_strided_slice %602 {offsets = [0, 0], sizes = [2, 32], strides = [1, 1]} : vector<2x64xf32> to vector<2x32xf32>
    %605 = vector.extract_strided_slice %594 {offsets = [0, 64], sizes = [2, 32], strides = [1, 1]} : vector<2x96xf32> to vector<2x32xf32>
    %606 = arith.mulf %604, %605 : vector<2x32xf32>
    %607 = arith.addf %603, %606 : vector<2x32xf32>
    %608 = math.tanh %607 : vector<2x32xf32>
    %609 = vector.extract_strided_slice %602 {offsets = [0, 32], sizes = [2, 32], strides = [1, 1]} : vector<2x64xf32> to vector<2x32xf32>
    %cst_113 = arith.constant 1.000000e+00 : f32
    %610 = vector.broadcast %cst_113 : f32 to vector<2x32xf32>
    %611 = arith.subf %610, %609 : vector<2x32xf32>
    %612 = arith.mulf %611, %608 : vector<2x32xf32>
    %613 = vector.extract_strided_slice %602 {offsets = [0, 32], sizes = [2, 32], strides = [1, 1]} : vector<2x64xf32> to vector<2x32xf32>
    %614 = arith.mulf %613, %524 : vector<2x32xf32>
    %615 = arith.addf %612, %614 : vector<2x32xf32>
    %616 = tpu.concatenate %588, %546, %615, %565 in 1 : vector<2x32xf32>, vector<2x32xf32>, vector<2x32xf32>, vector<2x32xf32> -> vector<2x128xf32>
    %c0_114 = arith.constant 0 : index
    %c0_115 = arith.constant 0 : index
    %617 = vector.load %arg7[%c0_114, %c0_115] : memref<128x256xf32, #tpu.memory_space<vmem>>, vector<128x256xf32>
    %cst_116 = arith.constant dense<0.000000e+00> : vector<2x256xf32>
    %618 = tpu.matmul %616, %617, %cst_116 {dimension_numbers = #tpu.dot_dimension_numbers<[1], [0], [0], [1], [0, 0, 1, 1], [], []>} : vector<2x128xf32>, vector<128x256xf32>, vector<2x256xf32> -> vector<2x256xf32>
    %c0_117 = arith.constant 0 : index
    %c0_118 = arith.constant 0 : index
    %619 = vector.load %arg8[%c0_117, %c0_118] : memref<1x256xf32, #tpu.memory_space<vmem>>, vector<1x256xf32>
    %620 = vector.broadcast %619 : vector<1x256xf32> to vector<2x256xf32>
    %621 = arith.addf %618, %620 : vector<2x256xf32>
    %622 = vector.extract_strided_slice %621 {offsets = [0, 0], sizes = [2, 96], strides = [1, 1]} : vector<2x256xf32> to vector<2x96xf32>
    %623 = arith.negf %622 : vector<2x96xf32>
    %624 = math.exp %623 : vector<2x96xf32>
    %cst_119 = arith.constant 1.000000e+00 : f32
    %625 = vector.broadcast %cst_119 : f32 to vector<2x96xf32>
    %626 = arith.addf %625, %624 : vector<2x96xf32>
    %627 = arith.divf %625, %626 : vector<2x96xf32>
    %628 = vector.extract_strided_slice %621 {offsets = [0, 96], sizes = [2, 32], strides = [1, 1]} : vector<2x256xf32> to vector<2x32xf32>
    %629 = math.tanh %628 : vector<2x32xf32>
    %630 = vector.extract_strided_slice %627 {offsets = [0, 32], sizes = [2, 32], strides = [1, 1]} : vector<2x96xf32> to vector<2x32xf32>
    %631 = arith.mulf %630, %543 : vector<2x32xf32>
    %632 = vector.extract_strided_slice %627 {offsets = [0, 0], sizes = [2, 32], strides = [1, 1]} : vector<2x96xf32> to vector<2x32xf32>
    %633 = arith.mulf %632, %629 : vector<2x32xf32>
    %634 = arith.addf %631, %633 : vector<2x32xf32>
    %635 = vector.extract_strided_slice %627 {offsets = [0, 64], sizes = [2, 32], strides = [1, 1]} : vector<2x96xf32> to vector<2x32xf32>
    %636 = math.tanh %634 : vector<2x32xf32>
    %637 = arith.mulf %635, %636 : vector<2x32xf32>
    %638 = vector.extract_strided_slice %621 {offsets = [0, 128], sizes = [2, 64], strides = [1, 1]} : vector<2x256xf32> to vector<2x64xf32>
    %639 = arith.negf %638 : vector<2x64xf32>
    %640 = math.exp %639 : vector<2x64xf32>
    %cst_120 = arith.constant 1.000000e+00 : f32
    %641 = vector.broadcast %cst_120 : f32 to vector<2x64xf32>
    %642 = arith.addf %641, %640 : vector<2x64xf32>
    %643 = arith.divf %641, %642 : vector<2x64xf32>
    %644 = vector.extract_strided_slice %621 {offsets = [0, 192], sizes = [2, 32], strides = [1, 1]} : vector<2x256xf32> to vector<2x32xf32>
    %645 = vector.extract_strided_slice %643 {offsets = [0, 0], sizes = [2, 32], strides = [1, 1]} : vector<2x64xf32> to vector<2x32xf32>
    %646 = vector.extract_strided_slice %621 {offsets = [0, 224], sizes = [2, 32], strides = [1, 1]} : vector<2x256xf32> to vector<2x32xf32>
    %647 = arith.mulf %645, %646 : vector<2x32xf32>
    %648 = arith.addf %644, %647 : vector<2x32xf32>
    %649 = math.tanh %648 : vector<2x32xf32>
    %650 = vector.extract_strided_slice %643 {offsets = [0, 32], sizes = [2, 32], strides = [1, 1]} : vector<2x64xf32> to vector<2x32xf32>
    %cst_121 = arith.constant 1.000000e+00 : f32
    %651 = vector.broadcast %cst_121 : f32 to vector<2x32xf32>
    %652 = arith.subf %651, %650 : vector<2x32xf32>
    %653 = arith.mulf %652, %649 : vector<2x32xf32>
    %654 = vector.extract_strided_slice %643 {offsets = [0, 32], sizes = [2, 32], strides = [1, 1]} : vector<2x64xf32> to vector<2x32xf32>
    %655 = arith.mulf %654, %565 : vector<2x32xf32>
    %656 = arith.addf %653, %655 : vector<2x32xf32>
    %657 = tpu.concatenate %588, %615 in 1 : vector<2x32xf32>, vector<2x32xf32> -> vector<2x64xf32>
    %c0_122 = arith.constant 0 : index
    %c0_123 = arith.constant 0 : index
    %658 = vector.load %arg6[%c0_122, %c0_123] : memref<64x224xf32, #tpu.memory_space<vmem>>, vector<64x224xf32>
    %cst_124 = arith.constant dense<0.000000e+00> : vector<2x224xf32>
    %659 = tpu.matmul %657, %658, %cst_124 {dimension_numbers = #tpu.dot_dimension_numbers<[1], [0], [0], [1], [0, 0, 1, 1], [], []>} : vector<2x64xf32>, vector<64x224xf32>, vector<2x224xf32> -> vector<2x224xf32>
    %660 = vector.extract_strided_slice %9 {offsets = [7, 0, 0], sizes = [1, 2, 128], strides = [1, 1, 1]} : vector<8x2x128xf32> to vector<1x2x128xf32>
    %661 = vector.shape_cast %660 : vector<1x2x128xf32> to vector<2x128xf32>
    %662 = vector.extract_strided_slice %659 {offsets = [0, 0], sizes = [2, 128], strides = [1, 1]} : vector<2x224xf32> to vector<2x128xf32>
    %663 = arith.addf %661, %662 : vector<2x128xf32>
    %664 = vector.extract_strided_slice %663 {offsets = [0, 0], sizes = [2, 96], strides = [1, 1]} : vector<2x128xf32> to vector<2x96xf32>
    %665 = arith.negf %664 : vector<2x96xf32>
    %666 = math.exp %665 : vector<2x96xf32>
    %cst_125 = arith.constant 1.000000e+00 : f32
    %667 = vector.broadcast %cst_125 : f32 to vector<2x96xf32>
    %668 = arith.addf %667, %666 : vector<2x96xf32>
    %669 = arith.divf %667, %668 : vector<2x96xf32>
    %670 = vector.extract_strided_slice %663 {offsets = [0, 96], sizes = [2, 32], strides = [1, 1]} : vector<2x128xf32> to vector<2x32xf32>
    %671 = math.tanh %670 : vector<2x32xf32>
    %672 = vector.extract_strided_slice %669 {offsets = [0, 32], sizes = [2, 32], strides = [1, 1]} : vector<2x96xf32> to vector<2x32xf32>
    %673 = arith.mulf %672, %585 : vector<2x32xf32>
    %674 = vector.extract_strided_slice %669 {offsets = [0, 0], sizes = [2, 32], strides = [1, 1]} : vector<2x96xf32> to vector<2x32xf32>
    %675 = arith.mulf %674, %671 : vector<2x32xf32>
    %676 = arith.addf %673, %675 : vector<2x32xf32>
    %677 = vector.extract_strided_slice %669 {offsets = [0, 64], sizes = [2, 32], strides = [1, 1]} : vector<2x96xf32> to vector<2x32xf32>
    %678 = math.tanh %676 : vector<2x32xf32>
    %679 = arith.mulf %677, %678 : vector<2x32xf32>
    %680 = vector.extract_strided_slice %18 {offsets = [7, 0, 0], sizes = [1, 2, 96], strides = [1, 1, 1]} : vector<8x2x96xf32> to vector<1x2x96xf32>
    %681 = vector.shape_cast %680 : vector<1x2x96xf32> to vector<2x96xf32>
    %682 = vector.extract_strided_slice %659 {offsets = [0, 128], sizes = [2, 96], strides = [1, 1]} : vector<2x224xf32> to vector<2x96xf32>
    %c0_126 = arith.constant 0 : index
    %c0_127 = arith.constant 0 : index
    %683 = vector.load %arg5[%c0_126, %c0_127] : memref<1x96xf32, #tpu.memory_space<vmem>>, vector<1x96xf32>
    %684 = vector.broadcast %683 : vector<1x96xf32> to vector<2x96xf32>
    %685 = arith.addf %682, %684 : vector<2x96xf32>
    %686 = vector.extract_strided_slice %681 {offsets = [0, 0], sizes = [2, 64], strides = [1, 1]} : vector<2x96xf32> to vector<2x64xf32>
    %687 = vector.extract_strided_slice %685 {offsets = [0, 0], sizes = [2, 64], strides = [1, 1]} : vector<2x96xf32> to vector<2x64xf32>
    %688 = arith.addf %686, %687 : vector<2x64xf32>
    %689 = arith.negf %688 : vector<2x64xf32>
    %690 = math.exp %689 : vector<2x64xf32>
    %cst_128 = arith.constant 1.000000e+00 : f32
    %691 = vector.broadcast %cst_128 : f32 to vector<2x64xf32>
    %692 = arith.addf %691, %690 : vector<2x64xf32>
    %693 = arith.divf %691, %692 : vector<2x64xf32>
    %694 = vector.extract_strided_slice %681 {offsets = [0, 64], sizes = [2, 32], strides = [1, 1]} : vector<2x96xf32> to vector<2x32xf32>
    %695 = vector.extract_strided_slice %693 {offsets = [0, 0], sizes = [2, 32], strides = [1, 1]} : vector<2x64xf32> to vector<2x32xf32>
    %696 = vector.extract_strided_slice %685 {offsets = [0, 64], sizes = [2, 32], strides = [1, 1]} : vector<2x96xf32> to vector<2x32xf32>
    %697 = arith.mulf %695, %696 : vector<2x32xf32>
    %698 = arith.addf %694, %697 : vector<2x32xf32>
    %699 = math.tanh %698 : vector<2x32xf32>
    %700 = vector.extract_strided_slice %693 {offsets = [0, 32], sizes = [2, 32], strides = [1, 1]} : vector<2x64xf32> to vector<2x32xf32>
    %cst_129 = arith.constant 1.000000e+00 : f32
    %701 = vector.broadcast %cst_129 : f32 to vector<2x32xf32>
    %702 = arith.subf %701, %700 : vector<2x32xf32>
    %703 = arith.mulf %702, %699 : vector<2x32xf32>
    %704 = vector.extract_strided_slice %693 {offsets = [0, 32], sizes = [2, 32], strides = [1, 1]} : vector<2x64xf32> to vector<2x32xf32>
    %705 = arith.mulf %704, %615 : vector<2x32xf32>
    %706 = arith.addf %703, %705 : vector<2x32xf32>
    %707 = tpu.concatenate %679, %637, %706, %656 in 1 : vector<2x32xf32>, vector<2x32xf32>, vector<2x32xf32>, vector<2x32xf32> -> vector<2x128xf32>
    %c0_130 = arith.constant 0 : index
    %c0_131 = arith.constant 0 : index
    %708 = vector.load %arg7[%c0_130, %c0_131] : memref<128x256xf32, #tpu.memory_space<vmem>>, vector<128x256xf32>
    %cst_132 = arith.constant dense<0.000000e+00> : vector<2x256xf32>
    %709 = tpu.matmul %707, %708, %cst_132 {dimension_numbers = #tpu.dot_dimension_numbers<[1], [0], [0], [1], [0, 0, 1, 1], [], []>} : vector<2x128xf32>, vector<128x256xf32>, vector<2x256xf32> -> vector<2x256xf32>
    %c0_133 = arith.constant 0 : index
    %c0_134 = arith.constant 0 : index
    %710 = vector.load %arg8[%c0_133, %c0_134] : memref<1x256xf32, #tpu.memory_space<vmem>>, vector<1x256xf32>
    %711 = vector.broadcast %710 : vector<1x256xf32> to vector<2x256xf32>
    %712 = arith.addf %709, %711 : vector<2x256xf32>
    %713 = vector.extract_strided_slice %712 {offsets = [0, 0], sizes = [2, 96], strides = [1, 1]} : vector<2x256xf32> to vector<2x96xf32>
    %714 = arith.negf %713 : vector<2x96xf32>
    %715 = math.exp %714 : vector<2x96xf32>
    %cst_135 = arith.constant 1.000000e+00 : f32
    %716 = vector.broadcast %cst_135 : f32 to vector<2x96xf32>
    %717 = arith.addf %716, %715 : vector<2x96xf32>
    %718 = arith.divf %716, %717 : vector<2x96xf32>
    %719 = vector.extract_strided_slice %712 {offsets = [0, 96], sizes = [2, 32], strides = [1, 1]} : vector<2x256xf32> to vector<2x32xf32>
    %720 = math.tanh %719 : vector<2x32xf32>
    %721 = vector.extract_strided_slice %718 {offsets = [0, 32], sizes = [2, 32], strides = [1, 1]} : vector<2x96xf32> to vector<2x32xf32>
    %722 = arith.mulf %721, %634 : vector<2x32xf32>
    %723 = vector.extract_strided_slice %718 {offsets = [0, 0], sizes = [2, 32], strides = [1, 1]} : vector<2x96xf32> to vector<2x32xf32>
    %724 = arith.mulf %723, %720 : vector<2x32xf32>
    %725 = arith.addf %722, %724 : vector<2x32xf32>
    %726 = vector.extract_strided_slice %718 {offsets = [0, 64], sizes = [2, 32], strides = [1, 1]} : vector<2x96xf32> to vector<2x32xf32>
    %727 = math.tanh %725 : vector<2x32xf32>
    %728 = arith.mulf %726, %727 : vector<2x32xf32>
    %729 = vector.extract_strided_slice %712 {offsets = [0, 128], sizes = [2, 64], strides = [1, 1]} : vector<2x256xf32> to vector<2x64xf32>
    %730 = arith.negf %729 : vector<2x64xf32>
    %731 = math.exp %730 : vector<2x64xf32>
    %cst_136 = arith.constant 1.000000e+00 : f32
    %732 = vector.broadcast %cst_136 : f32 to vector<2x64xf32>
    %733 = arith.addf %732, %731 : vector<2x64xf32>
    %734 = arith.divf %732, %733 : vector<2x64xf32>
    %735 = vector.extract_strided_slice %712 {offsets = [0, 192], sizes = [2, 32], strides = [1, 1]} : vector<2x256xf32> to vector<2x32xf32>
    %736 = vector.extract_strided_slice %734 {offsets = [0, 0], sizes = [2, 32], strides = [1, 1]} : vector<2x64xf32> to vector<2x32xf32>
    %737 = vector.extract_strided_slice %712 {offsets = [0, 224], sizes = [2, 32], strides = [1, 1]} : vector<2x256xf32> to vector<2x32xf32>
    %738 = arith.mulf %736, %737 : vector<2x32xf32>
    %739 = arith.addf %735, %738 : vector<2x32xf32>
    %740 = math.tanh %739 : vector<2x32xf32>
    %741 = vector.extract_strided_slice %734 {offsets = [0, 32], sizes = [2, 32], strides = [1, 1]} : vector<2x64xf32> to vector<2x32xf32>
    %cst_137 = arith.constant 1.000000e+00 : f32
    %742 = vector.broadcast %cst_137 : f32 to vector<2x32xf32>
    %743 = arith.subf %742, %741 : vector<2x32xf32>
    %744 = arith.mulf %743, %740 : vector<2x32xf32>
    %745 = vector.extract_strided_slice %734 {offsets = [0, 32], sizes = [2, 32], strides = [1, 1]} : vector<2x64xf32> to vector<2x32xf32>
    %746 = arith.mulf %745, %656 : vector<2x32xf32>
    %747 = arith.addf %744, %746 : vector<2x32xf32>
    %748 = tpu.concatenate %728, %747 in 1 : vector<2x32xf32>, vector<2x32xf32> -> vector<2x64xf32>
    %c0_138 = arith.constant 0 : index
    %c0_139 = arith.constant 0 : index
    %749 = vector.load %arg9[%c0_138, %c0_139] : memref<64x1xf32, #tpu.memory_space<vmem>>, vector<64x1xf32>
    %cst_140 = arith.constant dense<0.000000e+00> : vector<2x1xf32>
    %750 = tpu.matmul %748, %749, %cst_140 {dimension_numbers = #tpu.dot_dimension_numbers<[1], [0], [0], [1], [0, 0, 1, 1], [], []>} : vector<2x64xf32>, vector<64x1xf32>, vector<2x1xf32> -> vector<2x1xf32>
    %c0_141 = arith.constant 0 : index
    %c0_142 = arith.constant 0 : index
    %751 = vector.load %arg10[%c0_141, %c0_142] : memref<1x1xf32, #tpu.memory_space<vmem>>, vector<1x1xf32>
    %752 = vector.broadcast %751 : vector<1x1xf32> to vector<2x1xf32>
    %753 = arith.addf %750, %752 : vector<2x1xf32>
    %c0_143 = arith.constant 0 : index
    %c0_144 = arith.constant 0 : index
    %754 = vector.load %arg11[%c0_143, %c0_144] : memref<2x1xf32, #tpu.memory_space<vmem>>, vector<2x1xf32>
    tpu.vector_store %arg11[%c0_143, %c0_144], %753 {strides = array<i32>} : memref<2x1xf32, #tpu.memory_space<vmem>>, vector<2x1xf32>,
    return
  }
}

</mosaic_0001>

<llo_original>
// kernel: tpu_custom_call.1
$region0: #{tpu_custom_call.1}
  #allocation0 [shape = 'u32[]', space=smem, size = 0x4, offset = 0x4, fixed_abs, tag = 'smem constant byte address 0x4 - core index']
  #allocation1 [shape = 'u32[144,128]{1,0:T(1,128)}', space=vmem, size = 0x12000, scoped, tag = 'internal scratch']
  #allocation2 [shape = 'f32[1,1]{1,0:T(1,128)S(1)}', space=vmem, size = 0x200, scoped, tag = 'scoped memory for tpu_custom_call.1']
  %s0 = inlined_call_operand.vmem [shape: f32[8,2,1], index: 0, kind: input, shape index: {}]
  %s1 = inlined_call_operand.vmem [shape: f32[1,128], index: 1, kind: input, shape index: {}]
  %s2 = inlined_call_operand.vmem [shape: f32[1,128], index: 2, kind: input, shape index: {}]
  %s3 = inlined_call_operand.vmem [shape: f32[1,96], index: 3, kind: input, shape index: {}]
  %s4 = inlined_call_operand.vmem [shape: f32[1,96], index: 4, kind: input, shape index: {}]
  %s5 = inlined_call_operand.vmem [shape: f32[1,96], index: 5, kind: input, shape index: {}]
  %s6 = inlined_call_operand.hbm [shape: f32[64,224], index: 6, kind: input, shape index: {}]
  %s7 = inlined_call_operand.hbm [shape: f32[128,256], index: 7, kind: input, shape index: {}]
  %s8 = inlined_call_operand.vmem [shape: f32[1,256], index: 8, kind: input, shape index: {}]
  %s9 = inlined_call_operand.vmem [shape: f32[64,1], index: 9, kind: input, shape index: {}]
  %s10 = inlined_call_operand.<no memory space> [shape: f32[1,1], index: 10, kind: input, shape index: {}]
  %s11 = inlined_call_operand.vmem [shape: f32[2,1], index: 11, kind: output, shape index: {}]
  %s12 = sld [smem:[#allocation0]]
  $region62: #{tpu_custom_call.1} parent=0
    _
  %s14 = ssub.s32 1, %s12
  %s15 = scalar_select 0, %s14, %s12
  %v16 = vstv %s10
  %17 = vst [vmem:[#allocation2] sm:$0x1] %v16
  $region1: #{tpu_custom_call.1} parent=0
    #allocation3 [shape = 'u8[65536]{0}', space=vmem, size = 0x10000, scoped, tag = 'input window, operand 6, single buffered']
    #allocation4 [shape = 's32[1]{0}', space=sflag, size = 0x4, scoped, tag = 'scoped memory for tpu_custom_call.1']
    #allocation5 [shape = 'u8[131072]{0}', space=vmem, size = 0x20000, scoped, tag = 'input window, operand 7, single buffered']
    #allocation6 [shape = 's32[1]{0}', space=sflag, size = 0x4, scoped, tag = 'scoped memory for tpu_custom_call.1']
    %18 = vsyncpa [#allocation4], 0
    %19 = vsyncpa [#allocation6], 0
    // Predicated region
    $region2: #{tpu_custom_call.1} parent=1 // pred_check
      _
    $region3: #{tpu_custom_call.1} parent=1 // pred_check_branch
      %21 = sbr.rel (0) target = $region5
    $region4: #{tpu_custom_call.1} parent=1 // pred_region
      _
    $region5: #{tpu_custom_call.1} parent=1 // pred_fallthru
      _
    // Predicated region
    $region6: #{tpu_custom_call.1} parent=1 // pred_check
      _
    $region7: #{tpu_custom_call.1} parent=1 // pred_check_branch
      %23 = sbr.rel (0) target = $region9
    $region8: #{tpu_custom_call.1} parent=1 // pred_region
      _
    $region9: #{tpu_custom_call.1} parent=1 // pred_fallthru
      _
    // Predicated region
    $region10: #{tpu_custom_call.1} parent=1 // pred_check
      _
    $region11: #{tpu_custom_call.1} parent=1 // pred_check_branch
      %25 = sbr.rel (0) target = $region13
    $region12: #{tpu_custom_call.1} parent=1 // pred_region
      _
    $region13: #{tpu_custom_call.1} parent=1 // pred_fallthru
      _
    // Predicated region
    $region14: #{tpu_custom_call.1} parent=1 // pred_check
      _
    $region15: #{tpu_custom_call.1} parent=1 // pred_check_branch
      %27 = sbr.rel (0) target = $region17
    $region16: #{tpu_custom_call.1} parent=1 // pred_region
      _
    $region17: #{tpu_custom_call.1} parent=1 // pred_fallthru
      _
    // Predicated region
    $region18: #{tpu_custom_call.1} parent=1 // pred_check
      _
    $region19: #{tpu_custom_call.1} parent=1 // pred_check_branch
      %29 = sbr.rel (0) target = $region21
    $region20: #{tpu_custom_call.1} parent=1 // pred_region
      _
    $region21: #{tpu_custom_call.1} parent=1 // pred_fallthru
      _
    // Predicated region
    $region22: #{tpu_custom_call.1} parent=1 // pred_check
      _
    $region23: #{tpu_custom_call.1} parent=1 // pred_check_branch
      %31 = sbr.rel (0) target = $region25
    $region24: #{tpu_custom_call.1} parent=1 // pred_region
      _
    $region25: #{tpu_custom_call.1} parent=1 // pred_fallthru
      _
    // Predicated region
    $region26: #{tpu_custom_call.1} parent=1 // pred_check
      _
    $region27: #{tpu_custom_call.1} parent=1 // pred_check_branch
      %33 = sbr.rel (0) target = $region29
    $region28: #{tpu_custom_call.1} parent=1 // pred_region
      %s35 = ssub.s32 2048, 2048
      %36 = vsyncadd [#allocation4], %s35
      %s37 = sshll.u32 [#allocation3], 4
      %s38 = int_to_ptr.vmem [resolvable:$true] %s37
      %43 = dma.hbm_to_vmem [thread:$0]  %s6, 2048, %s38, [#allocation4], 256, 256, 16
    $region29: #{tpu_custom_call.1} parent=1 // pred_fallthru
      _
    // Predicated region
    $region30: #{tpu_custom_call.1} parent=1 // pred_check
      _
    $region31: #{tpu_custom_call.1} parent=1 // pred_check_branch
      %45 = sbr.rel (0) target = $region33
    $region32: #{tpu_custom_call.1} parent=1 // pred_region
      %s47 = ssub.s32 4096, 4096
      %48 = vsyncadd [#allocation6], %s47
      %s49 = sshll.u32 [#allocation5], 4
      %s50 = int_to_ptr.vmem [resolvable:$true] %s49
      %55 = dma.hbm_to_vmem [thread:$0]  %s7, 4096, %s50, [#allocation6], 256, 256, 16
    $region33: #{tpu_custom_call.1} parent=1 // pred_fallthru
      _
    // Predicated region
    $region34: #{tpu_custom_call.1} parent=1 // pred_check
      _
    $region35: #{tpu_custom_call.1} parent=1 // pred_check_branch
      %57 = sbr.rel (0) target = $region37
    $region36: #{tpu_custom_call.1} parent=1 // pred_region
      _
    $region37: #{tpu_custom_call.1} parent=1 // pred_fallthru
      _
    // Predicated region
    $region38: #{tpu_custom_call.1} parent=1 // pred_check
      _
    $region39: #{tpu_custom_call.1} parent=1 // pred_check_branch
      %59 = sbr.rel (0) target = $region41
    $region40: #{tpu_custom_call.1} parent=1 // pred_region
      _
    $region41: #{tpu_custom_call.1} parent=1 // pred_fallthru
      _
    // Predicated region
    $region42: #{tpu_custom_call.1} parent=1 // pred_check
      _
    $region43: #{tpu_custom_call.1} parent=1 // pred_check_branch
      %61 = sbr.rel (0) target = $region45
    $region44: #{tpu_custom_call.1} parent=1 // pred_region
      _
    $region45: #{tpu_custom_call.1} parent=1 // pred_fallthru
      _
    // Predicated region
    $region46: #{tpu_custom_call.1} parent=1 // pred_check
      _
    $region47: #{tpu_custom_call.1} parent=1 // pred_check_branch
      %63 = sbr.rel (0) target = $region49
    $region48: #{tpu_custom_call.1} parent=1 // pred_region
      %64 = dma.done [#allocation4], 2048
    $region49: #{tpu_custom_call.1} parent=1 // pred_fallthru
      _
    // Predicated region
    $region50: #{tpu_custom_call.1} parent=1 // pred_check
      _
    $region51: #{tpu_custom_call.1} parent=1 // pred_check_branch
      %66 = sbr.rel (0) target = $region53
    $region52: #{tpu_custom_call.1} parent=1 // pred_region
      %67 = dma.done [#allocation6], 4096
    $region53: #{tpu_custom_call.1} parent=1 // pred_fallthru
      _
    %v68 = vld [vmem:[%s0] sm:$0x3]
    %v69 = vld [vmem:[%s0 + $0x2] sm:$0x3]
    %v70 = vld [vmem:[%s0 + $0x4] sm:$0x3]
    %v71 = vld [vmem:[%s0 + $0x6] sm:$0x3]
    %v72 = vld [vmem:[%s0 + $0x8] sm:$0x3]
    %v73 = vld [vmem:[%s0 + $0xa] sm:$0x3]
    %v74 = vld [vmem:[%s0 + $0xc] sm:$0x3]
    %v75 = vld [vmem:[%s0 + $0xe] sm:$0x3]
    %v76 = vld [vmem:[%s1] sm:$0x1]
    %78 = vset.pattern.permute.xlu0 0
    %79 = vperm.xlu0 %78, %v68
    %v80 = vpop.permute.xlu0 %79
    %83 = vset.pattern.permute.xlu0 0
    %84 = vperm.xlu0 %83, %v69
    %v85 = vpop.permute.xlu0 %84
    %88 = vset.pattern.permute.xlu0 0
    %89 = vperm.xlu0 %88, %v70
    %v90 = vpop.permute.xlu0 %89
    %93 = vset.pattern.permute.xlu0 0
    %94 = vperm.xlu0 %93, %v71
    %v95 = vpop.permute.xlu0 %94
    %98 = vset.pattern.permute.xlu0 0
    %99 = vperm.xlu0 %98, %v72
    %v100 = vpop.permute.xlu0 %99
    %103 = vset.pattern.permute.xlu0 0
    %104 = vperm.xlu0 %103, %v73
    %v105 = vpop.permute.xlu0 %104
    %108 = vset.pattern.permute.xlu0 0
    %109 = vperm.xlu0 %108, %v74
    %v110 = vpop.permute.xlu0 %109
    %113 = vset.pattern.permute.xlu0 0
    %114 = vperm.xlu0 %113, %v75
    %v115 = vpop.permute.xlu0 %114
    %v118 = vlaneseq
    %v119 = vshrl.u32 %v118, 7
    %v120 = vsub.s32 0, %v119
    %v121 = vrot.slane %v76, %v120
    %v123 = vmul.f32 %v80, %v121
    %v124 = vmul.f32 %v85, %v121
    %v125 = vmul.f32 %v90, %v121
    %v126 = vmul.f32 %v95, %v121
    %v127 = vmul.f32 %v100, %v121
    %v128 = vmul.f32 %v105, %v121
    %v129 = vmul.f32 %v110, %v121
    %v130 = vmul.f32 %v115, %v121
    %v131 = vld [vmem:[%s2] sm:$0x1]
    %v133 = vlaneseq
    %v134 = vshrl.u32 %v133, 7
    %v135 = vsub.s32 0, %v134
    %v136 = vrot.slane %v131, %v135
    %v138 = vadd.f32 %v123, %v136
    %v139 = vadd.f32 %v124, %v136
    %v140 = vadd.f32 %v125, %v136
    %v141 = vadd.f32 %v126, %v136
    %v142 = vadd.f32 %v127, %v136
    %v143 = vadd.f32 %v128, %v136
    %v144 = vadd.f32 %v129, %v136
    %v145 = vadd.f32 %v130, %v136
    %v146 = vld [vmem:[%s3] sm:$0x1]
    %v148 = vlaneseq
    %v149 = vshrl.u32 %v148, 7
    %v150 = vsub.s32 0, %v149
    %v151 = vrot.slane %v146, %v150
    %v153 = vmul.f32 %v80, %v151
    %v154 = vmul.f32 %v85, %v151
    %v155 = vmul.f32 %v90, %v151
    %v156 = vmul.f32 %v95, %v151
    %v157 = vmul.f32 %v100, %v151
    %v158 = vmul.f32 %v105, %v151
    %v159 = vmul.f32 %v110, %v151
    %v160 = vmul.f32 %v115, %v151
    %v161 = vld [vmem:[%s4] sm:$0x1]
    %v163 = vlaneseq
    %v164 = vshrl.u32 %v163, 7
    %v165 = vsub.s32 0, %v164
    %v166 = vrot.slane %v161, %v165
    %v168 = vadd.f32 %v153, %v166
    %v169 = vadd.f32 %v154, %v166
    %v170 = vadd.f32 %v155, %v166
    %v171 = vadd.f32 %v156, %v166
    %v172 = vadd.f32 %v157, %v166
    %v173 = vadd.f32 %v158, %v166
    %v174 = vadd.f32 %v159, %v166
    %v175 = vadd.f32 %v160, %v166
    %v176 = vld [vmem:[#allocation3] sm:$0xff]
    %v177 = vld [vmem:[#allocation3 + $0x8] sm:$0xff]
    %v178 = vld [vmem:[#allocation3 + $0x10] sm:$0xff]
    %v179 = vld [vmem:[#allocation3 + $0x18] sm:$0xff]
    %v180 = vld [vmem:[#allocation3 + $0x20] sm:$0xff]
    %v181 = vld [vmem:[#allocation3 + $0x28] sm:$0xff]
    %v182 = vld [vmem:[#allocation3 + $0x30] sm:$0xff]
    %v183 = vld [vmem:[#allocation3 + $0x38] sm:$0xff]
    %v184 = vld [vmem:[#allocation3 + $0x40] sm:$0xff]
    %v185 = vld [vmem:[#allocation3 + $0x48] sm:$0xff]
    %v186 = vld [vmem:[#allocation3 + $0x50] sm:$0xff]
    %v187 = vld [vmem:[#allocation3 + $0x58] sm:$0xff]
    %v188 = vld [vmem:[#allocation3 + $0x60] sm:$0xff]
    %v189 = vld [vmem:[#allocation3 + $0x68] sm:$0xff]
    %v190 = vld [vmem:[#allocation3 + $0x70] sm:$0xff]
    %v191 = vld [vmem:[#allocation3 + $0x78] sm:$0xff]
    %vm192 = vcmask 523264
    %v194 = vsel %vm192, 0.0, 0
    %196 = vmatprep.subr.mxu0 %v177
    %197 = vmatpush1.msra.mxu0 %v176
    %198 = vmatprep.subr.mxu0 %v179
    %199 = vmatpush1.msra.mxu0 %v178
    %200 = vmatprep.subr.mxu0 %v181
    %201 = vmatpush1.msra.mxu0 %v180
    %202 = vmatprep.subr.mxu0 %v183
    %203 = vmatpush1.msra.mxu0 %v182
    %204 = vmatprep.subr.mxu0 %v185
    %205 = vmatpush1.msra.mxu0 %v184
    %206 = vmatprep.subr.mxu0 %v187
    %207 = vmatpush1.msra.mxu0 %v186
    %208 = vmatprep.subr.mxu0 %v189
    %209 = vmatpush1.msra.mxu0 %v188
    %210 = vmatprep.subr.mxu0 %v191
    %211 = vmatpush1.msra.mxu0 %v190
    %212 = vmatprep.subr.mxu0 0.0
    %213 = vmatpush1.msra.mxu0 0.0
    %214 = vmatprep.subr.mxu0 0.0
    %215 = vmatpush1.msra.mxu0 0.0
    %216 = vmatprep.subr.mxu0 0.0
    %217 = vmatpush1.msra.mxu0 0.0
    %218 = vmatprep.subr.mxu0 0.0
    %219 = vmatpush1.msra.mxu0 0.0
    %220 = vmatprep.subr.mxu0 0.0
    %221 = vmatpush1.msra.mxu0 0.0
    %222 = vmatprep.subr.mxu0 0.0
    %223 = vmatpush1.msra.mxu0 0.0
    %224 = vmatprep.subr.mxu0 0.0
    %225 = vmatpush1.msra.mxu0 0.0
    %226 = vmatprep.subr.mxu0 0.0
    %227 = vmatpush1.msra.mxu0 0.0
    %228 = vmatprep.subr.mxu0 0.0
    %229 = vmatpush1.msra.mxu0 0.0
    %230 = vmatprep.subr.mxu0 0.0
    %231 = vmatpush1.msra.mxu0 0.0
    %232 = vmatprep.subr.mxu0 0.0
    %233 = vmatpush1.msra.mxu0 0.0
    %234 = vmatprep.subr.mxu0 0.0
    %235 = vmatpush1.msra.mxu0 0.0
    %236 = vmatprep.subr.mxu0 0.0
    %237 = vmatpush1.msra.mxu0 0.0
    %238 = vmatprep.subr.mxu0 0.0
    %239 = vmatpush1.msra.mxu0 0.0
    %240 = vmatprep.subr.mxu0 0.0
    %241 = vmatpush1.msra.mxu0 0.0
    %242 = vmatprep.subr.mxu0 0.0
    %243 = vmatpush1.msra.mxu0 0.0
    %244 = vmatprep.subr.mxu0 0.0
    %245 = vmatpush1.msra.mxu0 0.0
    %246 = vmatprep.subr.mxu0 0.0
    %247 = vmatpush1.msra.mxu0 0.0
    %248 = vmatprep.subr.mxu0 0.0
    %249 = vmatpush1.msra.mxu0 0.0
    %250 = vmatprep.subr.mxu0 0.0
    %251 = vmatpush1.msra.mxu0 0.0
    %252 = vmatprep.subr.mxu0 0.0
    %253 = vmatpush1.msra.mxu0 0.0
    %254 = vmatprep.subr.mxu0 0.0
    %255 = vmatpush1.msra.mxu0 0.0
    %256 = vmatprep.subr.mxu0 0.0
    %257 = vmatpush1.msra.mxu0 0.0
    %258 = vmatprep.subr.mxu0 0.0
    %259 = vmatpush1.msra.mxu0 0.0
    %260 = vmatprep.mubr.f32.mxu0 0.0
    %261 = vmatmul.mubr.f32.gmra.mrb[0].mxu0 %v194
    %v262 = vpop.f32.mrb[0].mxu0
    %v263 = vadd.f32 0.0, %v262
    %v264 = vpop.f32.mrb[0].mxu0
    %v265 = vadd.f32 0.0, %v264
    %266 = vdwg.mxu0
    %v267 = vadd.f32 %v138, %v263
    %v268 = vxor.u32 %v267, 2147483648
    %v269 = vmul.f32 %v268, 1.442695
    %v270 = vpow.pop %v269
    %v271 = vadd.f32 %v270, 1.0
    %v272 = vrcp.pop %v271
    %v273 = vmul.f32 1.0, %v272
    %v274 = vtanh.pop %v267
    %v275 = vmul.f32 %v273, 0.0
    %277 = vrot.lane.b32.xlu0 %v274, 32
    %v278 = vpop.permute.xlu0 %277
    %v280 = vmul.f32 %v273, %v278
    %282 = vrot.lane.b32.xlu0 %v280, 32
    %v283 = vpop.permute.xlu0 %282
    %v285 = vadd.f32 %v275, %v283
    %v286 = vtanh.pop %v285
    %288 = vrot.lane.b32.xlu0 %v286, 32
    %v289 = vpop.permute.xlu0 %288
    %v291 = vmul.f32 %v273, %v289
    %v292 = vld [vmem:[%s5] sm:$0x1]
    %v294 = vlaneseq
    %v295 = vshrl.u32 %v294, 7
    %v296 = vsub.s32 0, %v295
    %v297 = vrot.slane %v292, %v296
    %v299 = vadd.f32 %v265, %v297
    %v300 = vadd.f32 %v168, %v299
    %v301 = vxor.u32 %v300, 2147483648
    %v302 = vmul.f32 %v301, 1.442695
    %v303 = vpow.pop %v302
    %v304 = vadd.f32 %v303, 1.0
    %v305 = vrcp.pop %v304
    %v306 = vmul.f32 1.0, %v305
    %308 = vrot.lane.b32.xlu0 %v299, 64
    %v309 = vpop.permute.xlu0 %308
    %v311 = vmul.f32 %v306, %v309
    %313 = vrot.lane.b32.xlu0 %v311, 64
    %v314 = vpop.permute.xlu0 %313
    %v316 = vadd.f32 %v168, %v314
    %v317 = vtanh.pop %v316
    %v318 = vsub.f32 1.0, %v306
    %320 = vrot.lane.b32.xlu0 %v317, 96
    %v321 = vpop.permute.xlu0 %320
    %v323 = vmul.f32 %v318, %v321
    %v324 = vmul.f32 %v306, 0.0
    %v325 = vadd.f32 %v323, %v324
    %327 = vrot.lane.b32.xlu0 %v291, 64
    %v328 = vpop.permute.xlu0 %327
    %331 = vrot.lane.b32.xlu0 %v325, 32
    %v332 = vpop.permute.xlu0 %331
    %vm334 = vcmask 261120
    %v335 = vsel %vm334, %v328, 0.0
    %v336 = vsel %vm192, %v335, %v332
    %vm337 = vcmask 785408
    %v338 = vsel %vm337, %v336, 0.0
    %v339 = vld [vmem:[#allocation5] sm:$0xff]
    %v340 = vld [vmem:[#allocation5 + $0x8] sm:$0xff]
    %v341 = vld [vmem:[#allocation5 + $0x10] sm:$0xff]
    %v342 = vld [vmem:[#allocation5 + $0x18] sm:$0xff]
    %v343 = vld [vmem:[#allocation5 + $0x20] sm:$0xff]
    %v344 = vld [vmem:[#allocation5 + $0x28] sm:$0xff]
    %v345 = vld [vmem:[#allocation5 + $0x30] sm:$0xff]
    %v346 = vld [vmem:[#allocation5 + $0x38] sm:$0xff]
    %v347 = vld [vmem:[#allocation5 + $0x40] sm:$0xff]
    %v348 = vld [vmem:[#allocation5 + $0x48] sm:$0xff]
    %v349 = vld [vmem:[#allocation5 + $0x50] sm:$0xff]
    %v350 = vld [vmem:[#allocation5 + $0x58] sm:$0xff]
    %v351 = vld [vmem:[#allocation5 + $0x60] sm:$0xff]
    %v352 = vld [vmem:[#allocation5 + $0x68] sm:$0xff]
    %v353 = vld [vmem:[#allocation5 + $0x70] sm:$0xff]
    %v354 = vld [vmem:[#allocation5 + $0x78] sm:$0xff]
    %v355 = vld [vmem:[#allocation5 + $0x80] sm:$0xff]
    %v356 = vld [vmem:[#allocation5 + $0x88] sm:$0xff]
    %v357 = vld [vmem:[#allocation5 + $0x90] sm:$0xff]
    %v358 = vld [vmem:[#allocation5 + $0x98] sm:$0xff]
    %v359 = vld [vmem:[#allocation5 + $0xa0] sm:$0xff]
    %v360 = vld [vmem:[#allocation5 + $0xa8] sm:$0xff]
    %v361 = vld [vmem:[#allocation5 + $0xb0] sm:$0xff]
    %v362 = vld [vmem:[#allocation5 + $0xb8] sm:$0xff]
    %v363 = vld [vmem:[#allocation5 + $0xc0] sm:$0xff]
    %v364 = vld [vmem:[#allocation5 + $0xc8] sm:$0xff]
    %v365 = vld [vmem:[#allocation5 + $0xd0] sm:$0xff]
    %v366 = vld [vmem:[#allocation5 + $0xd8] sm:$0xff]
    %v367 = vld [vmem:[#allocation5 + $0xe0] sm:$0xff]
    %v368 = vld [vmem:[#allocation5 + $0xe8] sm:$0xff]
    %v369 = vld [vmem:[#allocation5 + $0xf0] sm:$0xff]
    %v370 = vld [vmem:[#allocation5 + $0xf8] sm:$0xff]
    %v371 = vld [vmem:[%s8] sm:$0x3]
    %v373 = vlaneseq
    %v374 = vshrl.u32 %v373, 7
    %v375 = vsub.s32 0, %v374
    %v376 = vrot.slane %v371, %v375
    %v377 = vlaneseq
    %v378 = vshrl.u32 %v377, 7
    %v379 = vsub.s32 1, %v378
    %v380 = vrot.slane %v371, %v379
    %383 = vmatprep.subr.mxu0 %v340
    %384 = vmatpush1.msra.mxu0 %v339
    %385 = vmatprep.subr.mxu0 %v342
    %386 = vmatpush1.msra.mxu0 %v341
    %387 = vmatprep.subr.mxu0 %v344
    %388 = vmatpush1.msra.mxu0 %v343
    %389 = vmatprep.subr.mxu0 %v346
    %390 = vmatpush1.msra.mxu0 %v345
    %391 = vmatprep.subr.mxu0 %v348
    %392 = vmatpush1.msra.mxu0 %v347
    %393 = vmatprep.subr.mxu0 %v350
    %394 = vmatpush1.msra.mxu0 %v349
    %395 = vmatprep.subr.mxu0 %v352
    %396 = vmatpush1.msra.mxu0 %v351
    %397 = vmatprep.subr.mxu0 %v354
    %398 = vmatpush1.msra.mxu0 %v353
    %399 = vmatprep.subr.mxu0 %v356
    %400 = vmatpush1.msra.mxu0 %v355
    %401 = vmatprep.subr.mxu0 %v358
    %402 = vmatpush1.msra.mxu0 %v357
    %403 = vmatprep.subr.mxu0 %v360
    %404 = vmatpush1.msra.mxu0 %v359
    %405 = vmatprep.subr.mxu0 %v362
    %406 = vmatpush1.msra.mxu0 %v361
    %407 = vmatprep.subr.mxu0 %v364
    %408 = vmatpush1.msra.mxu0 %v363
    %409 = vmatprep.subr.mxu0 %v366
    %410 = vmatpush1.msra.mxu0 %v365
    %411 = vmatprep.subr.mxu0 %v368
    %412 = vmatpush1.msra.mxu0 %v367
    %413 = vmatprep.subr.mxu0 %v370
    %414 = vmatpush1.msra.mxu0 %v369
    %415 = vmatprep.subr.mxu0 0.0
    %416 = vmatpush1.msra.mxu0 0.0
    %417 = vmatprep.subr.mxu0 0.0
    %418 = vmatpush1.msra.mxu0 0.0
    %419 = vmatprep.subr.mxu0 0.0
    %420 = vmatpush1.msra.mxu0 0.0
    %421 = vmatprep.subr.mxu0 0.0
    %422 = vmatpush1.msra.mxu0 0.0
    %423 = vmatprep.subr.mxu0 0.0
    %424 = vmatpush1.msra.mxu0 0.0
    %425 = vmatprep.subr.mxu0 0.0
    %426 = vmatpush1.msra.mxu0 0.0
    %427 = vmatprep.subr.mxu0 0.0
    %428 = vmatpush1.msra.mxu0 0.0
    %429 = vmatprep.subr.mxu0 0.0
    %430 = vmatpush1.msra.mxu0 0.0
    %431 = vmatprep.subr.mxu0 0.0
    %432 = vmatpush1.msra.mxu0 0.0
    %433 = vmatprep.subr.mxu0 0.0
    %434 = vmatpush1.msra.mxu0 0.0
    %435 = vmatprep.subr.mxu0 0.0
    %436 = vmatpush1.msra.mxu0 0.0
    %437 = vmatprep.subr.mxu0 0.0
    %438 = vmatpush1.msra.mxu0 0.0
    %439 = vmatprep.subr.mxu0 0.0
    %440 = vmatpush1.msra.mxu0 0.0
    %441 = vmatprep.subr.mxu0 0.0
    %442 = vmatpush1.msra.mxu0 0.0
    %443 = vmatprep.subr.mxu0 0.0
    %444 = vmatpush1.msra.mxu0 0.0
    %445 = vmatprep.subr.mxu0 0.0
    %446 = vmatpush1.msra.mxu0 0.0
    %447 = vmatprep.mubr.f32.mxu0 0.0
    %448 = vmatmul.mubr.f32.gmra.mrb[0].mxu0 %v338
    %v449 = vpop.f32.mrb[0].mxu0
    %v450 = vadd.f32 %v376, %v449
    %v451 = vpop.f32.mrb[0].mxu0
    %v452 = vadd.f32 %v380, %v451
    %453 = vdwg.mxu0
    %v454 = vxor.u32 %v450, 2147483648
    %v455 = vmul.f32 %v454, 1.442695
    %v456 = vpow.pop %v455
    %v457 = vadd.f32 %v456, 1.0
    %v458 = vrcp.pop %v457
    %v459 = vmul.f32 1.0, %v458
    %v460 = vtanh.pop %v450
    %v461 = vmul.f32 %v459, 0.0
    %463 = vrot.lane.b32.xlu0 %v460, 32
    %v464 = vpop.permute.xlu0 %463
    %v466 = vmul.f32 %v459, %v464
    %468 = vrot.lane.b32.xlu0 %v466, 32
    %v469 = vpop.permute.xlu0 %468
    %v471 = vadd.f32 %v461, %v469
    %v472 = vtanh.pop %v471
    %474 = vrot.lane.b32.xlu0 %v472, 32
    %v475 = vpop.permute.xlu0 %474
    %v477 = vmul.f32 %v459, %v475
    %v478 = vxor.u32 %v452, 2147483648
    %v479 = vmul.f32 %v478, 1.442695
    %v480 = vpow.pop %v479
    %v481 = vadd.f32 %v480, 1.0
    %v482 = vrcp.pop %v481
    %v483 = vmul.f32 1.0, %v482
    %485 = vrot.lane.b32.xlu0 %v452, 32
    %v486 = vpop.permute.xlu0 %485
    %v488 = vmul.f32 %v483, %v486
    %490 = vrot.lane.b32.xlu0 %v488, 64
    %v491 = vpop.permute.xlu0 %490
    %v493 = vadd.f32 %v452, %v491
    %v494 = vtanh.pop %v493
    %v495 = vsub.f32 1.0, %v483
    %497 = vrot.lane.b32.xlu0 %v494, 96
    %v498 = vpop.permute.xlu0 %497
    %v500 = vmul.f32 %v495, %v498
    %v501 = vmul.f32 %v483, 0.0
    %v502 = vadd.f32 %v500, %v501
    %v503 = vsel %vm334, %v328, %v325
    %v505 = vsel %vm192, %v503, 0
    %507 = vmatprep.subr.mxu0 %v177
    %508 = vmatpush1.msra.mxu0 %v176
    %509 = vmatprep.subr.mxu0 %v179
    %510 = vmatpush1.msra.mxu0 %v178
    %511 = vmatprep.subr.mxu0 %v181
    %512 = vmatpush1.msra.mxu0 %v180
    %513 = vmatprep.subr.mxu0 %v183
    %514 = vmatpush1.msra.mxu0 %v182
    %515 = vmatprep.subr.mxu0 %v185
    %516 = vmatpush1.msra.mxu0 %v184
    %517 = vmatprep.subr.mxu0 %v187
    %518 = vmatpush1.msra.mxu0 %v186
    %519 = vmatprep.subr.mxu0 %v189
    %520 = vmatpush1.msra.mxu0 %v188
    %521 = vmatprep.subr.mxu0 %v191
    %522 = vmatpush1.msra.mxu0 %v190
    %523 = vmatprep.subr.mxu0 0.0
    %524 = vmatpush1.msra.mxu0 0.0
    %525 = vmatprep.subr.mxu0 0.0
    %526 = vmatpush1.msra.mxu0 0.0
    %527 = vmatprep.subr.mxu0 0.0
    %528 = vmatpush1.msra.mxu0 0.0
    %529 = vmatprep.subr.mxu0 0.0
    %530 = vmatpush1.msra.mxu0 0.0
    %531 = vmatprep.subr.mxu0 0.0
    %532 = vmatpush1.msra.mxu0 0.0
    %533 = vmatprep.subr.mxu0 0.0
    %534 = vmatpush1.msra.mxu0 0.0
    %535 = vmatprep.subr.mxu0 0.0
    %536 = vmatpush1.msra.mxu0 0.0
    %537 = vmatprep.subr.mxu0 0.0
    %538 = vmatpush1.msra.mxu0 0.0
    %539 = vmatprep.subr.mxu0 0.0
    %540 = vmatpush1.msra.mxu0 0.0
    %541 = vmatprep.subr.mxu0 0.0
    %542 = vmatpush1.msra.mxu0 0.0
    %543 = vmatprep.subr.mxu0 0.0
    %544 = vmatpush1.msra.mxu0 0.0
    %545 = vmatprep.subr.mxu0 0.0
    %546 = vmatpush1.msra.mxu0 0.0
    %547 = vmatprep.subr.mxu0 0.0
    %548 = vmatpush1.msra.mxu0 0.0
    %549 = vmatprep.subr.mxu0 0.0
    %550 = vmatpush1.msra.mxu0 0.0
    %551 = vmatprep.subr.mxu0 0.0
    %552 = vmatpush1.msra.mxu0 0.0
    %553 = vmatprep.subr.mxu0 0.0
    %554 = vmatpush1.msra.mxu0 0.0
    %555 = vmatprep.subr.mxu0 0.0
    %556 = vmatpush1.msra.mxu0 0.0
    %557 = vmatprep.subr.mxu0 0.0
    %558 = vmatpush1.msra.mxu0 0.0
    %559 = vmatprep.subr.mxu0 0.0
    %560 = vmatpush1.msra.mxu0 0.0
    %561 = vmatprep.subr.mxu0 0.0
    %562 = vmatpush1.msra.mxu0 0.0
    %563 = vmatprep.subr.mxu0 0.0
    %564 = vmatpush1.msra.mxu0 0.0
    %565 = vmatprep.subr.mxu0 0.0
    %566 = vmatpush1.msra.mxu0 0.0
    %567 = vmatprep.subr.mxu0 0.0
    %568 = vmatpush1.msra.mxu0 0.0
    %569 = vmatprep.subr.mxu0 0.0
    %570 = vmatpush1.msra.mxu0 0.0
    %571 = vmatprep.mubr.f32.mxu0 0.0
    %572 = vmatmul.mubr.f32.gmra.mrb[0].mxu0 %v505
    %v573 = vpop.f32.mrb[0].mxu0
    %v574 = vadd.f32 0.0, %v573
    %v575 = vpop.f32.mrb[0].mxu0
    %v576 = vadd.f32 0.0, %v575
    %577 = vdwg.mxu0
    %v578 = vadd.f32 %v139, %v574
    %v579 = vxor.u32 %v578, 2147483648
    %v580 = vmul.f32 %v579, 1.442695
    %v581 = vpow.pop %v580
    %v582 = vadd.f32 %v581, 1.0
    %v583 = vrcp.pop %v582
    %v584 = vmul.f32 1.0, %v583
    %v585 = vtanh.pop %v578
    %v586 = vmul.f32 %v584, %v285
    %588 = vrot.lane.b32.xlu0 %v585, 32
    %v589 = vpop.permute.xlu0 %588
    %v591 = vmul.f32 %v584, %v589
    %593 = vrot.lane.b32.xlu0 %v591, 32
    %v594 = vpop.permute.xlu0 %593
    %v596 = vadd.f32 %v586, %v594
    %v597 = vtanh.pop %v596
    %599 = vrot.lane.b32.xlu0 %v597, 32
    %v600 = vpop.permute.xlu0 %599
    %v602 = vmul.f32 %v584, %v600
    %v603 = vadd.f32 %v576, %v297
    %v604 = vadd.f32 %v169, %v603
    %v605 = vxor.u32 %v604, 2147483648
    %v606 = vmul.f32 %v605, 1.442695
    %v607 = vpow.pop %v606
    %v608 = vadd.f32 %v607, 1.0
    %v609 = vrcp.pop %v608
    %v610 = vmul.f32 1.0, %v609
    %612 = vrot.lane.b32.xlu0 %v603, 64
    %v613 = vpop.permute.xlu0 %612
    %v615 = vmul.f32 %v610, %v613
    %617 = vrot.lane.b32.xlu0 %v615, 64
    %v618 = vpop.permute.xlu0 %617
    %v620 = vadd.f32 %v169, %v618
    %v621 = vtanh.pop %v620
    %v622 = vsub.f32 1.0, %v610
    %624 = vrot.lane.b32.xlu0 %v621, 96
    %v625 = vpop.permute.xlu0 %624
    %v627 = vmul.f32 %v622, %v625
    %v628 = vmul.f32 %v610, %v325
    %v629 = vadd.f32 %v627, %v628
    %631 = vrot.lane.b32.xlu0 %v602, 64
    %v632 = vpop.permute.xlu0 %631
    %635 = vrot.lane.b32.xlu0 %v477, 96
    %v636 = vpop.permute.xlu0 %635
    %639 = vrot.lane.b32.xlu0 %v629, 32
    %v640 = vpop.permute.xlu0 %639
    %643 = vrot.lane.b32.xlu0 %v502, 64
    %v644 = vpop.permute.xlu0 %643
    %v646 = vsel %vm334, %v632, %v636
    %v647 = vsel %vm192, %v646, %v640
    %v648 = vsel %vm337, %v647, %v644
    %649 = vmatprep.subr.mxu0 %v340
    %650 = vmatpush1.msra.mxu0 %v339
    %651 = vmatprep.subr.mxu0 %v342
    %652 = vmatpush1.msra.mxu0 %v341
    %653 = vmatprep.subr.mxu0 %v344
    %654 = vmatpush1.msra.mxu0 %v343
    %655 = vmatprep.subr.mxu0 %v346
    %656 = vmatpush1.msra.mxu0 %v345
    %657 = vmatprep.subr.mxu0 %v348
    %658 = vmatpush1.msra.mxu0 %v347
    %659 = vmatprep.subr.mxu0 %v350
    %660 = vmatpush1.msra.mxu0 %v349
    %661 = vmatprep.subr.mxu0 %v352
    %662 = vmatpush1.msra.mxu0 %v351
    %663 = vmatprep.subr.mxu0 %v354
    %664 = vmatpush1.msra.mxu0 %v353
    %665 = vmatprep.subr.mxu0 %v356
    %666 = vmatpush1.msra.mxu0 %v355
    %667 = vmatprep.subr.mxu0 %v358
    %668 = vmatpush1.msra.mxu0 %v357
    %669 = vmatprep.subr.mxu0 %v360
    %670 = vmatpush1.msra.mxu0 %v359
    %671 = vmatprep.subr.mxu0 %v362
    %672 = vmatpush1.msra.mxu0 %v361
    %673 = vmatprep.subr.mxu0 %v364
    %674 = vmatpush1.msra.mxu0 %v363
    %675 = vmatprep.subr.mxu0 %v366
    %676 = vmatpush1.msra.mxu0 %v365
    %677 = vmatprep.subr.mxu0 %v368
    %678 = vmatpush1.msra.mxu0 %v367
    %679 = vmatprep.subr.mxu0 %v370
    %680 = vmatpush1.msra.mxu0 %v369
    %681 = vmatprep.subr.mxu0 0.0
    %682 = vmatpush1.msra.mxu0 0.0
    %683 = vmatprep.subr.mxu0 0.0
    %684 = vmatpush1.msra.mxu0 0.0
    %685 = vmatprep.subr.mxu0 0.0
    %686 = vmatpush1.msra.mxu0 0.0
    %687 = vmatprep.subr.mxu0 0.0
    %688 = vmatpush1.msra.mxu0 0.0
    %689 = vmatprep.subr.mxu0 0.0
    %690 = vmatpush1.msra.mxu0 0.0
    %691 = vmatprep.subr.mxu0 0.0
    %692 = vmatpush1.msra.mxu0 0.0
    %693 = vmatprep.subr.mxu0 0.0
    %694 = vmatpush1.msra.mxu0 0.0
    %695 = vmatprep.subr.mxu0 0.0
    %696 = vmatpush1.msra.mxu0 0.0
    %697 = vmatprep.subr.mxu0 0.0
    %698 = vmatpush1.msra.mxu0 0.0
    %699 = vmatprep.subr.mxu0 0.0
    %700 = vmatpush1.msra.mxu0 0.0
    %701 = vmatprep.subr.mxu0 0.0
    %702 = vmatpush1.msra.mxu0 0.0
    %703 = vmatprep.subr.mxu0 0.0
    %704 = vmatpush1.msra.mxu0 0.0
    %705 = vmatprep.subr.mxu0 0.0
    %706 = vmatpush1.msra.mxu0 0.0
    %707 = vmatprep.subr.mxu0 0.0
    %708 = vmatpush1.msra.mxu0 0.0
    %709 = vmatprep.subr.mxu0 0.0
    %710 = vmatpush1.msra.mxu0 0.0
    %711 = vmatprep.subr.mxu0 0.0
    %712 = vmatpush1.msra.mxu0 0.0
    %713 = vmatprep.mubr.f32.mxu0 0.0
    %714 = vmatmul.mubr.f32.gmra.mrb[0].mxu0 %v648
    %v715 = vpop.f32.mrb[0].mxu0
    %v716 = vadd.f32 %v376, %v715
    %v717 = vpop.f32.mrb[0].mxu0
    %v718 = vadd.f32 %v380, %v717
    %719 = vdwg.mxu0
    %v720 = vxor.u32 %v716, 2147483648
    %v721 = vmul.f32 %v720, 1.442695
    %v722 = vpow.pop %v721
    %v723 = vadd.f32 %v722, 1.0
    %v724 = vrcp.pop %v723
    %v725 = vmul.f32 1.0, %v724
    %v726 = vtanh.pop %v716
    %v727 = vmul.f32 %v725, %v471
    %729 = vrot.lane.b32.xlu0 %v726, 32
    %v730 = vpop.permute.xlu0 %729
    %v732 = vmul.f32 %v725, %v730
    %734 = vrot.lane.b32.xlu0 %v732, 32
    %v735 = vpop.permute.xlu0 %734
    %v737 = vadd.f32 %v727, %v735
    %v738 = vtanh.pop %v737
    %740 = vrot.lane.b32.xlu0 %v738, 32
    %v741 = vpop.permute.xlu0 %740
    %v743 = vmul.f32 %v725, %v741
    %v744 = vxor.u32 %v718, 2147483648
    %v745 = vmul.f32 %v744, 1.442695
    %v746 = vpow.pop %v745
    %v747 = vadd.f32 %v746, 1.0
    %v748 = vrcp.pop %v747
    %v749 = vmul.f32 1.0, %v748
    %751 = vrot.lane.b32.xlu0 %v718, 32
    %v752 = vpop.permute.xlu0 %751
    %v754 = vmul.f32 %v749, %v752
    %756 = vrot.lane.b32.xlu0 %v754, 64
    %v757 = vpop.permute.xlu0 %756
    %v759 = vadd.f32 %v718, %v757
    %v760 = vtanh.pop %v759
    %v761 = vsub.f32 1.0, %v749
    %763 = vrot.lane.b32.xlu0 %v760, 96
    %v764 = vpop.permute.xlu0 %763
    %v766 = vmul.f32 %v761, %v764
    %v767 = vmul.f32 %v749, %v502
    %v768 = vadd.f32 %v766, %v767
    %v769 = vsel %vm334, %v632, %v629
    %v771 = vsel %vm192, %v769, 0
    %773 = vmatprep.subr.mxu0 %v177
    %774 = vmatpush1.msra.mxu0 %v176
    %775 = vmatprep.subr.mxu0 %v179
    %776 = vmatpush1.msra.mxu0 %v178
    %777 = vmatprep.subr.mxu0 %v181
    %778 = vmatpush1.msra.mxu0 %v180
    %779 = vmatprep.subr.mxu0 %v183
    %780 = vmatpush1.msra.mxu0 %v182
    %781 = vmatprep.subr.mxu0 %v185
    %782 = vmatpush1.msra.mxu0 %v184
    %783 = vmatprep.subr.mxu0 %v187
    %784 = vmatpush1.msra.mxu0 %v186
    %785 = vmatprep.subr.mxu0 %v189
    %786 = vmatpush1.msra.mxu0 %v188
    %787 = vmatprep.subr.mxu0 %v191
    %788 = vmatpush1.msra.mxu0 %v190
    %789 = vmatprep.subr.mxu0 0.0
    %790 = vmatpush1.msra.mxu0 0.0
    %791 = vmatprep.subr.mxu0 0.0
    %792 = vmatpush1.msra.mxu0 0.0
    %793 = vmatprep.subr.mxu0 0.0
    %794 = vmatpush1.msra.mxu0 0.0
    %795 = vmatprep.subr.mxu0 0.0
    %796 = vmatpush1.msra.mxu0 0.0
    %797 = vmatprep.subr.mxu0 0.0
    %798 = vmatpush1.msra.mxu0 0.0
    %799 = vmatprep.subr.mxu0 0.0
    %800 = vmatpush1.msra.mxu0 0.0
    %801 = vmatprep.subr.mxu0 0.0
    %802 = vmatpush1.msra.mxu0 0.0
    %803 = vmatprep.subr.mxu0 0.0
    %804 = vmatpush1.msra.mxu0 0.0
    %805 = vmatprep.subr.mxu0 0.0
    %806 = vmatpush1.msra.mxu0 0.0
    %807 = vmatprep.subr.mxu0 0.0
    %808 = vmatpush1.msra.mxu0 0.0
    %809 = vmatprep.subr.mxu0 0.0
    %810 = vmatpush1.msra.mxu0 0.0
    %811 = vmatprep.subr.mxu0 0.0
    %812 = vmatpush1.msra.mxu0 0.0
    %813 = vmatprep.subr.mxu0 0.0
    %814 = vmatpush1.msra.mxu0 0.0
    %815 = vmatprep.subr.mxu0 0.0
    %816 = vmatpush1.msra.mxu0 0.0
    %817 = vmatprep.subr.mxu0 0.0
    %818 = vmatpush1.msra.mxu0 0.0
    %819 = vmatprep.subr.mxu0 0.0
    %820 = vmatpush1.msra.mxu0 0.0
    %821 = vmatprep.subr.mxu0 0.0
    %822 = vmatpush1.msra.mxu0 0.0
    %823 = vmatprep.subr.mxu0 0.0
    %824 = vmatpush1.msra.mxu0 0.0
    %825 = vmatprep.subr.mxu0 0.0
    %826 = vmatpush1.msra.mxu0 0.0
    %827 = vmatprep.subr.mxu0 0.0
    %828 = vmatpush1.msra.mxu0 0.0
    %829 = vmatprep.subr.mxu0 0.0
    %830 = vmatpush1.msra.mxu0 0.0
    %831 = vmatprep.subr.mxu0 0.0
    %832 = vmatpush1.msra.mxu0 0.0
    %833 = vmatprep.subr.mxu0 0.0
    %834 = vmatpush1.msra.mxu0 0.0
    %835 = vmatprep.subr.mxu0 0.0
    %836 = vmatpush1.msra.mxu0 0.0
    %837 = vmatprep.mubr.f32.mxu0 0.0
    %838 = vmatmul.mubr.f32.gmra.mrb[0].mxu0 %v771
    %v839 = vpop.f32.mrb[0].mxu0
    %v840 = vadd.f32 0.0, %v839
    %v841 = vpop.f32.mrb[0].mxu0
    %v842 = vadd.f32 0.0, %v841
    %843 = vdwg.mxu0
    %v844 = vadd.f32 %v140, %v840
    %v845 = vxor.u32 %v844, 2147483648
    %v846 = vmul.f32 %v845, 1.442695
    %v847 = vpow.pop %v846
    %v848 = vadd.f32 %v847, 1.0
    %v849 = vrcp.pop %v848
    %v850 = vmul.f32 1.0, %v849
    %v851 = vtanh.pop %v844
    %v852 = vmul.f32 %v850, %v596
    %854 = vrot.lane.b32.xlu0 %v851, 32
    %v855 = vpop.permute.xlu0 %854
    %v857 = vmul.f32 %v850, %v855
    %859 = vrot.lane.b32.xlu0 %v857, 32
    %v860 = vpop.permute.xlu0 %859
    %v862 = vadd.f32 %v852, %v860
    %v863 = vtanh.pop %v862
    %865 = vrot.lane.b32.xlu0 %v863, 32
    %v866 = vpop.permute.xlu0 %865
    %v868 = vmul.f32 %v850, %v866
    %v869 = vadd.f32 %v842, %v297
    %v870 = vadd.f32 %v170, %v869
    %v871 = vxor.u32 %v870, 2147483648
    %v872 = vmul.f32 %v871, 1.442695
    %v873 = vpow.pop %v872
    %v874 = vadd.f32 %v873, 1.0
    %v875 = vrcp.pop %v874
    %v876 = vmul.f32 1.0, %v875
    %878 = vrot.lane.b32.xlu0 %v869, 64
    %v879 = vpop.permute.xlu0 %878
    %v881 = vmul.f32 %v876, %v879
    %883 = vrot.lane.b32.xlu0 %v881, 64
    %v884 = vpop.permute.xlu0 %883
    %v886 = vadd.f32 %v170, %v884
    %v887 = vtanh.pop %v886
    %v888 = vsub.f32 1.0, %v876
    %890 = vrot.lane.b32.xlu0 %v887, 96
    %v891 = vpop.permute.xlu0 %890
    %v893 = vmul.f32 %v888, %v891
    %v894 = vmul.f32 %v876, %v629
    %v895 = vadd.f32 %v893, %v894
    %897 = vrot.lane.b32.xlu0 %v868, 64
    %v898 = vpop.permute.xlu0 %897
    %901 = vrot.lane.b32.xlu0 %v743, 96
    %v902 = vpop.permute.xlu0 %901
    %905 = vrot.lane.b32.xlu0 %v895, 32
    %v906 = vpop.permute.xlu0 %905
    %909 = vrot.lane.b32.xlu0 %v768, 64
    %v910 = vpop.permute.xlu0 %909
    %v912 = vsel %vm334, %v898, %v902
    %v913 = vsel %vm192, %v912, %v906
    %v914 = vsel %vm337, %v913, %v910
    %915 = vmatprep.subr.mxu0 %v340
    %916 = vmatpush1.msra.mxu0 %v339
    %917 = vmatprep.subr.mxu0 %v342
    %918 = vmatpush1.msra.mxu0 %v341
    %919 = vmatprep.subr.mxu0 %v344
    %920 = vmatpush1.msra.mxu0 %v343
    %921 = vmatprep.subr.mxu0 %v346
    %922 = vmatpush1.msra.mxu0 %v345
    %923 = vmatprep.subr.mxu0 %v348
    %924 = vmatpush1.msra.mxu0 %v347
    %925 = vmatprep.subr.mxu0 %v350
    %926 = vmatpush1.msra.mxu0 %v349
    %927 = vmatprep.subr.mxu0 %v352
    %928 = vmatpush1.msra.mxu0 %v351
    %929 = vmatprep.subr.mxu0 %v354
    %930 = vmatpush1.msra.mxu0 %v353
    %931 = vmatprep.subr.mxu0 %v356
    %932 = vmatpush1.msra.mxu0 %v355
    %933 = vmatprep.subr.mxu0 %v358
    %934 = vmatpush1.msra.mxu0 %v357
    %935 = vmatprep.subr.mxu0 %v360
    %936 = vmatpush1.msra.mxu0 %v359
    %937 = vmatprep.subr.mxu0 %v362
    %938 = vmatpush1.msra.mxu0 %v361
    %939 = vmatprep.subr.mxu0 %v364
    %940 = vmatpush1.msra.mxu0 %v363
    %941 = vmatprep.subr.mxu0 %v366
    %942 = vmatpush1.msra.mxu0 %v365
    %943 = vmatprep.subr.mxu0 %v368
    %944 = vmatpush1.msra.mxu0 %v367
    %945 = vmatprep.subr.mxu0 %v370
    %946 = vmatpush1.msra.mxu0 %v369
    %947 = vmatprep.subr.mxu0 0.0
    %948 = vmatpush1.msra.mxu0 0.0
    %949 = vmatprep.subr.mxu0 0.0
    %950 = vmatpush1.msra.mxu0 0.0
    %951 = vmatprep.subr.mxu0 0.0
    %952 = vmatpush1.msra.mxu0 0.0
    %953 = vmatprep.subr.mxu0 0.0
    %954 = vmatpush1.msra.mxu0 0.0
    %955 = vmatprep.subr.mxu0 0.0
    %956 = vmatpush1.msra.mxu0 0.0
    %957 = vmatprep.subr.mxu0 0.0
    %958 = vmatpush1.msra.mxu0 0.0
    %959 = vmatprep.subr.mxu0 0.0
    %960 = vmatpush1.msra.mxu0 0.0
    %961 = vmatprep.subr.mxu0 0.0
    %962 = vmatpush1.msra.mxu0 0.0
    %963 = vmatprep.subr.mxu0 0.0
    %964 = vmatpush1.msra.mxu0 0.0
    %965 = vmatprep.subr.mxu0 0.0
    %966 = vmatpush1.msra.mxu0 0.0
    %967 = vmatprep.subr.mxu0 0.0
    %968 = vmatpush1.msra.mxu0 0.0
    %969 = vmatprep.subr.mxu0 0.0
    %970 = vmatpush1.msra.mxu0 0.0
    %971 = vmatprep.subr.mxu0 0.0
    %972 = vmatpush1.msra.mxu0 0.0
    %973 = vmatprep.subr.mxu0 0.0
    %974 = vmatpush1.msra.mxu0 0.0
    %975 = vmatprep.subr.mxu0 0.0
    %976 = vmatpush1.msra.mxu0 0.0
    %977 = vmatprep.subr.mxu0 0.0
    %978 = vmatpush1.msra.mxu0 0.0
    %979 = vmatprep.mubr.f32.mxu0 0.0
    %980 = vmatmul.mubr.f32.gmra.mrb[0].mxu0 %v914
    %v981 = vpop.f32.mrb[0].mxu0
    %v982 = vadd.f32 %v376, %v981
    %v983 = vpop.f32.mrb[0].mxu0
    %v984 = vadd.f32 %v380, %v983
    %985 = vdwg.mxu0
    %v986 = vxor.u32 %v982, 2147483648
    %v987 = vmul.f32 %v986, 1.442695
    %v988 = vpow.pop %v987
    %v989 = vadd.f32 %v988, 1.0
    %v990 = vrcp.pop %v989
    %v991 = vmul.f32 1.0, %v990
    %v992 = vtanh.pop %v982
    %v993 = vmul.f32 %v991, %v737
    %995 = vrot.lane.b32.xlu0 %v992, 32
    %v996 = vpop.permute.xlu0 %995
    %v998 = vmul.f32 %v991, %v996
    %1000 = vrot.lane.b32.xlu0 %v998, 32
    %v1001 = vpop.permute.xlu0 %1000
    %v1003 = vadd.f32 %v993, %v1001
    %v1004 = vtanh.pop %v1003
    %1006 = vrot.lane.b32.xlu0 %v1004, 32
    %v1007 = vpop.permute.xlu0 %1006
    %v1009 = vmul.f32 %v991, %v1007
    %v1010 = vxor.u32 %v984, 2147483648
    %v1011 = vmul.f32 %v1010, 1.442695
    %v1012 = vpow.pop %v1011
    %v1013 = vadd.f32 %v1012, 1.0
    %v1014 = vrcp.pop %v1013
    %v1015 = vmul.f32 1.0, %v1014
    %1017 = vrot.lane.b32.xlu0 %v984, 32
    %v1018 = vpop.permute.xlu0 %1017
    %v1020 = vmul.f32 %v1015, %v1018
    %1022 = vrot.lane.b32.xlu0 %v1020, 64
    %v1023 = vpop.permute.xlu0 %1022
    %v1025 = vadd.f32 %v984, %v1023
    %v1026 = vtanh.pop %v1025
    %v1027 = vsub.f32 1.0, %v1015
    %1029 = vrot.lane.b32.xlu0 %v1026, 96
    %v1030 = vpop.permute.xlu0 %1029
    %v1032 = vmul.f32 %v1027, %v1030
    %v1033 = vmul.f32 %v1015, %v768
    %v1034 = vadd.f32 %v1032, %v1033
    %v1035 = vsel %vm334, %v898, %v895
    %v1037 = vsel %vm192, %v1035, 0
    %1039 = vmatprep.subr.mxu0 %v177
    %1040 = vmatpush1.msra.mxu0 %v176
    %1041 = vmatprep.subr.mxu0 %v179
    %1042 = vmatpush1.msra.mxu0 %v178
    %1043 = vmatprep.subr.mxu0 %v181
    %1044 = vmatpush1.msra.mxu0 %v180
    %1045 = vmatprep.subr.mxu0 %v183
    %1046 = vmatpush1.msra.mxu0 %v182
    %1047 = vmatprep.subr.mxu0 %v185
    %1048 = vmatpush1.msra.mxu0 %v184
    %1049 = vmatprep.subr.mxu0 %v187
    %1050 = vmatpush1.msra.mxu0 %v186
    %1051 = vmatprep.subr.mxu0 %v189
    %1052 = vmatpush1.msra.mxu0 %v188
    %1053 = vmatprep.subr.mxu0 %v191
    %1054 = vmatpush1.msra.mxu0 %v190
    %1055 = vmatprep.subr.mxu0 0.0
    %1056 = vmatpush1.msra.mxu0 0.0
    %1057 = vmatprep.subr.mxu0 0.0
    %1058 = vmatpush1.msra.mxu0 0.0
    %1059 = vmatprep.subr.mxu0 0.0
    %1060 = vmatpush1.msra.mxu0 0.0
    %1061 = vmatprep.subr.mxu0 0.0
    %1062 = vmatpush1.msra.mxu0 0.0
    %1063 = vmatprep.subr.mxu0 0.0
    %1064 = vmatpush1.msra.mxu0 0.0
    %1065 = vmatprep.subr.mxu0 0.0
    %1066 = vmatpush1.msra.mxu0 0.0
    %1067 = vmatprep.subr.mxu0 0.0
    %1068 = vmatpush1.msra.mxu0 0.0
    %1069 = vmatprep.subr.mxu0 0.0
    %1070 = vmatpush1.msra.mxu0 0.0
    %1071 = vmatprep.subr.mxu0 0.0
    %1072 = vmatpush1.msra.mxu0 0.0
    %1073 = vmatprep.subr.mxu0 0.0
    %1074 = vmatpush1.msra.mxu0 0.0
    %1075 = vmatprep.subr.mxu0 0.0
    %1076 = vmatpush1.msra.mxu0 0.0
    %1077 = vmatprep.subr.mxu0 0.0
    %1078 = vmatpush1.msra.mxu0 0.0
    %1079 = vmatprep.subr.mxu0 0.0
    %1080 = vmatpush1.msra.mxu0 0.0
    %1081 = vmatprep.subr.mxu0 0.0
    %1082 = vmatpush1.msra.mxu0 0.0
    %1083 = vmatprep.subr.mxu0 0.0
    %1084 = vmatpush1.msra.mxu0 0.0
    %1085 = vmatprep.subr.mxu0 0.0
    %1086 = vmatpush1.msra.mxu0 0.0
    %1087 = vmatprep.subr.mxu0 0.0
    %1088 = vmatpush1.msra.mxu0 0.0
    %1089 = vmatprep.subr.mxu0 0.0
    %1090 = vmatpush1.msra.mxu0 0.0
    %1091 = vmatprep.subr.mxu0 0.0
    %1092 = vmatpush1.msra.mxu0 0.0
    %1093 = vmatprep.subr.mxu0 0.0
    %1094 = vmatpush1.msra.mxu0 0.0
    %1095 = vmatprep.subr.mxu0 0.0
    %1096 = vmatpush1.msra.mxu0 0.0
    %1097 = vmatprep.subr.mxu0 0.0
    %1098 = vmatpush1.msra.mxu0 0.0
    %1099 = vmatprep.subr.mxu0 0.0
    %1100 = vmatpush1.msra.mxu0 0.0
    %1101 = vmatprep.subr.mxu0 0.0
    %1102 = vmatpush1.msra.mxu0 0.0
    %1103 = vmatprep.mubr.f32.mxu0 0.0
    %1104 = vmatmul.mubr.f32.gmra.mrb[0].mxu0 %v1037
    %v1105 = vpop.f32.mrb[0].mxu0
    %v1106 = vadd.f32 0.0, %v1105
    %v1107 = vpop.f32.mrb[0].mxu0
    %v1108 = vadd.f32 0.0, %v1107
    %1109 = vdwg.mxu0
    %v1110 = vadd.f32 %v141, %v1106
    %v1111 = vxor.u32 %v1110, 2147483648
    %v1112 = vmul.f32 %v1111, 1.442695
    %v1113 = vpow.pop %v1112
    %v1114 = vadd.f32 %v1113, 1.0
    %v1115 = vrcp.pop %v1114
    %v1116 = vmul.f32 1.0, %v1115
    %v1117 = vtanh.pop %v1110
    %v1118 = vmul.f32 %v1116, %v862
    %1120 = vrot.lane.b32.xlu0 %v1117, 32
    %v1121 = vpop.permute.xlu0 %1120
    %v1123 = vmul.f32 %v1116, %v1121
    %1125 = vrot.lane.b32.xlu0 %v1123, 32
    %v1126 = vpop.permute.xlu0 %1125
    %v1128 = vadd.f32 %v1118, %v1126
    %v1129 = vtanh.pop %v1128
    %1131 = vrot.lane.b32.xlu0 %v1129, 32
    %v1132 = vpop.permute.xlu0 %1131
    %v1134 = vmul.f32 %v1116, %v1132
    %v1135 = vadd.f32 %v1108, %v297
    %v1136 = vadd.f32 %v171, %v1135
    %v1137 = vxor.u32 %v1136, 2147483648
    %v1138 = vmul.f32 %v1137, 1.442695
    %v1139 = vpow.pop %v1138
    %v1140 = vadd.f32 %v1139, 1.0
    %v1141 = vrcp.pop %v1140
    %v1142 = vmul.f32 1.0, %v1141
    %1144 = vrot.lane.b32.xlu0 %v1135, 64
    %v1145 = vpop.permute.xlu0 %1144
    %v1147 = vmul.f32 %v1142, %v1145
    %1149 = vrot.lane.b32.xlu0 %v1147, 64
    %v1150 = vpop.permute.xlu0 %1149
    %v1152 = vadd.f32 %v171, %v1150
    %v1153 = vtanh.pop %v1152
    %v1154 = vsub.f32 1.0, %v1142
    %1156 = vrot.lane.b32.xlu0 %v1153, 96
    %v1157 = vpop.permute.xlu0 %1156
    %v1159 = vmul.f32 %v1154, %v1157
    %v1160 = vmul.f32 %v1142, %v895
    %v1161 = vadd.f32 %v1159, %v1160
    %1163 = vrot.lane.b32.xlu0 %v1134, 64
    %v1164 = vpop.permute.xlu0 %1163
    %1167 = vrot.lane.b32.xlu0 %v1009, 96
    %v1168 = vpop.permute.xlu0 %1167
    %1171 = vrot.lane.b32.xlu0 %v1161, 32
    %v1172 = vpop.permute.xlu0 %1171
    %1175 = vrot.lane.b32.xlu0 %v1034, 64
    %v1176 = vpop.permute.xlu0 %1175
    %v1178 = vsel %vm334, %v1164, %v1168
    %v1179 = vsel %vm192, %v1178, %v1172
    %v1180 = vsel %vm337, %v1179, %v1176
    %1181 = vmatprep.subr.mxu0 %v340
    %1182 = vmatpush1.msra.mxu0 %v339
    %1183 = vmatprep.subr.mxu0 %v342
    %1184 = vmatpush1.msra.mxu0 %v341
    %1185 = vmatprep.subr.mxu0 %v344
    %1186 = vmatpush1.msra.mxu0 %v343
    %1187 = vmatprep.subr.mxu0 %v346
    %1188 = vmatpush1.msra.mxu0 %v345
    %1189 = vmatprep.subr.mxu0 %v348
    %1190 = vmatpush1.msra.mxu0 %v347
    %1191 = vmatprep.subr.mxu0 %v350
    %1192 = vmatpush1.msra.mxu0 %v349
    %1193 = vmatprep.subr.mxu0 %v352
    %1194 = vmatpush1.msra.mxu0 %v351
    %1195 = vmatprep.subr.mxu0 %v354
    %1196 = vmatpush1.msra.mxu0 %v353
    %1197 = vmatprep.subr.mxu0 %v356
    %1198 = vmatpush1.msra.mxu0 %v355
    %1199 = vmatprep.subr.mxu0 %v358
    %1200 = vmatpush1.msra.mxu0 %v357
    %1201 = vmatprep.subr.mxu0 %v360
    %1202 = vmatpush1.msra.mxu0 %v359
    %1203 = vmatprep.subr.mxu0 %v362
    %1204 = vmatpush1.msra.mxu0 %v361
    %1205 = vmatprep.subr.mxu0 %v364
    %1206 = vmatpush1.msra.mxu0 %v363
    %1207 = vmatprep.subr.mxu0 %v366
    %1208 = vmatpush1.msra.mxu0 %v365
    %1209 = vmatprep.subr.mxu0 %v368
    %1210 = vmatpush1.msra.mxu0 %v367
    %1211 = vmatprep.subr.mxu0 %v370
    %1212 = vmatpush1.msra.mxu0 %v369
    %1213 = vmatprep.subr.mxu0 0.0
    %1214 = vmatpush1.msra.mxu0 0.0
    %1215 = vmatprep.subr.mxu0 0.0
    %1216 = vmatpush1.msra.mxu0 0.0
    %1217 = vmatprep.subr.mxu0 0.0
    %1218 = vmatpush1.msra.mxu0 0.0
    %1219 = vmatprep.subr.mxu0 0.0
    %1220 = vmatpush1.msra.mxu0 0.0
    %1221 = vmatprep.subr.mxu0 0.0
    %1222 = vmatpush1.msra.mxu0 0.0
    %1223 = vmatprep.subr.mxu0 0.0
    %1224 = vmatpush1.msra.mxu0 0.0
    %1225 = vmatprep.subr.mxu0 0.0
    %1226 = vmatpush1.msra.mxu0 0.0
    %1227 = vmatprep.subr.mxu0 0.0
    %1228 = vmatpush1.msra.mxu0 0.0
    %1229 = vmatprep.subr.mxu0 0.0
    %1230 = vmatpush1.msra.mxu0 0.0
    %1231 = vmatprep.subr.mxu0 0.0
    %1232 = vmatpush1.msra.mxu0 0.0
    %1233 = vmatprep.subr.mxu0 0.0
    %1234 = vmatpush1.msra.mxu0 0.0
    %1235 = vmatprep.subr.mxu0 0.0
    %1236 = vmatpush1.msra.mxu0 0.0
    %1237 = vmatprep.subr.mxu0 0.0
    %1238 = vmatpush1.msra.mxu0 0.0
    %1239 = vmatprep.subr.mxu0 0.0
    %1240 = vmatpush1.msra.mxu0 0.0
    %1241 = vmatprep.subr.mxu0 0.0
    %1242 = vmatpush1.msra.mxu0 0.0
    %1243 = vmatprep.subr.mxu0 0.0
    %1244 = vmatpush1.msra.mxu0 0.0
    %1245 = vmatprep.mubr.f32.mxu0 0.0
    %1246 = vmatmul.mubr.f32.gmra.mrb[0].mxu0 %v1180
    %v1247 = vpop.f32.mrb[0].mxu0
    %v1248 = vadd.f32 %v376, %v1247
    %v1249 = vpop.f32.mrb[0].mxu0
    %v1250 = vadd.f32 %v380, %v1249
    %1251 = vdwg.mxu0
    %v1252 = vxor.u32 %v1248, 2147483648
    %v1253 = vmul.f32 %v1252, 1.442695
    %v1254 = vpow.pop %v1253
    %v1255 = vadd.f32 %v1254, 1.0
    %v1256 = vrcp.pop %v1255
    %v1257 = vmul.f32 1.0, %v1256
    %v1258 = vtanh.pop %v1248
    %v1259 = vmul.f32 %v1257, %v1003
    %1261 = vrot.lane.b32.xlu0 %v1258, 32
    %v1262 = vpop.permute.xlu0 %1261
    %v1264 = vmul.f32 %v1257, %v1262
    %1266 = vrot.lane.b32.xlu0 %v1264, 32
    %v1267 = vpop.permute.xlu0 %1266
    %v1269 = vadd.f32 %v1259, %v1267
    %v1270 = vtanh.pop %v1269
    %1272 = vrot.lane.b32.xlu0 %v1270, 32
    %v1273 = vpop.permute.xlu0 %1272
    %v1275 = vmul.f32 %v1257, %v1273
    %v1276 = vxor.u32 %v1250, 2147483648
    %v1277 = vmul.f32 %v1276, 1.442695
    %v1278 = vpow.pop %v1277
    %v1279 = vadd.f32 %v1278, 1.0
    %v1280 = vrcp.pop %v1279
    %v1281 = vmul.f32 1.0, %v1280
    %1283 = vrot.lane.b32.xlu0 %v1250, 32
    %v1284 = vpop.permute.xlu0 %1283
    %v1286 = vmul.f32 %v1281, %v1284
    %1288 = vrot.lane.b32.xlu0 %v1286, 64
    %v1289 = vpop.permute.xlu0 %1288
    %v1291 = vadd.f32 %v1250, %v1289
    %v1292 = vtanh.pop %v1291
    %v1293 = vsub.f32 1.0, %v1281
    %1295 = vrot.lane.b32.xlu0 %v1292, 96
    %v1296 = vpop.permute.xlu0 %1295
    %v1298 = vmul.f32 %v1293, %v1296
    %v1299 = vmul.f32 %v1281, %v1034
    %v1300 = vadd.f32 %v1298, %v1299
    %v1301 = vsel %vm334, %v1164, %v1161
    %v1303 = vsel %vm192, %v1301, 0
    %1305 = vmatprep.subr.mxu0 %v177
    %1306 = vmatpush1.msra.mxu0 %v176
    %1307 = vmatprep.subr.mxu0 %v179
    %1308 = vmatpush1.msra.mxu0 %v178
    %1309 = vmatprep.subr.mxu0 %v181
    %1310 = vmatpush1.msra.mxu0 %v180
    %1311 = vmatprep.subr.mxu0 %v183
    %1312 = vmatpush1.msra.mxu0 %v182
    %1313 = vmatprep.subr.mxu0 %v185
    %1314 = vmatpush1.msra.mxu0 %v184
    %1315 = vmatprep.subr.mxu0 %v187
    %1316 = vmatpush1.msra.mxu0 %v186
    %1317 = vmatprep.subr.mxu0 %v189
    %1318 = vmatpush1.msra.mxu0 %v188
    %1319 = vmatprep.subr.mxu0 %v191
    %1320 = vmatpush1.msra.mxu0 %v190
    %1321 = vmatprep.subr.mxu0 0.0
    %1322 = vmatpush1.msra.mxu0 0.0
    %1323 = vmatprep.subr.mxu0 0.0
    %1324 = vmatpush1.msra.mxu0 0.0
    %1325 = vmatprep.subr.mxu0 0.0
    %1326 = vmatpush1.msra.mxu0 0.0
    %1327 = vmatprep.subr.mxu0 0.0
    %1328 = vmatpush1.msra.mxu0 0.0
    %1329 = vmatprep.subr.mxu0 0.0
    %1330 = vmatpush1.msra.mxu0 0.0
    %1331 = vmatprep.subr.mxu0 0.0
    %1332 = vmatpush1.msra.mxu0 0.0
    %1333 = vmatprep.subr.mxu0 0.0
    %1334 = vmatpush1.msra.mxu0 0.0
    %1335 = vmatprep.subr.mxu0 0.0
    %1336 = vmatpush1.msra.mxu0 0.0
    %1337 = vmatprep.subr.mxu0 0.0
    %1338 = vmatpush1.msra.mxu0 0.0
    %1339 = vmatprep.subr.mxu0 0.0
    %1340 = vmatpush1.msra.mxu0 0.0
    %1341 = vmatprep.subr.mxu0 0.0
    %1342 = vmatpush1.msra.mxu0 0.0
    %1343 = vmatprep.subr.mxu0 0.0
    %1344 = vmatpush1.msra.mxu0 0.0
    %1345 = vmatprep.subr.mxu0 0.0
    %1346 = vmatpush1.msra.mxu0 0.0
    %1347 = vmatprep.subr.mxu0 0.0
    %1348 = vmatpush1.msra.mxu0 0.0
    %1349 = vmatprep.subr.mxu0 0.0
    %1350 = vmatpush1.msra.mxu0 0.0
    %1351 = vmatprep.subr.mxu0 0.0
    %1352 = vmatpush1.msra.mxu0 0.0
    %1353 = vmatprep.subr.mxu0 0.0
    %1354 = vmatpush1.msra.mxu0 0.0
    %1355 = vmatprep.subr.mxu0 0.0
    %1356 = vmatpush1.msra.mxu0 0.0
    %1357 = vmatprep.subr.mxu0 0.0
    %1358 = vmatpush1.msra.mxu0 0.0
    %1359 = vmatprep.subr.mxu0 0.0
    %1360 = vmatpush1.msra.mxu0 0.0
    %1361 = vmatprep.subr.mxu0 0.0
    %1362 = vmatpush1.msra.mxu0 0.0
    %1363 = vmatprep.subr.mxu0 0.0
    %1364 = vmatpush1.msra.mxu0 0.0
    %1365 = vmatprep.subr.mxu0 0.0
    %1366 = vmatpush1.msra.mxu0 0.0
    %1367 = vmatprep.subr.mxu0 0.0
    %1368 = vmatpush1.msra.mxu0 0.0
    %1369 = vmatprep.mubr.f32.mxu0 0.0
    %1370 = vmatmul.mubr.f32.gmra.mrb[0].mxu0 %v1303
    %v1371 = vpop.f32.mrb[0].mxu0
    %v1372 = vadd.f32 0.0, %v1371
    %v1373 = vpop.f32.mrb[0].mxu0
    %v1374 = vadd.f32 0.0, %v1373
    %1375 = vdwg.mxu0
    %v1376 = vadd.f32 %v142, %v1372
    %v1377 = vxor.u32 %v1376, 2147483648
    %v1378 = vmul.f32 %v1377, 1.442695
    %v1379 = vpow.pop %v1378
    %v1380 = vadd.f32 %v1379, 1.0
    %v1381 = vrcp.pop %v1380
    %v1382 = vmul.f32 1.0, %v1381
    %v1383 = vtanh.pop %v1376
    %v1384 = vmul.f32 %v1382, %v1128
    %1386 = vrot.lane.b32.xlu0 %v1383, 32
    %v1387 = vpop.permute.xlu0 %1386
    %v1389 = vmul.f32 %v1382, %v1387
    %1391 = vrot.lane.b32.xlu0 %v1389, 32
    %v1392 = vpop.permute.xlu0 %1391
    %v1394 = vadd.f32 %v1384, %v1392
    %v1395 = vtanh.pop %v1394
    %1397 = vrot.lane.b32.xlu0 %v1395, 32
    %v1398 = vpop.permute.xlu0 %1397
    %v1400 = vmul.f32 %v1382, %v1398
    %v1401 = vadd.f32 %v1374, %v297
    %v1402 = vadd.f32 %v172, %v1401
    %v1403 = vxor.u32 %v1402, 2147483648
    %v1404 = vmul.f32 %v1403, 1.442695
    %v1405 = vpow.pop %v1404
    %v1406 = vadd.f32 %v1405, 1.0
    %v1407 = vrcp.pop %v1406
    %v1408 = vmul.f32 1.0, %v1407
    %1410 = vrot.lane.b32.xlu0 %v1401, 64
    %v1411 = vpop.permute.xlu0 %1410
    %v1413 = vmul.f32 %v1408, %v1411
    %1415 = vrot.lane.b32.xlu0 %v1413, 64
    %v1416 = vpop.permute.xlu0 %1415
    %v1418 = vadd.f32 %v172, %v1416
    %v1419 = vtanh.pop %v1418
    %v1420 = vsub.f32 1.0, %v1408
    %1422 = vrot.lane.b32.xlu0 %v1419, 96
    %v1423 = vpop.permute.xlu0 %1422
    %v1425 = vmul.f32 %v1420, %v1423
    %v1426 = vmul.f32 %v1408, %v1161
    %v1427 = vadd.f32 %v1425, %v1426
    %1429 = vrot.lane.b32.xlu0 %v1400, 64
    %v1430 = vpop.permute.xlu0 %1429
    %1433 = vrot.lane.b32.xlu0 %v1275, 96
    %v1434 = vpop.permute.xlu0 %1433
    %1437 = vrot.lane.b32.xlu0 %v1427, 32
    %v1438 = vpop.permute.xlu0 %1437
    %1441 = vrot.lane.b32.xlu0 %v1300, 64
    %v1442 = vpop.permute.xlu0 %1441
    %v1444 = vsel %vm334, %v1430, %v1434
    %v1445 = vsel %vm192, %v1444, %v1438
    %v1446 = vsel %vm337, %v1445, %v1442
    %1447 = vmatprep.subr.mxu0 %v340
    %1448 = vmatpush1.msra.mxu0 %v339
    %1449 = vmatprep.subr.mxu0 %v342
    %1450 = vmatpush1.msra.mxu0 %v341
    %1451 = vmatprep.subr.mxu0 %v344
    %1452 = vmatpush1.msra.mxu0 %v343
    %1453 = vmatprep.subr.mxu0 %v346
    %1454 = vmatpush1.msra.mxu0 %v345
    %1455 = vmatprep.subr.mxu0 %v348
    %1456 = vmatpush1.msra.mxu0 %v347
    %1457 = vmatprep.subr.mxu0 %v350
    %1458 = vmatpush1.msra.mxu0 %v349
    %1459 = vmatprep.subr.mxu0 %v352
    %1460 = vmatpush1.msra.mxu0 %v351
    %1461 = vmatprep.subr.mxu0 %v354
    %1462 = vmatpush1.msra.mxu0 %v353
    %1463 = vmatprep.subr.mxu0 %v356
    %1464 = vmatpush1.msra.mxu0 %v355
    %1465 = vmatprep.subr.mxu0 %v358
    %1466 = vmatpush1.msra.mxu0 %v357
    %1467 = vmatprep.subr.mxu0 %v360
    %1468 = vmatpush1.msra.mxu0 %v359
    %1469 = vmatprep.subr.mxu0 %v362
    %1470 = vmatpush1.msra.mxu0 %v361
    %1471 = vmatprep.subr.mxu0 %v364
    %1472 = vmatpush1.msra.mxu0 %v363
    %1473 = vmatprep.subr.mxu0 %v366
    %1474 = vmatpush1.msra.mxu0 %v365
    %1475 = vmatprep.subr.mxu0 %v368
    %1476 = vmatpush1.msra.mxu0 %v367
    %1477 = vmatprep.subr.mxu0 %v370
    %1478 = vmatpush1.msra.mxu0 %v369
    %1479 = vmatprep.subr.mxu0 0.0
    %1480 = vmatpush1.msra.mxu0 0.0
    %1481 = vmatprep.subr.mxu0 0.0
    %1482 = vmatpush1.msra.mxu0 0.0
    %1483 = vmatprep.subr.mxu0 0.0
    %1484 = vmatpush1.msra.mxu0 0.0
    %1485 = vmatprep.subr.mxu0 0.0
    %1486 = vmatpush1.msra.mxu0 0.0
    %1487 = vmatprep.subr.mxu0 0.0
    %1488 = vmatpush1.msra.mxu0 0.0
    %1489 = vmatprep.subr.mxu0 0.0
    %1490 = vmatpush1.msra.mxu0 0.0
    %1491 = vmatprep.subr.mxu0 0.0
    %1492 = vmatpush1.msra.mxu0 0.0
    %1493 = vmatprep.subr.mxu0 0.0
    %1494 = vmatpush1.msra.mxu0 0.0
    %1495 = vmatprep.subr.mxu0 0.0
    %1496 = vmatpush1.msra.mxu0 0.0
    %1497 = vmatprep.subr.mxu0 0.0
    %1498 = vmatpush1.msra.mxu0 0.0
    %1499 = vmatprep.subr.mxu0 0.0
    %1500 = vmatpush1.msra.mxu0 0.0
    %1501 = vmatprep.subr.mxu0 0.0
    %1502 = vmatpush1.msra.mxu0 0.0
    %1503 = vmatprep.subr.mxu0 0.0
    %1504 = vmatpush1.msra.mxu0 0.0
    %1505 = vmatprep.subr.mxu0 0.0
    %1506 = vmatpush1.msra.mxu0 0.0
    %1507 = vmatprep.subr.mxu0 0.0
    %1508 = vmatpush1.msra.mxu0 0.0
    %1509 = vmatprep.subr.mxu0 0.0
    %1510 = vmatpush1.msra.mxu0 0.0
    %1511 = vmatprep.mubr.f32.mxu0 0.0
    %1512 = vmatmul.mubr.f32.gmra.mrb[0].mxu0 %v1446
    %v1513 = vpop.f32.mrb[0].mxu0
    %v1514 = vadd.f32 %v376, %v1513
    %v1515 = vpop.f32.mrb[0].mxu0
    %v1516 = vadd.f32 %v380, %v1515
    %1517 = vdwg.mxu0
    %v1518 = vxor.u32 %v1514, 2147483648
    %v1519 = vmul.f32 %v1518, 1.442695
    %v1520 = vpow.pop %v1519
    %v1521 = vadd.f32 %v1520, 1.0
    %v1522 = vrcp.pop %v1521
    %v1523 = vmul.f32 1.0, %v1522
    %v1524 = vtanh.pop %v1514
    %v1525 = vmul.f32 %v1523, %v1269
    %1527 = vrot.lane.b32.xlu0 %v1524, 32
    %v1528 = vpop.permute.xlu0 %1527
    %v1530 = vmul.f32 %v1523, %v1528
    %1532 = vrot.lane.b32.xlu0 %v1530, 32
    %v1533 = vpop.permute.xlu0 %1532
    %v1535 = vadd.f32 %v1525, %v1533
    %v1536 = vtanh.pop %v1535
    %1538 = vrot.lane.b32.xlu0 %v1536, 32
    %v1539 = vpop.permute.xlu0 %1538
    %v1541 = vmul.f32 %v1523, %v1539
    %v1542 = vxor.u32 %v1516, 2147483648
    %v1543 = vmul.f32 %v1542, 1.442695
    %v1544 = vpow.pop %v1543
    %v1545 = vadd.f32 %v1544, 1.0
    %v1546 = vrcp.pop %v1545
    %v1547 = vmul.f32 1.0, %v1546
    %1549 = vrot.lane.b32.xlu0 %v1516, 32
    %v1550 = vpop.permute.xlu0 %1549
    %v1552 = vmul.f32 %v1547, %v1550
    %1554 = vrot.lane.b32.xlu0 %v1552, 64
    %v1555 = vpop.permute.xlu0 %1554
    %v1557 = vadd.f32 %v1516, %v1555
    %v1558 = vtanh.pop %v1557
    %v1559 = vsub.f32 1.0, %v1547
    %1561 = vrot.lane.b32.xlu0 %v1558, 96
    %v1562 = vpop.permute.xlu0 %1561
    %v1564 = vmul.f32 %v1559, %v1562
    %v1565 = vmul.f32 %v1547, %v1300
    %v1566 = vadd.f32 %v1564, %v1565
    %v1567 = vsel %vm334, %v1430, %v1427
    %v1569 = vsel %vm192, %v1567, 0
    %1571 = vmatprep.subr.mxu0 %v177
    %1572 = vmatpush1.msra.mxu0 %v176
    %1573 = vmatprep.subr.mxu0 %v179
    %1574 = vmatpush1.msra.mxu0 %v178
    %1575 = vmatprep.subr.mxu0 %v181
    %1576 = vmatpush1.msra.mxu0 %v180
    %1577 = vmatprep.subr.mxu0 %v183
    %1578 = vmatpush1.msra.mxu0 %v182
    %1579 = vmatprep.subr.mxu0 %v185
    %1580 = vmatpush1.msra.mxu0 %v184
    %1581 = vmatprep.subr.mxu0 %v187
    %1582 = vmatpush1.msra.mxu0 %v186
    %1583 = vmatprep.subr.mxu0 %v189
    %1584 = vmatpush1.msra.mxu0 %v188
    %1585 = vmatprep.subr.mxu0 %v191
    %1586 = vmatpush1.msra.mxu0 %v190
    %1587 = vmatprep.subr.mxu0 0.0
    %1588 = vmatpush1.msra.mxu0 0.0
    %1589 = vmatprep.subr.mxu0 0.0
    %1590 = vmatpush1.msra.mxu0 0.0
    %1591 = vmatprep.subr.mxu0 0.0
    %1592 = vmatpush1.msra.mxu0 0.0
    %1593 = vmatprep.subr.mxu0 0.0
    %1594 = vmatpush1.msra.mxu0 0.0
    %1595 = vmatprep.subr.mxu0 0.0
    %1596 = vmatpush1.msra.mxu0 0.0
    %1597 = vmatprep.subr.mxu0 0.0
    %1598 = vmatpush1.msra.mxu0 0.0
    %1599 = vmatprep.subr.mxu0 0.0
    %1600 = vmatpush1.msra.mxu0 0.0
    %1601 = vmatprep.subr.mxu0 0.0
    %1602 = vmatpush1.msra.mxu0 0.0
    %1603 = vmatprep.subr.mxu0 0.0
    %1604 = vmatpush1.msra.mxu0 0.0
    %1605 = vmatprep.subr.mxu0 0.0
    %1606 = vmatpush1.msra.mxu0 0.0
    %1607 = vmatprep.subr.mxu0 0.0
    %1608 = vmatpush1.msra.mxu0 0.0
    %1609 = vmatprep.subr.mxu0 0.0
    %1610 = vmatpush1.msra.mxu0 0.0
    %1611 = vmatprep.subr.mxu0 0.0
    %1612 = vmatpush1.msra.mxu0 0.0
    %1613 = vmatprep.subr.mxu0 0.0
    %1614 = vmatpush1.msra.mxu0 0.0
    %1615 = vmatprep.subr.mxu0 0.0
    %1616 = vmatpush1.msra.mxu0 0.0
    %1617 = vmatprep.subr.mxu0 0.0
    %1618 = vmatpush1.msra.mxu0 0.0
    %1619 = vmatprep.subr.mxu0 0.0
    %1620 = vmatpush1.msra.mxu0 0.0
    %1621 = vmatprep.subr.mxu0 0.0
    %1622 = vmatpush1.msra.mxu0 0.0
    %1623 = vmatprep.subr.mxu0 0.0
    %1624 = vmatpush1.msra.mxu0 0.0
    %1625 = vmatprep.subr.mxu0 0.0
    %1626 = vmatpush1.msra.mxu0 0.0
    %1627 = vmatprep.subr.mxu0 0.0
    %1628 = vmatpush1.msra.mxu0 0.0
    %1629 = vmatprep.subr.mxu0 0.0
    %1630 = vmatpush1.msra.mxu0 0.0
    %1631 = vmatprep.subr.mxu0 0.0
    %1632 = vmatpush1.msra.mxu0 0.0
    %1633 = vmatprep.subr.mxu0 0.0
    %1634 = vmatpush1.msra.mxu0 0.0
    %1635 = vmatprep.mubr.f32.mxu0 0.0
    %1636 = vmatmul.mubr.f32.gmra.mrb[0].mxu0 %v1569
    %v1637 = vpop.f32.mrb[0].mxu0
    %v1638 = vadd.f32 0.0, %v1637
    %v1639 = vpop.f32.mrb[0].mxu0
    %v1640 = vadd.f32 0.0, %v1639
    %1641 = vdwg.mxu0
    %v1642 = vadd.f32 %v143, %v1638
    %v1643 = vxor.u32 %v1642, 2147483648
    %v1644 = vmul.f32 %v1643, 1.442695
    %v1645 = vpow.pop %v1644
    %v1646 = vadd.f32 %v1645, 1.0
    %v1647 = vrcp.pop %v1646
    %v1648 = vmul.f32 1.0, %v1647
    %v1649 = vtanh.pop %v1642
    %v1650 = vmul.f32 %v1648, %v1394
    %1652 = vrot.lane.b32.xlu0 %v1649, 32
    %v1653 = vpop.permute.xlu0 %1652
    %v1655 = vmul.f32 %v1648, %v1653
    %1657 = vrot.lane.b32.xlu0 %v1655, 32
    %v1658 = vpop.permute.xlu0 %1657
    %v1660 = vadd.f32 %v1650, %v1658
    %v1661 = vtanh.pop %v1660
    %1663 = vrot.lane.b32.xlu0 %v1661, 32
    %v1664 = vpop.permute.xlu0 %1663
    %v1666 = vmul.f32 %v1648, %v1664
    %v1667 = vadd.f32 %v1640, %v297
    %v1668 = vadd.f32 %v173, %v1667
    %v1669 = vxor.u32 %v1668, 2147483648
    %v1670 = vmul.f32 %v1669, 1.442695
    %v1671 = vpow.pop %v1670
    %v1672 = vadd.f32 %v1671, 1.0
    %v1673 = vrcp.pop %v1672
    %v1674 = vmul.f32 1.0, %v1673
    %1676 = vrot.lane.b32.xlu0 %v1667, 64
    %v1677 = vpop.permute.xlu0 %1676
    %v1679 = vmul.f32 %v1674, %v1677
    %1681 = vrot.lane.b32.xlu0 %v1679, 64
    %v1682 = vpop.permute.xlu0 %1681
    %v1684 = vadd.f32 %v173, %v1682
    %v1685 = vtanh.pop %v1684
    %v1686 = vsub.f32 1.0, %v1674
    %1688 = vrot.lane.b32.xlu0 %v1685, 96
    %v1689 = vpop.permute.xlu0 %1688
    %v1691 = vmul.f32 %v1686, %v1689
    %v1692 = vmul.f32 %v1674, %v1427
    %v1693 = vadd.f32 %v1691, %v1692
    %1695 = vrot.lane.b32.xlu0 %v1666, 64
    %v1696 = vpop.permute.xlu0 %1695
    %1699 = vrot.lane.b32.xlu0 %v1541, 96
    %v1700 = vpop.permute.xlu0 %1699
    %1703 = vrot.lane.b32.xlu0 %v1693, 32
    %v1704 = vpop.permute.xlu0 %1703
    %1707 = vrot.lane.b32.xlu0 %v1566, 64
    %v1708 = vpop.permute.xlu0 %1707
    %v1710 = vsel %vm334, %v1696, %v1700
    %v1711 = vsel %vm192, %v1710, %v1704
    %v1712 = vsel %vm337, %v1711, %v1708
    %1713 = vmatprep.subr.mxu0 %v340
    %1714 = vmatpush1.msra.mxu0 %v339
    %1715 = vmatprep.subr.mxu0 %v342
    %1716 = vmatpush1.msra.mxu0 %v341
    %1717 = vmatprep.subr.mxu0 %v344
    %1718 = vmatpush1.msra.mxu0 %v343
    %1719 = vmatprep.subr.mxu0 %v346
    %1720 = vmatpush1.msra.mxu0 %v345
    %1721 = vmatprep.subr.mxu0 %v348
    %1722 = vmatpush1.msra.mxu0 %v347
    %1723 = vmatprep.subr.mxu0 %v350
    %1724 = vmatpush1.msra.mxu0 %v349
    %1725 = vmatprep.subr.mxu0 %v352
    %1726 = vmatpush1.msra.mxu0 %v351
    %1727 = vmatprep.subr.mxu0 %v354
    %1728 = vmatpush1.msra.mxu0 %v353
    %1729 = vmatprep.subr.mxu0 %v356
    %1730 = vmatpush1.msra.mxu0 %v355
    %1731 = vmatprep.subr.mxu0 %v358
    %1732 = vmatpush1.msra.mxu0 %v357
    %1733 = vmatprep.subr.mxu0 %v360
    %1734 = vmatpush1.msra.mxu0 %v359
    %1735 = vmatprep.subr.mxu0 %v362
    %1736 = vmatpush1.msra.mxu0 %v361
    %1737 = vmatprep.subr.mxu0 %v364
    %1738 = vmatpush1.msra.mxu0 %v363
    %1739 = vmatprep.subr.mxu0 %v366
    %1740 = vmatpush1.msra.mxu0 %v365
    %1741 = vmatprep.subr.mxu0 %v368
    %1742 = vmatpush1.msra.mxu0 %v367
    %1743 = vmatprep.subr.mxu0 %v370
    %1744 = vmatpush1.msra.mxu0 %v369
    %1745 = vmatprep.subr.mxu0 0.0
    %1746 = vmatpush1.msra.mxu0 0.0
    %1747 = vmatprep.subr.mxu0 0.0
    %1748 = vmatpush1.msra.mxu0 0.0
    %1749 = vmatprep.subr.mxu0 0.0
    %1750 = vmatpush1.msra.mxu0 0.0
    %1751 = vmatprep.subr.mxu0 0.0
    %1752 = vmatpush1.msra.mxu0 0.0
    %1753 = vmatprep.subr.mxu0 0.0
    %1754 = vmatpush1.msra.mxu0 0.0
    %1755 = vmatprep.subr.mxu0 0.0
    %1756 = vmatpush1.msra.mxu0 0.0
    %1757 = vmatprep.subr.mxu0 0.0
    %1758 = vmatpush1.msra.mxu0 0.0
    %1759 = vmatprep.subr.mxu0 0.0
    %1760 = vmatpush1.msra.mxu0 0.0
    %1761 = vmatprep.subr.mxu0 0.0
    %1762 = vmatpush1.msra.mxu0 0.0
    %1763 = vmatprep.subr.mxu0 0.0
    %1764 = vmatpush1.msra.mxu0 0.0
    %1765 = vmatprep.subr.mxu0 0.0
    %1766 = vmatpush1.msra.mxu0 0.0
    %1767 = vmatprep.subr.mxu0 0.0
    %1768 = vmatpush1.msra.mxu0 0.0
    %1769 = vmatprep.subr.mxu0 0.0
    %1770 = vmatpush1.msra.mxu0 0.0
    %1771 = vmatprep.subr.mxu0 0.0
    %1772 = vmatpush1.msra.mxu0 0.0
    %1773 = vmatprep.subr.mxu0 0.0
    %1774 = vmatpush1.msra.mxu0 0.0
    %1775 = vmatprep.subr.mxu0 0.0
    %1776 = vmatpush1.msra.mxu0 0.0
    %1777 = vmatprep.mubr.f32.mxu0 0.0
    %1778 = vmatmul.mubr.f32.gmra.mrb[0].mxu0 %v1712
    %v1779 = vpop.f32.mrb[0].mxu0
    %v1780 = vadd.f32 %v376, %v1779
    %v1781 = vpop.f32.mrb[0].mxu0
    %v1782 = vadd.f32 %v380, %v1781
    %1783 = vdwg.mxu0
    %v1784 = vxor.u32 %v1780, 2147483648
    %v1785 = vmul.f32 %v1784, 1.442695
    %v1786 = vpow.pop %v1785
    %v1787 = vadd.f32 %v1786, 1.0
    %v1788 = vrcp.pop %v1787
    %v1789 = vmul.f32 1.0, %v1788
    %v1790 = vtanh.pop %v1780
    %v1791 = vmul.f32 %v1789, %v1535
    %1793 = vrot.lane.b32.xlu0 %v1790, 32
    %v1794 = vpop.permute.xlu0 %1793
    %v1796 = vmul.f32 %v1789, %v1794
    %1798 = vrot.lane.b32.xlu0 %v1796, 32
    %v1799 = vpop.permute.xlu0 %1798
    %v1801 = vadd.f32 %v1791, %v1799
    %v1802 = vtanh.pop %v1801
    %1804 = vrot.lane.b32.xlu0 %v1802, 32
    %v1805 = vpop.permute.xlu0 %1804
    %v1807 = vmul.f32 %v1789, %v1805
    %v1808 = vxor.u32 %v1782, 2147483648
    %v1809 = vmul.f32 %v1808, 1.442695
    %v1810 = vpow.pop %v1809
    %v1811 = vadd.f32 %v1810, 1.0
    %v1812 = vrcp.pop %v1811
    %v1813 = vmul.f32 1.0, %v1812
    %1815 = vrot.lane.b32.xlu0 %v1782, 32
    %v1816 = vpop.permute.xlu0 %1815
    %v1818 = vmul.f32 %v1813, %v1816
    %1820 = vrot.lane.b32.xlu0 %v1818, 64
    %v1821 = vpop.permute.xlu0 %1820
    %v1823 = vadd.f32 %v1782, %v1821
    %v1824 = vtanh.pop %v1823
    %v1825 = vsub.f32 1.0, %v1813
    %1827 = vrot.lane.b32.xlu0 %v1824, 96
    %v1828 = vpop.permute.xlu0 %1827
    %v1830 = vmul.f32 %v1825, %v1828
    %v1831 = vmul.f32 %v1813, %v1566
    %v1832 = vadd.f32 %v1830, %v1831
    %v1833 = vsel %vm334, %v1696, %v1693
    %v1835 = vsel %vm192, %v1833, 0
    %1837 = vmatprep.subr.mxu0 %v177
    %1838 = vmatpush1.msra.mxu0 %v176
    %1839 = vmatprep.subr.mxu0 %v179
    %1840 = vmatpush1.msra.mxu0 %v178
    %1841 = vmatprep.subr.mxu0 %v181
    %1842 = vmatpush1.msra.mxu0 %v180
    %1843 = vmatprep.subr.mxu0 %v183
    %1844 = vmatpush1.msra.mxu0 %v182
    %1845 = vmatprep.subr.mxu0 %v185
    %1846 = vmatpush1.msra.mxu0 %v184
    %1847 = vmatprep.subr.mxu0 %v187
    %1848 = vmatpush1.msra.mxu0 %v186
    %1849 = vmatprep.subr.mxu0 %v189
    %1850 = vmatpush1.msra.mxu0 %v188
    %1851 = vmatprep.subr.mxu0 %v191
    %1852 = vmatpush1.msra.mxu0 %v190
    %1853 = vmatprep.subr.mxu0 0.0
    %1854 = vmatpush1.msra.mxu0 0.0
    %1855 = vmatprep.subr.mxu0 0.0
    %1856 = vmatpush1.msra.mxu0 0.0
    %1857 = vmatprep.subr.mxu0 0.0
    %1858 = vmatpush1.msra.mxu0 0.0
    %1859 = vmatprep.subr.mxu0 0.0
    %1860 = vmatpush1.msra.mxu0 0.0
    %1861 = vmatprep.subr.mxu0 0.0
    %1862 = vmatpush1.msra.mxu0 0.0
    %1863 = vmatprep.subr.mxu0 0.0
    %1864 = vmatpush1.msra.mxu0 0.0
    %1865 = vmatprep.subr.mxu0 0.0
    %1866 = vmatpush1.msra.mxu0 0.0
    %1867 = vmatprep.subr.mxu0 0.0
    %1868 = vmatpush1.msra.mxu0 0.0
    %1869 = vmatprep.subr.mxu0 0.0
    %1870 = vmatpush1.msra.mxu0 0.0
    %1871 = vmatprep.subr.mxu0 0.0
    %1872 = vmatpush1.msra.mxu0 0.0
    %1873 = vmatprep.subr.mxu0 0.0
    %1874 = vmatpush1.msra.mxu0 0.0
    %1875 = vmatprep.subr.mxu0 0.0
    %1876 = vmatpush1.msra.mxu0 0.0
    %1877 = vmatprep.subr.mxu0 0.0
    %1878 = vmatpush1.msra.mxu0 0.0
    %1879 = vmatprep.subr.mxu0 0.0
    %1880 = vmatpush1.msra.mxu0 0.0
    %1881 = vmatprep.subr.mxu0 0.0
    %1882 = vmatpush1.msra.mxu0 0.0
    %1883 = vmatprep.subr.mxu0 0.0
    %1884 = vmatpush1.msra.mxu0 0.0
    %1885 = vmatprep.subr.mxu0 0.0
    %1886 = vmatpush1.msra.mxu0 0.0
    %1887 = vmatprep.subr.mxu0 0.0
    %1888 = vmatpush1.msra.mxu0 0.0
    %1889 = vmatprep.subr.mxu0 0.0
    %1890 = vmatpush1.msra.mxu0 0.0
    %1891 = vmatprep.subr.mxu0 0.0
    %1892 = vmatpush1.msra.mxu0 0.0
    %1893 = vmatprep.subr.mxu0 0.0
    %1894 = vmatpush1.msra.mxu0 0.0
    %1895 = vmatprep.subr.mxu0 0.0
    %1896 = vmatpush1.msra.mxu0 0.0
    %1897 = vmatprep.subr.mxu0 0.0
    %1898 = vmatpush1.msra.mxu0 0.0
    %1899 = vmatprep.subr.mxu0 0.0
    %1900 = vmatpush1.msra.mxu0 0.0
    %1901 = vmatprep.mubr.f32.mxu0 0.0
    %1902 = vmatmul.mubr.f32.gmra.mrb[0].mxu0 %v1835
    %v1903 = vpop.f32.mrb[0].mxu0
    %v1904 = vadd.f32 0.0, %v1903
    %v1905 = vpop.f32.mrb[0].mxu0
    %v1906 = vadd.f32 0.0, %v1905
    %1907 = vdwg.mxu0
    %v1908 = vadd.f32 %v144, %v1904
    %v1909 = vxor.u32 %v1908, 2147483648
    %v1910 = vmul.f32 %v1909, 1.442695
    %v1911 = vpow.pop %v1910
    %v1912 = vadd.f32 %v1911, 1.0
    %v1913 = vrcp.pop %v1912
    %v1914 = vmul.f32 1.0, %v1913
    %v1915 = vtanh.pop %v1908
    %v1916 = vmul.f32 %v1914, %v1660
    %1918 = vrot.lane.b32.xlu0 %v1915, 32
    %v1919 = vpop.permute.xlu0 %1918
    %v1921 = vmul.f32 %v1914, %v1919
    %1923 = vrot.lane.b32.xlu0 %v1921, 32
    %v1924 = vpop.permute.xlu0 %1923
    %v1926 = vadd.f32 %v1916, %v1924
    %v1927 = vtanh.pop %v1926
    %1929 = vrot.lane.b32.xlu0 %v1927, 32
    %v1930 = vpop.permute.xlu0 %1929
    %v1932 = vmul.f32 %v1914, %v1930
    %v1933 = vadd.f32 %v1906, %v297
    %v1934 = vadd.f32 %v174, %v1933
    %v1935 = vxor.u32 %v1934, 2147483648
    %v1936 = vmul.f32 %v1935, 1.442695
    %v1937 = vpow.pop %v1936
    %v1938 = vadd.f32 %v1937, 1.0
    %v1939 = vrcp.pop %v1938
    %v1940 = vmul.f32 1.0, %v1939
    %1942 = vrot.lane.b32.xlu0 %v1933, 64
    %v1943 = vpop.permute.xlu0 %1942
    %v1945 = vmul.f32 %v1940, %v1943
    %1947 = vrot.lane.b32.xlu0 %v1945, 64
    %v1948 = vpop.permute.xlu0 %1947
    %v1950 = vadd.f32 %v174, %v1948
    %v1951 = vtanh.pop %v1950
    %v1952 = vsub.f32 1.0, %v1940
    %1954 = vrot.lane.b32.xlu0 %v1951, 96
    %v1955 = vpop.permute.xlu0 %1954
    %v1957 = vmul.f32 %v1952, %v1955
    %v1958 = vmul.f32 %v1940, %v1693
    %v1959 = vadd.f32 %v1957, %v1958
    %1961 = vrot.lane.b32.xlu0 %v1932, 64
    %v1962 = vpop.permute.xlu0 %1961
    %1965 = vrot.lane.b32.xlu0 %v1807, 96
    %v1966 = vpop.permute.xlu0 %1965
    %1969 = vrot.lane.b32.xlu0 %v1959, 32
    %v1970 = vpop.permute.xlu0 %1969
    %1973 = vrot.lane.b32.xlu0 %v1832, 64
    %v1974 = vpop.permute.xlu0 %1973
    %v1976 = vsel %vm334, %v1962, %v1966
    %v1977 = vsel %vm192, %v1976, %v1970
    %v1978 = vsel %vm337, %v1977, %v1974
    %1979 = vmatprep.subr.mxu0 %v340
    %1980 = vmatpush1.msra.mxu0 %v339
    %1981 = vmatprep.subr.mxu0 %v342
    %1982 = vmatpush1.msra.mxu0 %v341
    %1983 = vmatprep.subr.mxu0 %v344
    %1984 = vmatpush1.msra.mxu0 %v343
    %1985 = vmatprep.subr.mxu0 %v346
    %1986 = vmatpush1.msra.mxu0 %v345
    %1987 = vmatprep.subr.mxu0 %v348
    %1988 = vmatpush1.msra.mxu0 %v347
    %1989 = vmatprep.subr.mxu0 %v350
    %1990 = vmatpush1.msra.mxu0 %v349
    %1991 = vmatprep.subr.mxu0 %v352
    %1992 = vmatpush1.msra.mxu0 %v351
    %1993 = vmatprep.subr.mxu0 %v354
    %1994 = vmatpush1.msra.mxu0 %v353
    %1995 = vmatprep.subr.mxu0 %v356
    %1996 = vmatpush1.msra.mxu0 %v355
    %1997 = vmatprep.subr.mxu0 %v358
    %1998 = vmatpush1.msra.mxu0 %v357
    %1999 = vmatprep.subr.mxu0 %v360
    %2000 = vmatpush1.msra.mxu0 %v359
    %2001 = vmatprep.subr.mxu0 %v362
    %2002 = vmatpush1.msra.mxu0 %v361
    %2003 = vmatprep.subr.mxu0 %v364
    %2004 = vmatpush1.msra.mxu0 %v363
    %2005 = vmatprep.subr.mxu0 %v366
    %2006 = vmatpush1.msra.mxu0 %v365
    %2007 = vmatprep.subr.mxu0 %v368
    %2008 = vmatpush1.msra.mxu0 %v367
    %2009 = vmatprep.subr.mxu0 %v370
    %2010 = vmatpush1.msra.mxu0 %v369
    %2011 = vmatprep.subr.mxu0 0.0
    %2012 = vmatpush1.msra.mxu0 0.0
    %2013 = vmatprep.subr.mxu0 0.0
    %2014 = vmatpush1.msra.mxu0 0.0
    %2015 = vmatprep.subr.mxu0 0.0
    %2016 = vmatpush1.msra.mxu0 0.0
    %2017 = vmatprep.subr.mxu0 0.0
    %2018 = vmatpush1.msra.mxu0 0.0
    %2019 = vmatprep.subr.mxu0 0.0
    %2020 = vmatpush1.msra.mxu0 0.0
    %2021 = vmatprep.subr.mxu0 0.0
    %2022 = vmatpush1.msra.mxu0 0.0
    %2023 = vmatprep.subr.mxu0 0.0
    %2024 = vmatpush1.msra.mxu0 0.0
    %2025 = vmatprep.subr.mxu0 0.0
    %2026 = vmatpush1.msra.mxu0 0.0
    %2027 = vmatprep.subr.mxu0 0.0
    %2028 = vmatpush1.msra.mxu0 0.0
    %2029 = vmatprep.subr.mxu0 0.0
    %2030 = vmatpush1.msra.mxu0 0.0
    %2031 = vmatprep.subr.mxu0 0.0
    %2032 = vmatpush1.msra.mxu0 0.0
    %2033 = vmatprep.subr.mxu0 0.0
    %2034 = vmatpush1.msra.mxu0 0.0
    %2035 = vmatprep.subr.mxu0 0.0
    %2036 = vmatpush1.msra.mxu0 0.0
    %2037 = vmatprep.subr.mxu0 0.0
    %2038 = vmatpush1.msra.mxu0 0.0
    %2039 = vmatprep.subr.mxu0 0.0
    %2040 = vmatpush1.msra.mxu0 0.0
    %2041 = vmatprep.subr.mxu0 0.0
    %2042 = vmatpush1.msra.mxu0 0.0
    %2043 = vmatprep.mubr.f32.mxu0 0.0
    %2044 = vmatmul.mubr.f32.gmra.mrb[0].mxu0 %v1978
    %v2045 = vpop.f32.mrb[0].mxu0
    %v2046 = vadd.f32 %v376, %v2045
    %v2047 = vpop.f32.mrb[0].mxu0
    %v2048 = vadd.f32 %v380, %v2047
    %2049 = vdwg.mxu0
    %v2050 = vxor.u32 %v2046, 2147483648
    %v2051 = vmul.f32 %v2050, 1.442695
    %v2052 = vpow.pop %v2051
    %v2053 = vadd.f32 %v2052, 1.0
    %v2054 = vrcp.pop %v2053
    %v2055 = vmul.f32 1.0, %v2054
    %v2056 = vtanh.pop %v2046
    %v2057 = vmul.f32 %v2055, %v1801
    %2059 = vrot.lane.b32.xlu0 %v2056, 32
    %v2060 = vpop.permute.xlu0 %2059
    %v2062 = vmul.f32 %v2055, %v2060
    %2064 = vrot.lane.b32.xlu0 %v2062, 32
    %v2065 = vpop.permute.xlu0 %2064
    %v2067 = vadd.f32 %v2057, %v2065
    %v2068 = vtanh.pop %v2067
    %2070 = vrot.lane.b32.xlu0 %v2068, 32
    %v2071 = vpop.permute.xlu0 %2070
    %v2073 = vmul.f32 %v2055, %v2071
    %v2074 = vxor.u32 %v2048, 2147483648
    %v2075 = vmul.f32 %v2074, 1.442695
    %v2076 = vpow.pop %v2075
    %v2077 = vadd.f32 %v2076, 1.0
    %v2078 = vrcp.pop %v2077
    %v2079 = vmul.f32 1.0, %v2078
    %2081 = vrot.lane.b32.xlu0 %v2048, 32
    %v2082 = vpop.permute.xlu0 %2081
    %v2084 = vmul.f32 %v2079, %v2082
    %2086 = vrot.lane.b32.xlu0 %v2084, 64
    %v2087 = vpop.permute.xlu0 %2086
    %v2089 = vadd.f32 %v2048, %v2087
    %v2090 = vtanh.pop %v2089
    %v2091 = vsub.f32 1.0, %v2079
    %2093 = vrot.lane.b32.xlu0 %v2090, 96
    %v2094 = vpop.permute.xlu0 %2093
    %v2096 = vmul.f32 %v2091, %v2094
    %v2097 = vmul.f32 %v2079, %v1832
    %v2098 = vadd.f32 %v2096, %v2097
    %v2099 = vsel %vm334, %v1962, %v1959
    %v2101 = vsel %vm192, %v2099, 0
    %2103 = vmatprep.subr.mxu0 %v177
    %2104 = vmatpush1.msra.mxu0 %v176
    %2105 = vmatprep.subr.mxu0 %v179
    %2106 = vmatpush1.msra.mxu0 %v178
    %2107 = vmatprep.subr.mxu0 %v181
    %2108 = vmatpush1.msra.mxu0 %v180
    %2109 = vmatprep.subr.mxu0 %v183
    %2110 = vmatpush1.msra.mxu0 %v182
    %2111 = vmatprep.subr.mxu0 %v185
    %2112 = vmatpush1.msra.mxu0 %v184
    %2113 = vmatprep.subr.mxu0 %v187
    %2114 = vmatpush1.msra.mxu0 %v186
    %2115 = vmatprep.subr.mxu0 %v189
    %2116 = vmatpush1.msra.mxu0 %v188
    %2117 = vmatprep.subr.mxu0 %v191
    %2118 = vmatpush1.msra.mxu0 %v190
    %2119 = vmatprep.subr.mxu0 0.0
    %2120 = vmatpush1.msra.mxu0 0.0
    %2121 = vmatprep.subr.mxu0 0.0
    %2122 = vmatpush1.msra.mxu0 0.0
    %2123 = vmatprep.subr.mxu0 0.0
    %2124 = vmatpush1.msra.mxu0 0.0
    %2125 = vmatprep.subr.mxu0 0.0
    %2126 = vmatpush1.msra.mxu0 0.0
    %2127 = vmatprep.subr.mxu0 0.0
    %2128 = vmatpush1.msra.mxu0 0.0
    %2129 = vmatprep.subr.mxu0 0.0
    %2130 = vmatpush1.msra.mxu0 0.0
    %2131 = vmatprep.subr.mxu0 0.0
    %2132 = vmatpush1.msra.mxu0 0.0
    %2133 = vmatprep.subr.mxu0 0.0
    %2134 = vmatpush1.msra.mxu0 0.0
    %2135 = vmatprep.subr.mxu0 0.0
    %2136 = vmatpush1.msra.mxu0 0.0
    %2137 = vmatprep.subr.mxu0 0.0
    %2138 = vmatpush1.msra.mxu0 0.0
    %2139 = vmatprep.subr.mxu0 0.0
    %2140 = vmatpush1.msra.mxu0 0.0
    %2141 = vmatprep.subr.mxu0 0.0
    %2142 = vmatpush1.msra.mxu0 0.0
    %2143 = vmatprep.subr.mxu0 0.0
    %2144 = vmatpush1.msra.mxu0 0.0
    %2145 = vmatprep.subr.mxu0 0.0
    %2146 = vmatpush1.msra.mxu0 0.0
    %2147 = vmatprep.subr.mxu0 0.0
    %2148 = vmatpush1.msra.mxu0 0.0
    %2149 = vmatprep.subr.mxu0 0.0
    %2150 = vmatpush1.msra.mxu0 0.0
    %2151 = vmatprep.subr.mxu0 0.0
    %2152 = vmatpush1.msra.mxu0 0.0
    %2153 = vmatprep.subr.mxu0 0.0
    %2154 = vmatpush1.msra.mxu0 0.0
    %2155 = vmatprep.subr.mxu0 0.0
    %2156 = vmatpush1.msra.mxu0 0.0
    %2157 = vmatprep.subr.mxu0 0.0
    %2158 = vmatpush1.msra.mxu0 0.0
    %2159 = vmatprep.subr.mxu0 0.0
    %2160 = vmatpush1.msra.mxu0 0.0
    %2161 = vmatprep.subr.mxu0 0.0
    %2162 = vmatpush1.msra.mxu0 0.0
    %2163 = vmatprep.subr.mxu0 0.0
    %2164 = vmatpush1.msra.mxu0 0.0
    %2165 = vmatprep.subr.mxu0 0.0
    %2166 = vmatpush1.msra.mxu0 0.0
    %2167 = vmatprep.mubr.f32.mxu0 0.0
    %2168 = vmatmul.mubr.f32.gmra.mrb[0].mxu0 %v2101
    %v2169 = vpop.f32.mrb[0].mxu0
    %v2170 = vadd.f32 0.0, %v2169
    %v2171 = vpop.f32.mrb[0].mxu0
    %v2172 = vadd.f32 0.0, %v2171
    %2173 = vdwg.mxu0
    %v2174 = vadd.f32 %v145, %v2170
    %v2175 = vxor.u32 %v2174, 2147483648
    %v2176 = vmul.f32 %v2175, 1.442695
    %v2177 = vpow.pop %v2176
    %v2178 = vadd.f32 %v2177, 1.0
    %v2179 = vrcp.pop %v2178
    %v2180 = vmul.f32 1.0, %v2179
    %v2181 = vtanh.pop %v2174
    %v2182 = vmul.f32 %v2180, %v1926
    %2184 = vrot.lane.b32.xlu0 %v2181, 32
    %v2185 = vpop.permute.xlu0 %2184
    %v2187 = vmul.f32 %v2180, %v2185
    %2189 = vrot.lane.b32.xlu0 %v2187, 32
    %v2190 = vpop.permute.xlu0 %2189
    %v2192 = vadd.f32 %v2182, %v2190
    %v2193 = vtanh.pop %v2192
    %2195 = vrot.lane.b32.xlu0 %v2193, 32
    %v2196 = vpop.permute.xlu0 %2195
    %v2198 = vmul.f32 %v2180, %v2196
    %v2199 = vadd.f32 %v2172, %v297
    %v2200 = vadd.f32 %v175, %v2199
    %v2201 = vxor.u32 %v2200, 2147483648
    %v2202 = vmul.f32 %v2201, 1.442695
    %v2203 = vpow.pop %v2202
    %v2204 = vadd.f32 %v2203, 1.0
    %v2205 = vrcp.pop %v2204
    %v2206 = vmul.f32 1.0, %v2205
    %2208 = vrot.lane.b32.xlu0 %v2199, 64
    %v2209 = vpop.permute.xlu0 %2208
    %v2211 = vmul.f32 %v2206, %v2209
    %2213 = vrot.lane.b32.xlu0 %v2211, 64
    %v2214 = vpop.permute.xlu0 %2213
    %v2216 = vadd.f32 %v175, %v2214
    %v2217 = vtanh.pop %v2216
    %v2218 = vsub.f32 1.0, %v2206
    %2220 = vrot.lane.b32.xlu0 %v2217, 96
    %v2221 = vpop.permute.xlu0 %2220
    %v2223 = vmul.f32 %v2218, %v2221
    %v2224 = vmul.f32 %v2206, %v1959
    %v2225 = vadd.f32 %v2223, %v2224
    %2227 = vrot.lane.b32.xlu0 %v2198, 64
    %v2228 = vpop.permute.xlu0 %2227
    %2231 = vrot.lane.b32.xlu0 %v2073, 96
    %v2232 = vpop.permute.xlu0 %2231
    %2235 = vrot.lane.b32.xlu0 %v2225, 32
    %v2236 = vpop.permute.xlu0 %2235
    %2239 = vrot.lane.b32.xlu0 %v2098, 64
    %v2240 = vpop.permute.xlu0 %2239
    %v2242 = vsel %vm334, %v2228, %v2232
    %v2243 = vsel %vm192, %v2242, %v2236
    %v2244 = vsel %vm337, %v2243, %v2240
    %2245 = vmatprep.subr.mxu0 %v340
    %2246 = vmatpush1.msra.mxu0 %v339
    %2247 = vmatprep.subr.mxu0 %v342
    %2248 = vmatpush1.msra.mxu0 %v341
    %2249 = vmatprep.subr.mxu0 %v344
    %2250 = vmatpush1.msra.mxu0 %v343
    %2251 = vmatprep.subr.mxu0 %v346
    %2252 = vmatpush1.msra.mxu0 %v345
    %2253 = vmatprep.subr.mxu0 %v348
    %2254 = vmatpush1.msra.mxu0 %v347
    %2255 = vmatprep.subr.mxu0 %v350
    %2256 = vmatpush1.msra.mxu0 %v349
    %2257 = vmatprep.subr.mxu0 %v352
    %2258 = vmatpush1.msra.mxu0 %v351
    %2259 = vmatprep.subr.mxu0 %v354
    %2260 = vmatpush1.msra.mxu0 %v353
    %2261 = vmatprep.subr.mxu0 %v356
    %2262 = vmatpush1.msra.mxu0 %v355
    %2263 = vmatprep.subr.mxu0 %v358
    %2264 = vmatpush1.msra.mxu0 %v357
    %2265 = vmatprep.subr.mxu0 %v360
    %2266 = vmatpush1.msra.mxu0 %v359
    %2267 = vmatprep.subr.mxu0 %v362
    %2268 = vmatpush1.msra.mxu0 %v361
    %2269 = vmatprep.subr.mxu0 %v364
    %2270 = vmatpush1.msra.mxu0 %v363
    %2271 = vmatprep.subr.mxu0 %v366
    %2272 = vmatpush1.msra.mxu0 %v365
    %2273 = vmatprep.subr.mxu0 %v368
    %2274 = vmatpush1.msra.mxu0 %v367
    %2275 = vmatprep.subr.mxu0 %v370
    %2276 = vmatpush1.msra.mxu0 %v369
    %2277 = vmatprep.subr.mxu0 0.0
    %2278 = vmatpush1.msra.mxu0 0.0
    %2279 = vmatprep.subr.mxu0 0.0
    %2280 = vmatpush1.msra.mxu0 0.0
    %2281 = vmatprep.subr.mxu0 0.0
    %2282 = vmatpush1.msra.mxu0 0.0
    %2283 = vmatprep.subr.mxu0 0.0
    %2284 = vmatpush1.msra.mxu0 0.0
    %2285 = vmatprep.subr.mxu0 0.0
    %2286 = vmatpush1.msra.mxu0 0.0
    %2287 = vmatprep.subr.mxu0 0.0
    %2288 = vmatpush1.msra.mxu0 0.0
    %2289 = vmatprep.subr.mxu0 0.0
    %2290 = vmatpush1.msra.mxu0 0.0
    %2291 = vmatprep.subr.mxu0 0.0
    %2292 = vmatpush1.msra.mxu0 0.0
    %2293 = vmatprep.subr.mxu0 0.0
    %2294 = vmatpush1.msra.mxu0 0.0
    %2295 = vmatprep.subr.mxu0 0.0
    %2296 = vmatpush1.msra.mxu0 0.0
    %2297 = vmatprep.subr.mxu0 0.0
    %2298 = vmatpush1.msra.mxu0 0.0
    %2299 = vmatprep.subr.mxu0 0.0
    %2300 = vmatpush1.msra.mxu0 0.0
    %2301 = vmatprep.subr.mxu0 0.0
    %2302 = vmatpush1.msra.mxu0 0.0
    %2303 = vmatprep.subr.mxu0 0.0
    %2304 = vmatpush1.msra.mxu0 0.0
    %2305 = vmatprep.subr.mxu0 0.0
    %2306 = vmatpush1.msra.mxu0 0.0
    %2307 = vmatprep.subr.mxu0 0.0
    %2308 = vmatpush1.msra.mxu0 0.0
    %2309 = vmatprep.mubr.f32.mxu0 0.0
    %2310 = vmatmul.mubr.f32.gmra.mrb[0].mxu0 %v2244
    %v2311 = vpop.f32.mrb[0].mxu0
    %v2312 = vadd.f32 %v376, %v2311
    %v2313 = vpop.f32.mrb[0].mxu0
    %v2314 = vadd.f32 %v380, %v2313
    %2315 = vdwg.mxu0
    %v2316 = vxor.u32 %v2312, 2147483648
    %v2317 = vmul.f32 %v2316, 1.442695
    %v2318 = vpow.pop %v2317
    %v2319 = vadd.f32 %v2318, 1.0
    %v2320 = vrcp.pop %v2319
    %v2321 = vmul.f32 1.0, %v2320
    %v2322 = vtanh.pop %v2312
    %v2323 = vmul.f32 %v2321, %v2067
    %2325 = vrot.lane.b32.xlu0 %v2322, 32
    %v2326 = vpop.permute.xlu0 %2325
    %v2328 = vmul.f32 %v2321, %v2326
    %2330 = vrot.lane.b32.xlu0 %v2328, 32
    %v2331 = vpop.permute.xlu0 %2330
    %v2333 = vadd.f32 %v2323, %v2331
    %v2334 = vtanh.pop %v2333
    %2336 = vrot.lane.b32.xlu0 %v2334, 32
    %v2337 = vpop.permute.xlu0 %2336
    %v2339 = vmul.f32 %v2321, %v2337
    %v2340 = vxor.u32 %v2314, 2147483648
    %v2341 = vmul.f32 %v2340, 1.442695
    %v2342 = vpow.pop %v2341
    %v2343 = vadd.f32 %v2342, 1.0
    %v2344 = vrcp.pop %v2343
    %v2345 = vmul.f32 1.0, %v2344
    %2347 = vrot.lane.b32.xlu0 %v2314, 32
    %v2348 = vpop.permute.xlu0 %2347
    %v2350 = vmul.f32 %v2345, %v2348
    %2352 = vrot.lane.b32.xlu0 %v2350, 64
    %v2353 = vpop.permute.xlu0 %2352
    %v2355 = vadd.f32 %v2314, %v2353
    %v2356 = vtanh.pop %v2355
    %v2357 = vsub.f32 1.0, %v2345
    %2359 = vrot.lane.b32.xlu0 %v2356, 96
    %v2360 = vpop.permute.xlu0 %2359
    %v2362 = vmul.f32 %v2357, %v2360
    %v2363 = vmul.f32 %v2345, %v2098
    %v2364 = vadd.f32 %v2362, %v2363
    %2366 = vrot.lane.b32.xlu0 %v2339, 64
    %v2367 = vpop.permute.xlu0 %2366
    %v2369 = vsel %vm334, %v2367, %v2364
    %v2370 = vld [vmem:[%s9] sm:$0xff]
    %v2371 = vld [vmem:[%s9 + $0x8] sm:$0xff]
    %v2372 = vld [vmem:[%s9 + $0x10] sm:$0xff]
    %v2373 = vld [vmem:[%s9 + $0x18] sm:$0xff]
    %v2374 = vld [vmem:[%s9 + $0x20] sm:$0xff]
    %v2375 = vld [vmem:[%s9 + $0x28] sm:$0xff]
    %v2376 = vld [vmem:[%s9 + $0x30] sm:$0xff]
    %v2377 = vld [vmem:[%s9 + $0x38] sm:$0xff]
    %v2378 = vld [vmem:[#allocation2] sm:$0x1]
    %v2380 = vlaneseq
    %v2381 = vshrl.u32 %v2380, 7
    %v2382 = vsub.s32 0, %v2381
    %v2383 = vrot.slane %v2378, %v2382
    %v2386 = vsel %vm192, %v2369, 0
    %2388 = vmatprep.subr.mxu0 0.0
    %2389 = vmatpush1.msra.mxu0 %v2370
    %2390 = vmatprep.subr.mxu0 0.0
    %2391 = vmatpush1.msra.mxu0 %v2371
    %2392 = vmatprep.subr.mxu0 0.0
    %2393 = vmatpush1.msra.mxu0 %v2372
    %2394 = vmatprep.subr.mxu0 0.0
    %2395 = vmatpush1.msra.mxu0 %v2373
    %2396 = vmatprep.subr.mxu0 0.0
    %2397 = vmatpush1.msra.mxu0 %v2374
    %2398 = vmatprep.subr.mxu0 0.0
    %2399 = vmatpush1.msra.mxu0 %v2375
    %2400 = vmatprep.subr.mxu0 0.0
    %2401 = vmatpush1.msra.mxu0 %v2376
    %2402 = vmatprep.subr.mxu0 0.0
    %2403 = vmatpush1.msra.mxu0 %v2377
    %2404 = vmatprep.subr.mxu0 0.0
    %2405 = vmatpush1.msra.mxu0 0.0
    %2406 = vmatprep.subr.mxu0 0.0
    %2407 = vmatpush1.msra.mxu0 0.0
    %2408 = vmatprep.subr.mxu0 0.0
    %2409 = vmatpush1.msra.mxu0 0.0
    %2410 = vmatprep.subr.mxu0 0.0
    %2411 = vmatpush1.msra.mxu0 0.0
    %2412 = vmatprep.subr.mxu0 0.0
    %2413 = vmatpush1.msra.mxu0 0.0
    %2414 = vmatprep.subr.mxu0 0.0
    %2415 = vmatpush1.msra.mxu0 0.0
    %2416 = vmatprep.subr.mxu0 0.0
    %2417 = vmatpush1.msra.mxu0 0.0
    %2418 = vmatprep.subr.mxu0 0.0
    %2419 = vmatpush1.msra.mxu0 0.0
    %2420 = vmatprep.subr.mxu0 0.0
    %2421 = vmatpush1.msra.mxu0 0.0
    %2422 = vmatprep.subr.mxu0 0.0
    %2423 = vmatpush1.msra.mxu0 0.0
    %2424 = vmatprep.subr.mxu0 0.0
    %2425 = vmatpush1.msra.mxu0 0.0
    %2426 = vmatprep.subr.mxu0 0.0
    %2427 = vmatpush1.msra.mxu0 0.0
    %2428 = vmatprep.subr.mxu0 0.0
    %2429 = vmatpush1.msra.mxu0 0.0
    %2430 = vmatprep.subr.mxu0 0.0
    %2431 = vmatpush1.msra.mxu0 0.0
    %2432 = vmatprep.subr.mxu0 0.0
    %2433 = vmatpush1.msra.mxu0 0.0
    %2434 = vmatprep.subr.mxu0 0.0
    %2435 = vmatpush1.msra.mxu0 0.0
    %2436 = vmatprep.subr.mxu0 0.0
    %2437 = vmatpush1.msra.mxu0 0.0
    %2438 = vmatprep.subr.mxu0 0.0
    %2439 = vmatpush1.msra.mxu0 0.0
    %2440 = vmatprep.subr.mxu0 0.0
    %2441 = vmatpush1.msra.mxu0 0.0
    %2442 = vmatprep.subr.mxu0 0.0
    %2443 = vmatpush1.msra.mxu0 0.0
    %2444 = vmatprep.subr.mxu0 0.0
    %2445 = vmatpush1.msra.mxu0 0.0
    %2446 = vmatprep.subr.mxu0 0.0
    %2447 = vmatpush1.msra.mxu0 0.0
    %2448 = vmatprep.subr.mxu0 0.0
    %2449 = vmatpush1.msra.mxu0 0.0
    %2450 = vmatprep.subr.mxu0 0.0
    %2451 = vmatpush1.msra.mxu0 0.0
    %2452 = vmatprep.mubr.f32.mxu0 0.0
    %2453 = vmatmul.mubr.f32.gmra.mrb[0].mxu0 %v2386
    %v2454 = vpop.f32.mrb[0].mxu0
    %v2455 = vadd.f32 %v2383, %v2454
    %v2456 = vpop.f32.mrb[0].mxu0
    %2457 = vdwg.mxu0
    %vm2458 = vcmask 1024
    %2459 = vst.msk [vmem:[%s11] sm:$0x3] %vm2458, %v2455
    // Predicated region
    $region54: #{tpu_custom_call.1} parent=1 // pred_check
      _
    $region55: #{tpu_custom_call.1} parent=1 // pred_check_branch
      %2461 = sbr.rel (0) target = $region57
    $region56: #{tpu_custom_call.1} parent=1 // pred_region
      _
    $region57: #{tpu_custom_call.1} parent=1 // pred_fallthru
      _
    // Predicated region
    $region58: #{tpu_custom_call.1} parent=1 // pred_check
      _
    $region59: #{tpu_custom_call.1} parent=1 // pred_check_branch
      %2463 = sbr.rel (0) target = $region61
    $region60: #{tpu_custom_call.1} parent=1 // pred_region
      _
    $region61: #{tpu_custom_call.1} parent=1 // pred_fallthru
      _
    %2464 = vsyncpa [#allocation4], 1
    %2465 = vsyncpa [#allocation6], 1

</llo_original>
